<compile_context>
chip_gen: v7x
topology: tpu7x:2x2x1
jax: 0.10.0
libtpu: 0.0.40
codegen_flags: <defaults>
</compile_context>

<pallas_src>
import functools
import math

import jax
import jax.numpy as jnp
from jax import lax
from jax.experimental import pallas as pl
from jax.experimental.pallas import tpu as pltpu


# ----------------------------- in-kernel helpers -----------------------------

def _layer_norm(x, gamma, beta, eps=1e-5):
    # x: (T, D) f32 ; gamma/beta: (1, D) f32
    mu = jnp.mean(x, axis=-1, keepdims=True)
    var = jnp.mean((x - mu) ** 2, axis=-1, keepdims=True)
    return (x - mu) * lax.rsqrt(var + eps) * gamma + beta


def _softmax_lastdim(x):
    # internal-only softmax (attention probabilities): approx reciprocal on EUP
    m = jnp.max(x, axis=-1, keepdims=True)
    e = jnp.exp(x - m)
    return e * pl.reciprocal(jnp.sum(e, axis=-1, keepdims=True), approx=True)


def _const_spec(shape):
    nd = len(shape)
    return pl.BlockSpec(shape, lambda *_: (0,) * nd)


def _pick_tile(n, pref):
    # largest "nice" divisor of n, capped at pref.
    for t in (pref, 512, 256, 128, 64, 32, 16, 8):
        if t <= pref and t <= n and n % t == 0:
            return t
    # TODO(synk): pad ragged S/FF to a tile multiple (+ masking) instead of a
    #             full-dimension fallback.
    return n


def _bytes(shape, dtype):
    n = 1
    for s in shape:
        n *= int(s)
    return n * jnp.dtype(dtype).itemsize


def _vmem_limit_bytes(*nbytes):
    # double-buffered blocks + headroom, clamped to [32 MiB, 64 MiB] so the same
    # setting is valid on v5e/v6e (128 MiB) and v7x (64 MiB physical).
    need = 2 * sum(int(b) for b in nbytes) + (8 << 20)
    return int(min(max(need, 32 << 20), 64 << 20))


# ------------------------------ fused QKV projection ---------------------------

def _qkv_kernel(x_ref, w_ref, b_ref, q_ref, k_ref, v_ref):
    D = q_ref.shape[-1]
    x = x_ref[0].astype(jnp.bfloat16)                                   # (ts, D)
    y = jnp.dot(x, w_ref[...], preferred_element_type=jnp.float32) + b_ref[...]
    y = y.astype(jnp.bfloat16)                                          # (ts, 3D)
    q_ref[0] = y[:, :D]          # lane-dense (heads stay folded in D)
    k_ref[0] = y[:, D:2 * D]
    v_ref[0] = y[:, 2 * D:]


def qkv_projection(x, p, ts):
    B, S, D = x.shape
    io_spec = pl.BlockSpec((1, ts, D), lambda b, s: (b, s, 0))
    out_shape = jax.ShapeDtypeStruct((B, S, D), jnp.bfloat16)
    vmem = _vmem_limit_bytes(
        _bytes((ts, D), jnp.float32),
        3 * _bytes((ts, D), jnp.bfloat16),
        _bytes(p["wqkv"].shape, jnp.bfloat16),
        _bytes(p["bqkv"].shape, jnp.float32))
    return pl.pallas_call(
        _qkv_kernel,
        grid=(B, S // ts),
        in_specs=[io_spec,
                  _const_spec(p["wqkv"].shape),
                  _const_spec(p["bqkv"].shape)],
        out_specs=(io_spec, io_spec, io_spec),
        out_shape=(out_shape, out_shape, out_shape),
        compiler_params=pltpu.CompilerParams(
            dimension_semantics=("parallel", "parallel"),
            vmem_limit_bytes=vmem),
    )(x, p["wqkv"], p["bqkv"])


# --------- fused attention (resident K/V) + out-proj + LN1 + FFN + LN2 ---------

def _attn_ffn_kernel(num_heads,
                     x_ref, q_ref, k_ref, v_ref,
                     wo_ref, bo_ref, w1_ref, b1_ref, w2_ref, b2_ref,
                     g1_ref, be1_ref, g2_ref, be2_ref,
                     o_ref):
    D = x_ref.shape[-1]
    Dh = D // num_heads
    q = q_ref[0]                     # (ts, D) bf16, 1/sqrt(Dh) already folded in
    k = k_ref[0]                     # (S, D)  bf16, resident for the whole batch row
    v = v_ref[0]                     # (S, D)  bf16

    # Per-head attention over the full resident sequence; scores are (ts, S)
    # transient tiles (never (S, S)).  Out-projection is fused (no ctx HBM trip).
    # TODO(synk): for Dh < 128 the per-head out-proj contraction is shallow;
    #             grouping heads (lane concat) would fill the 256-wide MXU better.
    attn = jnp.zeros((q.shape[0], D), jnp.float32)
    for h in range(num_heads):
        sl = slice(h * Dh, (h + 1) * Dh)
        s = lax.dot_general(q[:, sl], k[:, sl], (((1,), (1,)), ((), ())),
                            preferred_element_type=jnp.float32)         # (ts, S)
        prob = _softmax_lastdim(s)
        ctx = jnp.dot(prob.astype(jnp.bfloat16), v[:, sl],
                      preferred_element_type=jnp.float32)               # (ts, Dh)
        attn = attn + jnp.dot(ctx.astype(jnp.bfloat16), wo_ref[sl, :],
                              preferred_element_type=jnp.float32)
    attn = attn + bo_ref[...]

    x = x_ref[0].astype(jnp.float32)
    src1 = _layer_norm(x + attn, g1_ref[...], be1_ref[...])

    # FFN with both weight matrices resident in VMEM (fetched once for the grid).
    h1 = jnp.dot(src1.astype(jnp.bfloat16), w1_ref[...],
                 preferred_element_type=jnp.float32)
    h1 = jnp.maximum(h1 + b1_ref[...], 0.0)
    ff = jnp.dot(h1.astype(jnp.bfloat16), w2_ref[...],
                 preferred_element_type=jnp.float32) + b2_ref[...]
    src2 = _layer_norm(src1 + ff, g2_ref[...], be2_ref[...])
    o_ref[0] = src2.astype(o_ref.dtype)


def attn_ffn(x, q, k, v, p, num_heads, ts):
    B, S, D = x.shape
    FF = p["w1"].shape[1]
    seq_spec = pl.BlockSpec((1, ts, D), lambda b, s: (b, s, 0))
    kv_spec = pl.BlockSpec((1, S, D), lambda b, s: (b, 0, 0))   # full-seq residency
    vmem = _vmem_limit_bytes(
        2 * _bytes((ts, D), jnp.float32),            # x tile + out tile
        _bytes((ts, D), jnp.bfloat16),               # q tile
        2 * _bytes((S, D), jnp.bfloat16),            # resident K, V
        _bytes((D, D), jnp.bfloat16),                # wo
        2 * _bytes((D, FF), jnp.bfloat16),           # w1, w2
        _bytes((ts, FF), jnp.float32),               # FFN hidden transient
        _bytes((ts, S), jnp.float32))                # score tile transient
    # TODO(synk): pipeline_mode=pl.Buffered(1) on the constant-weight specs would
    #             halve their VMEM footprint on v7x; left at defaults for portability.
    return pl.pallas_call(
        functools.partial(_attn_ffn_kernel, num_heads),
        grid=(B, S // ts),
        in_specs=[seq_spec, seq_spec, kv_spec, kv_spec,
                  _const_spec(p["wo"].shape), _const_spec(p["bo"].shape),
                  _const_spec(p["w1"].shape), _const_spec(p["b1"].shape),
                  _const_spec(p["w2"].shape), _const_spec(p["b2"].shape),
                  _const_spec(p["g1"].shape), _const_spec(p["be1"].shape),
                  _const_spec(p["g2"].shape), _const_spec(p["be2"].shape)],
        out_specs=seq_spec,
        out_shape=jax.ShapeDtypeStruct((B, S, D), x.dtype),
        compiler_params=pltpu.CompilerParams(
            dimension_semantics=("parallel", "parallel"),
            vmem_limit_bytes=vmem),
    )(x, q, k, v, p["wo"], p["bo"], p["w1"], p["b1"], p["w2"], p["b2"],
      p["g1"], p["be1"], p["g2"], p["be2"])


# ----------------------- slot attention (last layer only) ----------------------

def _slot_kernel(inv_sqrt_d, k_ref, v_ref, slots_ref,
                 slot_vec_ref, assign_ref, attn_ref):
    k = k_ref[0]                      # (S, D) bf16
    v = v_ref[0]                      # (S, D) bf16
    slots = slots_ref[...]            # (K, D) bf16
    logits = lax.dot_general(slots, k, (((1,), (1,)), ((), ())),
                             preferred_element_type=jnp.float32) * inv_sqrt_d  # (K, S)

    # user-visible probabilities -> exact division (no approx reciprocal)
    e = jnp.exp(logits - jnp.max(logits, axis=-1, keepdims=True))
    slot_attn = e / jnp.sum(e, axis=-1, keepdims=True)         # slot -> token, (K, S)
    e2 = jnp.exp(logits - jnp.max(logits, axis=0, keepdims=True))
    assign_t = e2 / jnp.sum(e2, axis=0, keepdims=True)         # token -> slot, (K, S)

    attn_ref[0] = slot_attn.astype(attn_ref.dtype)
    assign_ref[0] = assign_t.astype(assign_ref.dtype)
    slot_vec_ref[0] = jnp.dot(slot_attn.astype(jnp.bfloat16), v,
                              preferred_element_type=jnp.float32
                              ).astype(slot_vec_ref.dtype)


def slot_attention(k, v, p, dtype):
    B, S, D = k.shape
    K = p["slots"].shape[0]
    kv_spec = pl.BlockSpec((1, S, D), lambda b: (b, 0, 0))
    # TODO(synk): split S into a grid axis (online logit accumulation) for more
    #             parallelism on v7x when B is small; aux-only, kept simple here.
    return pl.pallas_call(
        functools.partial(_slot_kernel, 1.0 / math.sqrt(D)),
        grid=(B,),
        in_specs=[kv_spec, kv_spec, _const_spec(p["slots"].shape)],
        out_specs=(pl.BlockSpec((1, K, D), lambda b: (b, 0, 0)),
                   pl.BlockSpec((1, K, S), lambda b: (b, 0, 0)),
                   pl.BlockSpec((1, K, S), lambda b: (b, 0, 0))),
        out_shape=(jax.ShapeDtypeStruct((B, K, D), dtype),
                   jax.ShapeDtypeStruct((B, K, S), dtype),
                   jax.ShapeDtypeStruct((B, K, S), dtype)),
        compiler_params=pltpu.CompilerParams(dimension_semantics=("parallel",)),
    )(k, v, p["slots"])


# ------------------------------ final layer norm -------------------------------

def _final_ln_kernel(x_ref, g_ref, b_ref, o_ref):
    o_ref[0] = _layer_norm(x_ref[0].astype(jnp.float32),
                           g_ref[...], b_ref[...]).astype(o_ref.dtype)


def final_layer_norm(x, gamma, beta, ts):
    B, S, D = x.shape
    g = gamma.reshape(1, D).astype(jnp.float32)
    b = beta.reshape(1, D).astype(jnp.float32)
    return pl.pallas_call(
        _final_ln_kernel,
        grid=(B, S // ts),
        in_specs=[pl.BlockSpec((1, ts, D), lambda bi, s: (bi, s, 0)),
                  _const_spec((1, D)), _const_spec((1, D))],
        out_specs=pl.BlockSpec((1, ts, D), lambda bi, s: (bi, s, 0)),
        out_shape=jax.ShapeDtypeStruct((B, S, D), x.dtype),
        compiler_params=pltpu.CompilerParams(
            dimension_semantics=("parallel", "parallel")),
    )(x, g, b)


# ------------------------ one cluster-encoder layer ----------------------------

def _prepare_layer_params(p, num_heads):
    """Wrapper-side layout plumbing: bf16 weights, fused QKV weight with the
    1/sqrt(Dh) scale folded into the Q slice, (1, D) lane-aligned vectors."""
    D = p["wq"].shape[0]
    FF = p["w1"].shape[1]
    Dh = D // num_heads
    bf, f32 = jnp.bfloat16, jnp.float32
    scale = 1.0 / math.sqrt(Dh)
    wqkv = jnp.concatenate([p["wq"] * scale, p["wk"], p["wv"]], axis=1).astype(bf)
    bqkv = jnp.concatenate([p["bq"] * scale, p["bk"], p["bv"]]
                           ).reshape(1, 3 * D).astype(f32)
    return {
        "wqkv": wqkv, "bqkv": bqkv,
        "wo": p["wo"].astype(bf), "bo": p["bo"].reshape(1, D).astype(f32),
        "w1": p["w1"].astype(bf), "b1": p["b1"].reshape(1, FF).astype(f32),
        "w2": p["w2"].astype(bf), "b2": p["b2"].reshape(1, D).astype(f32),
        "g1": p["g1"].reshape(1, D).astype(f32),
        "be1": p["be1"].reshape(1, D).astype(f32),
        "g2": p["g2"].reshape(1, D).astype(f32),
        "be2": p["be2"].reshape(1, D).astype(f32),
        "slots": p["slots"].astype(bf),
    }


def cluster_encoder_layer(x, params, num_heads, emit_aux):
    B, S, D = x.shape
    Dh = D // num_heads
    p = _prepare_layer_params(params, num_heads)
    ts = _pick_tile(S, 256)   # sequence tile (256 fills the 256-wide MXU on v6e/v7x)

    q, k, v = qkv_projection(x, p, ts)                  # (B, S, D) bf16, lane-dense
    src = attn_ffn(x, q, k, v, p, num_heads, ts)        # residual kept in x.dtype (f32)

    if not emit_aux:
        return src, None

    slot_vectors, assign_t, slot_attn = slot_attention(k, v, p, x.dtype)
    # layout / scale plumbing back to the module's reference conventions (wrapper side)
    queries = (q.astype(jnp.float32) * math.sqrt(Dh)).astype(x.dtype)  # undo folded scale
    keys = k.astype(x.dtype)
    slot_assignment_scores = assign_t.transpose(0, 2, 1)               # (B, S, K)
    return src, (queries, keys, slot_vectors, slot_assignment_scores, slot_attn)


# ------------------------------ TransformerEncoder -----------------------------

def transformer_encoder(src, layer_params_list, num_heads, norm_params=None,
                        mask=None, src_key_padding_mask=None):
    """Mirrors TransformerEncoder.forward: loop layers, keep last layer's extras."""
    assert mask is None and src_key_padding_mask is None
    n_layers = len(layer_params_list)
    aux = None
    for i, params in enumerate(layer_params_list):
        src, layer_aux = cluster_encoder_layer(src, params, num_heads,
                                               emit_aux=(i == n_layers - 1))
        if layer_aux is not None:
            aux = layer_aux
    if norm_params is not None:
        src = final_layer_norm(src, norm_params["gamma"], norm_params["beta"],
                               _pick_tile(src.shape[1], 256))
    queries, keys, slot_vectors, slot_assign, slot_attn = aux
    return (src, queries, keys, slot_vectors, slot_assign, slot_attn)


# ------------------------------ deterministic init -----------------------------

def init_layer_params(key, d_model, n_heads, dim_ff, n_slots, scale=0.02):
    ks = jax.random.split(key, 8)
    return {
        "wq": scale * jax.random.normal(ks[0], (d_model, d_model), jnp.float32),
        "bq": jnp.zeros((d_model,), jnp.float32),
        "wk": scale * jax.random.normal(ks[1], (d_model, d_model), jnp.float32),
        "bk": jnp.zeros((d_model,), jnp.float32),
        "wv": scale * jax.random.normal(ks[2], (d_model, d_model), jnp.float32),
        "bv": jnp.zeros((d_model,), jnp.float32),
        "wo": scale * jax.random.normal(ks[3], (d_model, d_model), jnp.float32),
        "bo": jnp.zeros((d_model,), jnp.float32),
        "w1": scale * jax.random.normal(ks[4], (d_model, dim_ff), jnp.float32),
        "b1": jnp.zeros((dim_ff,), jnp.float32),
        "w2": scale * jax.random.normal(ks[5], (dim_ff, d_model), jnp.float32),
        "b2": jnp.zeros((d_model,), jnp.float32),
        "g1": jnp.ones((d_model,), jnp.float32),
        "be1": jnp.zeros((d_model,), jnp.float32),
        "g2": jnp.ones((d_model,), jnp.float32),
        "be2": jnp.zeros((d_model,), jnp.float32),
        "slots": scale * jax.random.normal(ks[6], (n_slots, d_model), jnp.float32),
    }


if __name__ == "__main__":
    B, S, D = 2, 8, 32       # batch, seq, hidden
    H, FF, K = 4, 64, 4      # heads, feed-forward dim, num slots (clusters)
    NUM_LAYERS = 2

    root = jax.random.PRNGKey(0)
    k_x, _k_norm, *k_layers = jax.random.split(root, 2 + NUM_LAYERS)

    x = jax.random.normal(k_x, (B, S, D), jnp.float32)
    layer_params = [init_layer_params(k, D, H, FF, K) for k in k_layers]
    norm_params = {"gamma": jnp.ones((D,), jnp.float32),
                   "beta": jnp.zeros((D,), jnp.float32)}

    run = jax.jit(functools.partial(transformer_encoder,
                                    layer_params_list=layer_params,
                                    num_heads=H,
                                    norm_params=norm_params))
    outs = jax.block_until_ready(run(x))

    src, queries, keys, slot_vectors, slot_assign, slot_attn = outs
    assert src.shape == (B, S, D)
    assert queries.shape == (B, S, D) and keys.shape == (B, S, D)
    assert slot_vectors.shape == (B, K, D)
    assert slot_assign.shape == (B, S, K)
    assert slot_attn.shape == (B, K, S)
    assert all(bool(jnp.all(jnp.isfinite(o.astype(jnp.float32)))) for o in outs)

    print("KERNEL_OK")
</pallas_src>

<mosaic_0001>
module attributes {stable_mosaic.version = 11 : i64} {
  func.func @_qkv_kernel(%arg0: i32, %arg1: i32, %arg2: memref<1x8x32xf32, #tpu.memory_space<vmem>>, %arg3: memref<32x96xbf16, #tpu.memory_space<vmem>>, %arg4: memref<1x96xf32, #tpu.memory_space<vmem>>, %arg5: memref<1x8x32xbf16, #tpu.memory_space<vmem>>, %arg6: memref<1x8x32xbf16, #tpu.memory_space<vmem>>, %arg7: memref<1x8x32xbf16, #tpu.memory_space<vmem>>) attributes {dimension_semantics = [#tpu.dimension_semantics<parallel>, #tpu.dimension_semantics<parallel>], iteration_bounds = array<i64: 2, 1>, scalar_prefetch = 0 : i64, scratch_operands = 0 : i64, tpu.core_type = #tpu.core_type<tc>, window_params = [{transform_indices = @transform_0, window_bounds = array<i64: 1, 8, 32>}, {pipeline_mode = #tpu.pipeline_mode<synchronous>, transform_indices = @transform_1, window_bounds = array<i64: 32, 96>}, {pipeline_mode = #tpu.pipeline_mode<synchronous>, transform_indices = @transform_2, window_bounds = array<i64: 1, 96>}, {transform_indices = @transform_3, window_bounds = array<i64: 1, 8, 32>}, {transform_indices = @transform_4, window_bounds = array<i64: 1, 8, 32>}, {transform_indices = @transform_5, window_bounds = array<i64: 1, 8, 32>}]} {
    %c0 = arith.constant 0 : index
    %c0_0 = arith.constant 0 : index
    %c0_1 = arith.constant 0 : index
    %0 = vector.load %arg2[%c0, %c0_0, %c0_1] : memref<1x8x32xf32, #tpu.memory_space<vmem>>, vector<1x8x32xf32>
    %1 = vector.shape_cast %0 : vector<1x8x32xf32> to vector<8x32xf32>
    %2 = arith.truncf %1 : vector<8x32xf32> to vector<8x32xbf16>
    %c0_2 = arith.constant 0 : index
    %c0_3 = arith.constant 0 : index
    %3 = vector.load %arg3[%c0_2, %c0_3] : memref<32x96xbf16, #tpu.memory_space<vmem>>, vector<32x96xbf16>
    %cst = arith.constant dense<0.000000e+00> : vector<8x96xf32>
    %4 = tpu.matmul %2, %3, %cst {dimension_numbers = #tpu.dot_dimension_numbers<[1], [0], [0], [1], [0, 0, 1, 1], [], []>} : vector<8x32xbf16>, vector<32x96xbf16>, vector<8x96xf32> -> vector<8x96xf32>
    %c0_4 = arith.constant 0 : index
    %c0_5 = arith.constant 0 : index
    %5 = vector.load %arg4[%c0_4, %c0_5] : memref<1x96xf32, #tpu.memory_space<vmem>>, vector<1x96xf32>
    %6 = vector.broadcast %5 : vector<1x96xf32> to vector<8x96xf32>
    %7 = arith.addf %4, %6 : vector<8x96xf32>
    %8 = arith.truncf %7 : vector<8x96xf32> to vector<8x96xbf16>
    %9 = vector.extract_strided_slice %8 {offsets = [0, 0], sizes = [8, 32], strides = [1, 1]} : vector<8x96xbf16> to vector<8x32xbf16>
    %c0_6 = arith.constant 0 : index
    %c0_7 = arith.constant 0 : index
    %c0_8 = arith.constant 0 : index
    %10 = vector.load %arg5[%c0_6, %c0_7, %c0_8] : memref<1x8x32xbf16, #tpu.memory_space<vmem>>, vector<1x8x32xbf16>
    %11 = vector.shape_cast %10 : vector<1x8x32xbf16> to vector<8x32xbf16>
    %12 = vector.shape_cast %9 : vector<8x32xbf16> to vector<1x8x32xbf16>
    tpu.vector_store %arg5[%c0_6, %c0_7, %c0_8], %12 {strides = array<i32>} : memref<1x8x32xbf16, #tpu.memory_space<vmem>>, vector<1x8x32xbf16>,
    %13 = vector.extract_strided_slice %8 {offsets = [0, 32], sizes = [8, 32], strides = [1, 1]} : vector<8x96xbf16> to vector<8x32xbf16>
    %c0_9 = arith.constant 0 : index
    %c0_10 = arith.constant 0 : index
    %c0_11 = arith.constant 0 : index
    %14 = vector.load %arg6[%c0_9, %c0_10, %c0_11] : memref<1x8x32xbf16, #tpu.memory_space<vmem>>, vector<1x8x32xbf16>
    %15 = vector.shape_cast %14 : vector<1x8x32xbf16> to vector<8x32xbf16>
    %16 = vector.shape_cast %13 : vector<8x32xbf16> to vector<1x8x32xbf16>
    tpu.vector_store %arg6[%c0_9, %c0_10, %c0_11], %16 {strides = array<i32>} : memref<1x8x32xbf16, #tpu.memory_space<vmem>>, vector<1x8x32xbf16>,
    %17 = vector.extract_strided_slice %8 {offsets = [0, 64], sizes = [8, 32], strides = [1, 1]} : vector<8x96xbf16> to vector<8x32xbf16>
    %c0_12 = arith.constant 0 : index
    %c0_13 = arith.constant 0 : index
    %c0_14 = arith.constant 0 : index
    %18 = vector.load %arg7[%c0_12, %c0_13, %c0_14] : memref<1x8x32xbf16, #tpu.memory_space<vmem>>, vector<1x8x32xbf16>
    %19 = vector.shape_cast %18 : vector<1x8x32xbf16> to vector<8x32xbf16>
    %20 = vector.shape_cast %17 : vector<8x32xbf16> to vector<1x8x32xbf16>
    tpu.vector_store %arg7[%c0_12, %c0_13, %c0_14], %20 {strides = array<i32>} : memref<1x8x32xbf16, #tpu.memory_space<vmem>>, vector<1x8x32xbf16>,
    return
  }
  func.func @transform_0(%arg0: i32, %arg1: i32) -> (i32, i32, i32) {
    %c0_i32 = arith.constant 0 : i32
    %c0_i32_0 = arith.constant 0 : i32
    return %arg0, %arg1, %c0_i32 : i32, i32, i32
  }
  func.func @transform_1(%arg0: i32, %arg1: i32) -> (i32, i32) {
    %c0_i32 = arith.constant 0 : i32
    %c0_i32_0 = arith.constant 0 : i32
    %c0_i32_1 = arith.constant 0 : i32
    return %c0_i32, %c0_i32_0 : i32, i32
  }
  func.func @transform_2(%arg0: i32, %arg1: i32) -> (i32, i32) {
    %c0_i32 = arith.constant 0 : i32
    %c0_i32_0 = arith.constant 0 : i32
    %c0_i32_1 = arith.constant 0 : i32
    return %c0_i32, %c0_i32_0 : i32, i32
  }
  func.func @transform_3(%arg0: i32, %arg1: i32) -> (i32, i32, i32) {
    %c0_i32 = arith.constant 0 : i32
    %c0_i32_0 = arith.constant 0 : i32
    return %arg0, %arg1, %c0_i32 : i32, i32, i32
  }
  func.func @transform_4(%arg0: i32, %arg1: i32) -> (i32, i32, i32) {
    %c0_i32 = arith.constant 0 : i32
    %c0_i32_0 = arith.constant 0 : i32
    return %arg0, %arg1, %c0_i32 : i32, i32, i32
  }
  func.func @transform_5(%arg0: i32, %arg1: i32) -> (i32, i32, i32) {
    %c0_i32 = arith.constant 0 : i32
    %c0_i32_0 = arith.constant 0 : i32
    return %arg0, %arg1, %c0_i32 : i32, i32, i32
  }
}

module attributes {stable_mosaic.version = 11 : i64} {
  func.func @_qkv_kernel(%arg0: i32, %arg1: i32, %arg2: memref<1x8x32xf32, #tpu.memory_space<vmem>>, %arg3: memref<32x96xbf16, #tpu.memory_space<vmem>>, %arg4: memref<1x96xf32, #tpu.memory_space<vmem>>, %arg5: memref<1x8x32xbf16, #tpu.memory_space<vmem>>, %arg6: memref<1x8x32xbf16, #tpu.memory_space<vmem>>, %arg7: memref<1x8x32xbf16, #tpu.memory_space<vmem>>) attributes {dimension_semantics = [#tpu.dimension_semantics<parallel>, #tpu.dimension_semantics<parallel>], iteration_bounds = array<i64: 2, 1>, scalar_prefetch = 0 : i64, scratch_operands = 0 : i64, tpu.core_type = #tpu.core_type<tc>, window_params = [{transform_indices = @transform_0, window_bounds = array<i64: 1, 8, 32>}, {pipeline_mode = #tpu.pipeline_mode<synchronous>, transform_indices = @transform_1, window_bounds = array<i64: 32, 96>}, {pipeline_mode = #tpu.pipeline_mode<synchronous>, transform_indices = @transform_2, window_bounds = array<i64: 1, 96>}, {transform_indices = @transform_3, window_bounds = array<i64: 1, 8, 32>}, {transform_indices = @transform_4, window_bounds = array<i64: 1, 8, 32>}, {transform_indices = @transform_5, window_bounds = array<i64: 1, 8, 32>}]} {
    %c0 = arith.constant 0 : index
    %c0_0 = arith.constant 0 : index
    %c0_1 = arith.constant 0 : index
    %0 = vector.load %arg2[%c0, %c0_0, %c0_1] : memref<1x8x32xf32, #tpu.memory_space<vmem>>, vector<1x8x32xf32>
    %1 = vector.shape_cast %0 : vector<1x8x32xf32> to vector<8x32xf32>
    %2 = arith.truncf %1 : vector<8x32xf32> to vector<8x32xbf16>
    %c0_2 = arith.constant 0 : index
    %c0_3 = arith.constant 0 : index
    %3 = vector.load %arg3[%c0_2, %c0_3] : memref<32x96xbf16, #tpu.memory_space<vmem>>, vector<32x96xbf16>
    %cst = arith.constant dense<0.000000e+00> : vector<8x96xf32>
    %4 = tpu.matmul %2, %3, %cst {dimension_numbers = #tpu.dot_dimension_numbers<[1], [0], [0], [1], [0, 0, 1, 1], [], []>} : vector<8x32xbf16>, vector<32x96xbf16>, vector<8x96xf32> -> vector<8x96xf32>
    %c0_4 = arith.constant 0 : index
    %c0_5 = arith.constant 0 : index
    %5 = vector.load %arg4[%c0_4, %c0_5] : memref<1x96xf32, #tpu.memory_space<vmem>>, vector<1x96xf32>
    %6 = vector.broadcast %5 : vector<1x96xf32> to vector<8x96xf32>
    %7 = arith.addf %4, %6 : vector<8x96xf32>
    %8 = arith.truncf %7 : vector<8x96xf32> to vector<8x96xbf16>
    %9 = vector.extract_strided_slice %8 {offsets = [0, 0], sizes = [8, 32], strides = [1, 1]} : vector<8x96xbf16> to vector<8x32xbf16>
    %c0_6 = arith.constant 0 : index
    %c0_7 = arith.constant 0 : index
    %c0_8 = arith.constant 0 : index
    %10 = vector.load %arg5[%c0_6, %c0_7, %c0_8] : memref<1x8x32xbf16, #tpu.memory_space<vmem>>, vector<1x8x32xbf16>
    %11 = vector.shape_cast %10 : vector<1x8x32xbf16> to vector<8x32xbf16>
    %12 = vector.shape_cast %9 : vector<8x32xbf16> to vector<1x8x32xbf16>
    tpu.vector_store %arg5[%c0_6, %c0_7, %c0_8], %12 {strides = array<i32>} : memref<1x8x32xbf16, #tpu.memory_space<vmem>>, vector<1x8x32xbf16>,
    %13 = vector.extract_strided_slice %8 {offsets = [0, 32], sizes = [8, 32], strides = [1, 1]} : vector<8x96xbf16> to vector<8x32xbf16>
    %c0_9 = arith.constant 0 : index
    %c0_10 = arith.constant 0 : index
    %c0_11 = arith.constant 0 : index
    %14 = vector.load %arg6[%c0_9, %c0_10, %c0_11] : memref<1x8x32xbf16, #tpu.memory_space<vmem>>, vector<1x8x32xbf16>
    %15 = vector.shape_cast %14 : vector<1x8x32xbf16> to vector<8x32xbf16>
    %16 = vector.shape_cast %13 : vector<8x32xbf16> to vector<1x8x32xbf16>
    tpu.vector_store %arg6[%c0_9, %c0_10, %c0_11], %16 {strides = array<i32>} : memref<1x8x32xbf16, #tpu.memory_space<vmem>>, vector<1x8x32xbf16>,
    %17 = vector.extract_strided_slice %8 {offsets = [0, 64], sizes = [8, 32], strides = [1, 1]} : vector<8x96xbf16> to vector<8x32xbf16>
    %c0_12 = arith.constant 0 : index
    %c0_13 = arith.constant 0 : index
    %c0_14 = arith.constant 0 : index
    %18 = vector.load %arg7[%c0_12, %c0_13, %c0_14] : memref<1x8x32xbf16, #tpu.memory_space<vmem>>, vector<1x8x32xbf16>
    %19 = vector.shape_cast %18 : vector<1x8x32xbf16> to vector<8x32xbf16>
    %20 = vector.shape_cast %17 : vector<8x32xbf16> to vector<1x8x32xbf16>
    tpu.vector_store %arg7[%c0_12, %c0_13, %c0_14], %20 {strides = array<i32>} : memref<1x8x32xbf16, #tpu.memory_space<vmem>>, vector<1x8x32xbf16>,
    return
  }
  func.func @transform_0(%arg0: i32, %arg1: i32) -> (i32, i32, i32) {
    %c0_i32 = arith.constant 0 : i32
    %c0_i32_0 = arith.constant 0 : i32
    return %arg0, %arg1, %c0_i32 : i32, i32, i32
  }
  func.func @transform_1(%arg0: i32, %arg1: i32) -> (i32, i32) {
    %c0_i32 = arith.constant 0 : i32
    %c0_i32_0 = arith.constant 0 : i32
    %c0_i32_1 = arith.constant 0 : i32
    return %c0_i32, %c0_i32_0 : i32, i32
  }
  func.func @transform_2(%arg0: i32, %arg1: i32) -> (i32, i32) {
    %c0_i32 = arith.constant 0 : i32
    %c0_i32_0 = arith.constant 0 : i32
    %c0_i32_1 = arith.constant 0 : i32
    return %c0_i32, %c0_i32_0 : i32, i32
  }
  func.func @transform_3(%arg0: i32, %arg1: i32) -> (i32, i32, i32) {
    %c0_i32 = arith.constant 0 : i32
    %c0_i32_0 = arith.constant 0 : i32
    return %arg0, %arg1, %c0_i32 : i32, i32, i32
  }
  func.func @transform_4(%arg0: i32, %arg1: i32) -> (i32, i32, i32) {
    %c0_i32 = arith.constant 0 : i32
    %c0_i32_0 = arith.constant 0 : i32
    return %arg0, %arg1, %c0_i32 : i32, i32, i32
  }
  func.func @transform_5(%arg0: i32, %arg1: i32) -> (i32, i32, i32) {
    %c0_i32 = arith.constant 0 : i32
    %c0_i32_0 = arith.constant 0 : i32
    return %arg0, %arg1, %c0_i32 : i32, i32, i32
  }
}

module attributes {stable_mosaic.version = 11 : i64} {
  func.func @_final_ln_kernel(%arg0: i32, %arg1: i32, %arg2: memref<1x8x32xf32, #tpu.memory_space<vmem>>, %arg3: memref<1x32xf32, #tpu.memory_space<vmem>>, %arg4: memref<1x32xf32, #tpu.memory_space<vmem>>, %arg5: memref<1x8x32xf32, #tpu.memory_space<vmem>>) attributes {dimension_semantics = [#tpu.dimension_semantics<parallel>, #tpu.dimension_semantics<parallel>], iteration_bounds = array<i64: 2, 1>, scalar_prefetch = 0 : i64, scratch_operands = 0 : i64, tpu.core_type = #tpu.core_type<tc>, window_params = [{transform_indices = @transform_0, window_bounds = array<i64: 1, 8, 32>}, {pipeline_mode = #tpu.pipeline_mode<synchronous>, transform_indices = @transform_1, window_bounds = array<i64: 1, 32>}, {pipeline_mode = #tpu.pipeline_mode<synchronous>, transform_indices = @transform_2, window_bounds = array<i64: 1, 32>}, {transform_indices = @transform_3, window_bounds = array<i64: 1, 8, 32>}]} {
    %c0 = arith.constant 0 : index
    %c0_0 = arith.constant 0 : index
    %c0_1 = arith.constant 0 : index
    %0 = vector.load %arg2[%c0, %c0_0, %c0_1] : memref<1x8x32xf32, #tpu.memory_space<vmem>>, vector<1x8x32xf32>
    %1 = vector.shape_cast %0 : vector<1x8x32xf32> to vector<8x32xf32>
    %c0_2 = arith.constant 0 : index
    %c0_3 = arith.constant 0 : index
    %2 = vector.load %arg3[%c0_2, %c0_3] : memref<1x32xf32, #tpu.memory_space<vmem>>, vector<1x32xf32>
    %c0_4 = arith.constant 0 : index
    %c0_5 = arith.constant 0 : index
    %3 = vector.load %arg4[%c0_4, %c0_5] : memref<1x32xf32, #tpu.memory_space<vmem>>, vector<1x32xf32>
    %cst = arith.constant dense<0.000000e+00> : vector<8xf32>
    %4 = vector.multi_reduction <add>, %1, %cst [1] : vector<8x32xf32> to vector<8xf32>
    %5 = vector.shape_cast %4 : vector<8xf32> to vector<8x1xf32>
    %cst_6 = arith.constant 3.200000e+01 : f32
    %6 = vector.broadcast %cst_6 : f32 to vector<8x1xf32>
    %7 = arith.divf %5, %6 : vector<8x1xf32>
    %8 = vector.broadcast %7 : vector<8x1xf32> to vector<8x32xf32>
    %9 = arith.subf %1, %8 : vector<8x32xf32>
    %10 = arith.mulf %9, %9 : vector<8x32xf32>
    %cst_7 = arith.constant dense<0.000000e+00> : vector<8xf32>
    %11 = vector.multi_reduction <add>, %10, %cst_7 [1] : vector<8x32xf32> to vector<8xf32>
    %12 = vector.shape_cast %11 : vector<8xf32> to vector<8x1xf32>
    %cst_8 = arith.constant 3.200000e+01 : f32
    %13 = vector.broadcast %cst_8 : f32 to vector<8x1xf32>
    %14 = arith.divf %12, %13 : vector<8x1xf32>
    %15 = vector.broadcast %7 : vector<8x1xf32> to vector<8x32xf32>
    %16 = arith.subf %1, %15 : vector<8x32xf32>
    %cst_9 = arith.constant 9.99999974E-6 : f32
    %17 = vector.broadcast %cst_9 : f32 to vector<8x1xf32>
    %18 = arith.addf %14, %17 : vector<8x1xf32>
    %19 = math.rsqrt %18 : vector<8x1xf32>
    %20 = vector.broadcast %19 : vector<8x1xf32> to vector<8x32xf32>
    %21 = arith.mulf %16, %20 : vector<8x32xf32>
    %22 = vector.broadcast %2 : vector<1x32xf32> to vector<8x32xf32>
    %23 = arith.mulf %21, %22 : vector<8x32xf32>
    %24 = vector.broadcast %3 : vector<1x32xf32> to vector<8x32xf32>
    %25 = arith.addf %23, %24 : vector<8x32xf32>
    %c0_10 = arith.constant 0 : index
    %c0_11 = arith.constant 0 : index
    %c0_12 = arith.constant 0 : index
    %26 = vector.load %arg5[%c0_10, %c0_11, %c0_12] : memref<1x8x32xf32, #tpu.memory_space<vmem>>, vector<1x8x32xf32>
    %27 = vector.shape_cast %26 : vector<1x8x32xf32> to vector<8x32xf32>
    %28 = vector.shape_cast %25 : vector<8x32xf32> to vector<1x8x32xf32>
    tpu.vector_store %arg5[%c0_10, %c0_11, %c0_12], %28 {strides = array<i32>} : memref<1x8x32xf32, #tpu.memory_space<vmem>>, vector<1x8x32xf32>,
    return
  }
  func.func @transform_0(%arg0: i32, %arg1: i32) -> (i32, i32, i32) {
    %c0_i32 = arith.constant 0 : i32
    %c0_i32_0 = arith.constant 0 : i32
    return %arg0, %arg1, %c0_i32 : i32, i32, i32
  }
  func.func @transform_1(%arg0: i32, %arg1: i32) -> (i32, i32) {
    %c0_i32 = arith.constant 0 : i32
    %c0_i32_0 = arith.constant 0 : i32
    %c0_i32_1 = arith.constant 0 : i32
    return %c0_i32, %c0_i32_0 : i32, i32
  }
  func.func @transform_2(%arg0: i32, %arg1: i32) -> (i32, i32) {
    %c0_i32 = arith.constant 0 : i32
    %c0_i32_0 = arith.constant 0 : i32
    %c0_i32_1 = arith.constant 0 : i32
    return %c0_i32, %c0_i32_0 : i32, i32
  }
  func.func @transform_3(%arg0: i32, %arg1: i32) -> (i32, i32, i32) {
    %c0_i32 = arith.constant 0 : i32
    %c0_i32_0 = arith.constant 0 : i32
    return %arg0, %arg1, %c0_i32 : i32, i32, i32
  }
}

module attributes {stable_mosaic.version = 11 : i64} {
  func.func @_attn_ffn_kernel(%arg0: i32, %arg1: i32, %arg2: memref<1x8x32xf32, #tpu.memory_space<vmem>>, %arg3: memref<1x8x32xbf16, #tpu.memory_space<vmem>>, %arg4: memref<1x8x32xbf16, #tpu.memory_space<vmem>>, %arg5: memref<1x8x32xbf16, #tpu.memory_space<vmem>>, %arg6: memref<32x32xbf16, #tpu.memory_space<vmem>>, %arg7: memref<1x32xf32, #tpu.memory_space<vmem>>, %arg8: memref<32x64xbf16, #tpu.memory_space<vmem>>, %arg9: memref<1x64xf32, #tpu.memory_space<vmem>>, %arg10: memref<64x32xbf16, #tpu.memory_space<vmem>>, %arg11: memref<1x32xf32, #tpu.memory_space<vmem>>, %arg12: memref<1x32xf32, #tpu.memory_space<vmem>>, %arg13: memref<1x32xf32, #tpu.memory_space<vmem>>, %arg14: memref<1x32xf32, #tpu.memory_space<vmem>>, %arg15: memref<1x32xf32, #tpu.memory_space<vmem>>, %arg16: memref<1x8x32xf32, #tpu.memory_space<vmem>>) attributes {dimension_semantics = [#tpu.dimension_semantics<parallel>, #tpu.dimension_semantics<parallel>], iteration_bounds = array<i64: 2, 1>, scalar_prefetch = 0 : i64, scratch_operands = 0 : i64, tpu.core_type = #tpu.core_type<tc>, window_params = [{transform_indices = @transform_0, window_bounds = array<i64: 1, 8, 32>}, {transform_indices = @transform_1, window_bounds = array<i64: 1, 8, 32>}, {transform_indices = @transform_2, window_bounds = array<i64: 1, 8, 32>}, {transform_indices = @transform_3, window_bounds = array<i64: 1, 8, 32>}, {pipeline_mode = #tpu.pipeline_mode<synchronous>, transform_indices = @transform_4, window_bounds = array<i64: 32, 32>}, {pipeline_mode = #tpu.pipeline_mode<synchronous>, transform_indices = @transform_5, window_bounds = array<i64: 1, 32>}, {pipeline_mode = #tpu.pipeline_mode<synchronous>, transform_indices = @transform_6, window_bounds = array<i64: 32, 64>}, {pipeline_mode = #tpu.pipeline_mode<synchronous>, transform_indices = @transform_7, window_bounds = array<i64: 1, 64>}, {pipeline_mode = #tpu.pipeline_mode<synchronous>, transform_indices = @transform_8, window_bounds = array<i64: 64, 32>}, {pipeline_mode = #tpu.pipeline_mode<synchronous>, transform_indices = @transform_9, window_bounds = array<i64: 1, 32>}, {pipeline_mode = #tpu.pipeline_mode<synchronous>, transform_indices = @transform_10, window_bounds = array<i64: 1, 32>}, {pipeline_mode = #tpu.pipeline_mode<synchronous>, transform_indices = @transform_11, window_bounds = array<i64: 1, 32>}, {pipeline_mode = #tpu.pipeline_mode<synchronous>, transform_indices = @transform_12, window_bounds = array<i64: 1, 32>}, {pipeline_mode = #tpu.pipeline_mode<synchronous>, transform_indices = @transform_13, window_bounds = array<i64: 1, 32>}, {transform_indices = @transform_14, window_bounds = array<i64: 1, 8, 32>}]} {
    %c0 = arith.constant 0 : index
    %c0_0 = arith.constant 0 : index
    %c0_1 = arith.constant 0 : index
    %0 = vector.load %arg3[%c0, %c0_0, %c0_1] : memref<1x8x32xbf16, #tpu.memory_space<vmem>>, vector<1x8x32xbf16>
    %1 = vector.shape_cast %0 : vector<1x8x32xbf16> to vector<8x32xbf16>
    %c0_2 = arith.constant 0 : index
    %c0_3 = arith.constant 0 : index
    %c0_4 = arith.constant 0 : index
    %2 = vector.load %arg4[%c0_2, %c0_3, %c0_4] : memref<1x8x32xbf16, #tpu.memory_space<vmem>>, vector<1x8x32xbf16>
    %3 = vector.shape_cast %2 : vector<1x8x32xbf16> to vector<8x32xbf16>
    %c0_5 = arith.constant 0 : index
    %c0_6 = arith.constant 0 : index
    %c0_7 = arith.constant 0 : index
    %4 = vector.load %arg5[%c0_5, %c0_6, %c0_7] : memref<1x8x32xbf16, #tpu.memory_space<vmem>>, vector<1x8x32xbf16>
    %5 = vector.shape_cast %4 : vector<1x8x32xbf16> to vector<8x32xbf16>
    %cst = arith.constant 0.000000e+00 : f32
    %6 = vector.broadcast %cst : f32 to vector<8x32xf32>
    %7 = vector.extract_strided_slice %1 {offsets = [0, 0], sizes = [8, 8], strides = [1, 1]} : vector<8x32xbf16> to vector<8x8xbf16>
    %8 = vector.extract_strided_slice %3 {offsets = [0, 0], sizes = [8, 8], strides = [1, 1]} : vector<8x32xbf16> to vector<8x8xbf16>
    %cst_8 = arith.constant dense<0.000000e+00> : vector<8x8xf32>
    %9 = tpu.matmul %7, %8, %cst_8 {dimension_numbers = #tpu.dot_dimension_numbers<[1], [1], [0], [0], [0, 0, 1, 0], [], []>} : vector<8x8xbf16>, vector<8x8xbf16>, vector<8x8xf32> -> vector<8x8xf32>
    %cst_9 = arith.constant dense<0xFF800000> : vector<8xf32>
    %10 = vector.multi_reduction <maximumf>, %9, %cst_9 [1] : vector<8x8xf32> to vector<8xf32>
    %11 = vector.shape_cast %10 : vector<8xf32> to vector<8x1xf32>
    %12 = vector.broadcast %11 : vector<8x1xf32> to vector<8x8xf32>
    %13 = arith.subf %9, %12 : vector<8x8xf32>
    %14 = math.exp %13 : vector<8x8xf32>
    %cst_10 = arith.constant dense<0.000000e+00> : vector<8xf32>
    %15 = vector.multi_reduction <add>, %14, %cst_10 [1] : vector<8x8xf32> to vector<8xf32>
    %16 = vector.shape_cast %15 : vector<8xf32> to vector<8x1xf32>
    %17 = tpu.reciprocal %16 {approx = true} : vector<8x1xf32> -> vector<8x1xf32>
    %18 = vector.broadcast %17 : vector<8x1xf32> to vector<8x8xf32>
    %19 = arith.mulf %14, %18 : vector<8x8xf32>
    %20 = arith.truncf %19 : vector<8x8xf32> to vector<8x8xbf16>
    %21 = vector.extract_strided_slice %5 {offsets = [0, 0], sizes = [8, 8], strides = [1, 1]} : vector<8x32xbf16> to vector<8x8xbf16>
    %cst_11 = arith.constant dense<0.000000e+00> : vector<8x8xf32>
    %22 = tpu.matmul %20, %21, %cst_11 {dimension_numbers = #tpu.dot_dimension_numbers<[1], [0], [0], [1], [0, 0, 1, 1], [], []>} : vector<8x8xbf16>, vector<8x8xbf16>, vector<8x8xf32> -> vector<8x8xf32>
    %23 = arith.truncf %22 : vector<8x8xf32> to vector<8x8xbf16>
    %c0_12 = arith.constant 0 : index
    %c0_13 = arith.constant 0 : index
    %24 = vector.load %arg6[%c0_12, %c0_13] : memref<32x32xbf16, #tpu.memory_space<vmem>>, vector<8x32xbf16>
    %cst_14 = arith.constant dense<0.000000e+00> : vector<8x32xf32>
    %25 = tpu.matmul %23, %24, %cst_14 {dimension_numbers = #tpu.dot_dimension_numbers<[1], [0], [0], [1], [0, 0, 1, 1], [], []>} : vector<8x8xbf16>, vector<8x32xbf16>, vector<8x32xf32> -> vector<8x32xf32>
    %26 = arith.addf %6, %25 : vector<8x32xf32>
    %27 = vector.extract_strided_slice %1 {offsets = [0, 8], sizes = [8, 8], strides = [1, 1]} : vector<8x32xbf16> to vector<8x8xbf16>
    %28 = vector.extract_strided_slice %3 {offsets = [0, 8], sizes = [8, 8], strides = [1, 1]} : vector<8x32xbf16> to vector<8x8xbf16>
    %cst_15 = arith.constant dense<0.000000e+00> : vector<8x8xf32>
    %29 = tpu.matmul %27, %28, %cst_15 {dimension_numbers = #tpu.dot_dimension_numbers<[1], [1], [0], [0], [0, 0, 1, 0], [], []>} : vector<8x8xbf16>, vector<8x8xbf16>, vector<8x8xf32> -> vector<8x8xf32>
    %cst_16 = arith.constant dense<0xFF800000> : vector<8xf32>
    %30 = vector.multi_reduction <maximumf>, %29, %cst_16 [1] : vector<8x8xf32> to vector<8xf32>
    %31 = vector.shape_cast %30 : vector<8xf32> to vector<8x1xf32>
    %32 = vector.broadcast %31 : vector<8x1xf32> to vector<8x8xf32>
    %33 = arith.subf %29, %32 : vector<8x8xf32>
    %34 = math.exp %33 : vector<8x8xf32>
    %cst_17 = arith.constant dense<0.000000e+00> : vector<8xf32>
    %35 = vector.multi_reduction <add>, %34, %cst_17 [1] : vector<8x8xf32> to vector<8xf32>
    %36 = vector.shape_cast %35 : vector<8xf32> to vector<8x1xf32>
    %37 = tpu.reciprocal %36 {approx = true} : vector<8x1xf32> -> vector<8x1xf32>
    %38 = vector.broadcast %37 : vector<8x1xf32> to vector<8x8xf32>
    %39 = arith.mulf %34, %38 : vector<8x8xf32>
    %40 = arith.truncf %39 : vector<8x8xf32> to vector<8x8xbf16>
    %41 = vector.extract_strided_slice %5 {offsets = [0, 8], sizes = [8, 8], strides = [1, 1]} : vector<8x32xbf16> to vector<8x8xbf16>
    %cst_18 = arith.constant dense<0.000000e+00> : vector<8x8xf32>
    %42 = tpu.matmul %40, %41, %cst_18 {dimension_numbers = #tpu.dot_dimension_numbers<[1], [0], [0], [1], [0, 0, 1, 1], [], []>} : vector<8x8xbf16>, vector<8x8xbf16>, vector<8x8xf32> -> vector<8x8xf32>
    %43 = arith.truncf %42 : vector<8x8xf32> to vector<8x8xbf16>
    %c8 = arith.constant 8 : index
    %c0_19 = arith.constant 0 : index
    %44 = vector.load %arg6[%c8, %c0_19] : memref<32x32xbf16, #tpu.memory_space<vmem>>, vector<8x32xbf16>
    %cst_20 = arith.constant dense<0.000000e+00> : vector<8x32xf32>
    %45 = tpu.matmul %43, %44, %cst_20 {dimension_numbers = #tpu.dot_dimension_numbers<[1], [0], [0], [1], [0, 0, 1, 1], [], []>} : vector<8x8xbf16>, vector<8x32xbf16>, vector<8x32xf32> -> vector<8x32xf32>
    %46 = arith.addf %26, %45 : vector<8x32xf32>
    %47 = vector.extract_strided_slice %1 {offsets = [0, 16], sizes = [8, 8], strides = [1, 1]} : vector<8x32xbf16> to vector<8x8xbf16>
    %48 = vector.extract_strided_slice %3 {offsets = [0, 16], sizes = [8, 8], strides = [1, 1]} : vector<8x32xbf16> to vector<8x8xbf16>
    %cst_21 = arith.constant dense<0.000000e+00> : vector<8x8xf32>
    %49 = tpu.matmul %47, %48, %cst_21 {dimension_numbers = #tpu.dot_dimension_numbers<[1], [1], [0], [0], [0, 0, 1, 0], [], []>} : vector<8x8xbf16>, vector<8x8xbf16>, vector<8x8xf32> -> vector<8x8xf32>
    %cst_22 = arith.constant dense<0xFF800000> : vector<8xf32>
    %50 = vector.multi_reduction <maximumf>, %49, %cst_22 [1] : vector<8x8xf32> to vector<8xf32>
    %51 = vector.shape_cast %50 : vector<8xf32> to vector<8x1xf32>
    %52 = vector.broadcast %51 : vector<8x1xf32> to vector<8x8xf32>
    %53 = arith.subf %49, %52 : vector<8x8xf32>
    %54 = math.exp %53 : vector<8x8xf32>
    %cst_23 = arith.constant dense<0.000000e+00> : vector<8xf32>
    %55 = vector.multi_reduction <add>, %54, %cst_23 [1] : vector<8x8xf32> to vector<8xf32>
    %56 = vector.shape_cast %55 : vector<8xf32> to vector<8x1xf32>
    %57 = tpu.reciprocal %56 {approx = true} : vector<8x1xf32> -> vector<8x1xf32>
    %58 = vector.broadcast %57 : vector<8x1xf32> to vector<8x8xf32>
    %59 = arith.mulf %54, %58 : vector<8x8xf32>
    %60 = arith.truncf %59 : vector<8x8xf32> to vector<8x8xbf16>
    %61 = vector.extract_strided_slice %5 {offsets = [0, 16], sizes = [8, 8], strides = [1, 1]} : vector<8x32xbf16> to vector<8x8xbf16>
    %cst_24 = arith.constant dense<0.000000e+00> : vector<8x8xf32>
    %62 = tpu.matmul %60, %61, %cst_24 {dimension_numbers = #tpu.dot_dimension_numbers<[1], [0], [0], [1], [0, 0, 1, 1], [], []>} : vector<8x8xbf16>, vector<8x8xbf16>, vector<8x8xf32> -> vector<8x8xf32>
    %63 = arith.truncf %62 : vector<8x8xf32> to vector<8x8xbf16>
    %c16 = arith.constant 16 : index
    %c0_25 = arith.constant 0 : index
    %64 = vector.load %arg6[%c16, %c0_25] : memref<32x32xbf16, #tpu.memory_space<vmem>>, vector<8x32xbf16>
    %cst_26 = arith.constant dense<0.000000e+00> : vector<8x32xf32>
    %65 = tpu.matmul %63, %64, %cst_26 {dimension_numbers = #tpu.dot_dimension_numbers<[1], [0], [0], [1], [0, 0, 1, 1], [], []>} : vector<8x8xbf16>, vector<8x32xbf16>, vector<8x32xf32> -> vector<8x32xf32>
    %66 = arith.addf %46, %65 : vector<8x32xf32>
    %67 = vector.extract_strided_slice %1 {offsets = [0, 24], sizes = [8, 8], strides = [1, 1]} : vector<8x32xbf16> to vector<8x8xbf16>
    %68 = vector.extract_strided_slice %3 {offsets = [0, 24], sizes = [8, 8], strides = [1, 1]} : vector<8x32xbf16> to vector<8x8xbf16>
    %cst_27 = arith.constant dense<0.000000e+00> : vector<8x8xf32>
    %69 = tpu.matmul %67, %68, %cst_27 {dimension_numbers = #tpu.dot_dimension_numbers<[1], [1], [0], [0], [0, 0, 1, 0], [], []>} : vector<8x8xbf16>, vector<8x8xbf16>, vector<8x8xf32> -> vector<8x8xf32>
    %cst_28 = arith.constant dense<0xFF800000> : vector<8xf32>
    %70 = vector.multi_reduction <maximumf>, %69, %cst_28 [1] : vector<8x8xf32> to vector<8xf32>
    %71 = vector.shape_cast %70 : vector<8xf32> to vector<8x1xf32>
    %72 = vector.broadcast %71 : vector<8x1xf32> to vector<8x8xf32>
    %73 = arith.subf %69, %72 : vector<8x8xf32>
    %74 = math.exp %73 : vector<8x8xf32>
    %cst_29 = arith.constant dense<0.000000e+00> : vector<8xf32>
    %75 = vector.multi_reduction <add>, %74, %cst_29 [1] : vector<8x8xf32> to vector<8xf32>
    %76 = vector.shape_cast %75 : vector<8xf32> to vector<8x1xf32>
    %77 = tpu.reciprocal %76 {approx = true} : vector<8x1xf32> -> vector<8x1xf32>
    %78 = vector.broadcast %77 : vector<8x1xf32> to vector<8x8xf32>
    %79 = arith.mulf %74, %78 : vector<8x8xf32>
    %80 = arith.truncf %79 : vector<8x8xf32> to vector<8x8xbf16>
    %81 = vector.extract_strided_slice %5 {offsets = [0, 24], sizes = [8, 8], strides = [1, 1]} : vector<8x32xbf16> to vector<8x8xbf16>
    %cst_30 = arith.constant dense<0.000000e+00> : vector<8x8xf32>
    %82 = tpu.matmul %80, %81, %cst_30 {dimension_numbers = #tpu.dot_dimension_numbers<[1], [0], [0], [1], [0, 0, 1, 1], [], []>} : vector<8x8xbf16>, vector<8x8xbf16>, vector<8x8xf32> -> vector<8x8xf32>
    %83 = arith.truncf %82 : vector<8x8xf32> to vector<8x8xbf16>
    %c24 = arith.constant 24 : index
    %c0_31 = arith.constant 0 : index
    %84 = vector.load %arg6[%c24, %c0_31] : memref<32x32xbf16, #tpu.memory_space<vmem>>, vector<8x32xbf16>
    %cst_32 = arith.constant dense<0.000000e+00> : vector<8x32xf32>
    %85 = tpu.matmul %83, %84, %cst_32 {dimension_numbers = #tpu.dot_dimension_numbers<[1], [0], [0], [1], [0, 0, 1, 1], [], []>} : vector<8x8xbf16>, vector<8x32xbf16>, vector<8x32xf32> -> vector<8x32xf32>
    %86 = arith.addf %66, %85 : vector<8x32xf32>
    %c0_33 = arith.constant 0 : index
    %c0_34 = arith.constant 0 : index
    %87 = vector.load %arg7[%c0_33, %c0_34] : memref<1x32xf32, #tpu.memory_space<vmem>>, vector<1x32xf32>
    %88 = vector.broadcast %87 : vector<1x32xf32> to vector<8x32xf32>
    %89 = arith.addf %86, %88 : vector<8x32xf32>
    %c0_35 = arith.constant 0 : index
    %c0_36 = arith.constant 0 : index
    %c0_37 = arith.constant 0 : index
    %90 = vector.load %arg2[%c0_35, %c0_36, %c0_37] : memref<1x8x32xf32, #tpu.memory_space<vmem>>, vector<1x8x32xf32>
    %91 = vector.shape_cast %90 : vector<1x8x32xf32> to vector<8x32xf32>
    %92 = arith.addf %91, %89 : vector<8x32xf32>
    %c0_38 = arith.constant 0 : index
    %c0_39 = arith.constant 0 : index
    %93 = vector.load %arg12[%c0_38, %c0_39] : memref<1x32xf32, #tpu.memory_space<vmem>>, vector<1x32xf32>
    %c0_40 = arith.constant 0 : index
    %c0_41 = arith.constant 0 : index
    %94 = vector.load %arg13[%c0_40, %c0_41] : memref<1x32xf32, #tpu.memory_space<vmem>>, vector<1x32xf32>
    %cst_42 = arith.constant dense<0.000000e+00> : vector<8xf32>
    %95 = vector.multi_reduction <add>, %92, %cst_42 [1] : vector<8x32xf32> to vector<8xf32>
    %96 = vector.shape_cast %95 : vector<8xf32> to vector<8x1xf32>
    %cst_43 = arith.constant 3.200000e+01 : f32
    %97 = vector.broadcast %cst_43 : f32 to vector<8x1xf32>
    %98 = arith.divf %96, %97 : vector<8x1xf32>
    %99 = vector.broadcast %98 : vector<8x1xf32> to vector<8x32xf32>
    %100 = arith.subf %92, %99 : vector<8x32xf32>
    %101 = arith.mulf %100, %100 : vector<8x32xf32>
    %cst_44 = arith.constant dense<0.000000e+00> : vector<8xf32>
    %102 = vector.multi_reduction <add>, %101, %cst_44 [1] : vector<8x32xf32> to vector<8xf32>
    %103 = vector.shape_cast %102 : vector<8xf32> to vector<8x1xf32>
    %cst_45 = arith.constant 3.200000e+01 : f32
    %104 = vector.broadcast %cst_45 : f32 to vector<8x1xf32>
    %105 = arith.divf %103, %104 : vector<8x1xf32>
    %106 = vector.broadcast %98 : vector<8x1xf32> to vector<8x32xf32>
    %107 = arith.subf %92, %106 : vector<8x32xf32>
    %cst_46 = arith.constant 9.99999974E-6 : f32
    %108 = vector.broadcast %cst_46 : f32 to vector<8x1xf32>
    %109 = arith.addf %105, %108 : vector<8x1xf32>
    %110 = math.rsqrt %109 : vector<8x1xf32>
    %111 = vector.broadcast %110 : vector<8x1xf32> to vector<8x32xf32>
    %112 = arith.mulf %107, %111 : vector<8x32xf32>
    %113 = vector.broadcast %93 : vector<1x32xf32> to vector<8x32xf32>
    %114 = arith.mulf %112, %113 : vector<8x32xf32>
    %115 = vector.broadcast %94 : vector<1x32xf32> to vector<8x32xf32>
    %116 = arith.addf %114, %115 : vector<8x32xf32>
    %117 = arith.truncf %116 : vector<8x32xf32> to vector<8x32xbf16>
    %c0_47 = arith.constant 0 : index
    %c0_48 = arith.constant 0 : index
    %118 = vector.load %arg8[%c0_47, %c0_48] : memref<32x64xbf16, #tpu.memory_space<vmem>>, vector<32x64xbf16>
    %cst_49 = arith.constant dense<0.000000e+00> : vector<8x64xf32>
    %119 = tpu.matmul %117, %118, %cst_49 {dimension_numbers = #tpu.dot_dimension_numbers<[1], [0], [0], [1], [0, 0, 1, 1], [], []>} : vector<8x32xbf16>, vector<32x64xbf16>, vector<8x64xf32> -> vector<8x64xf32>
    %c0_50 = arith.constant 0 : index
    %c0_51 = arith.constant 0 : index
    %120 = vector.load %arg9[%c0_50, %c0_51] : memref<1x64xf32, #tpu.memory_space<vmem>>, vector<1x64xf32>
    %121 = vector.broadcast %120 : vector<1x64xf32> to vector<8x64xf32>
    %122 = arith.addf %119, %121 : vector<8x64xf32>
    %cst_52 = arith.constant 0.000000e+00 : f32
    %123 = vector.broadcast %cst_52 : f32 to vector<8x64xf32>
    %124 = arith.maximumf %122, %123 : vector<8x64xf32>
    %125 = arith.truncf %124 : vector<8x64xf32> to vector<8x64xbf16>
    %c0_53 = arith.constant 0 : index
    %c0_54 = arith.constant 0 : index
    %126 = vector.load %arg10[%c0_53, %c0_54] : memref<64x32xbf16, #tpu.memory_space<vmem>>, vector<64x32xbf16>
    %cst_55 = arith.constant dense<0.000000e+00> : vector<8x32xf32>
    %127 = tpu.matmul %125, %126, %cst_55 {dimension_numbers = #tpu.dot_dimension_numbers<[1], [0], [0], [1], [0, 0, 1, 1], [], []>} : vector<8x64xbf16>, vector<64x32xbf16>, vector<8x32xf32> -> vector<8x32xf32>
    %c0_56 = arith.constant 0 : index
    %c0_57 = arith.constant 0 : index
    %128 = vector.load %arg11[%c0_56, %c0_57] : memref<1x32xf32, #tpu.memory_space<vmem>>, vector<1x32xf32>
    %129 = vector.broadcast %128 : vector<1x32xf32> to vector<8x32xf32>
    %130 = arith.addf %127, %129 : vector<8x32xf32>
    %131 = arith.addf %116, %130 : vector<8x32xf32>
    %c0_58 = arith.constant 0 : index
    %c0_59 = arith.constant 0 : index
    %132 = vector.load %arg14[%c0_58, %c0_59] : memref<1x32xf32, #tpu.memory_space<vmem>>, vector<1x32xf32>
    %c0_60 = arith.constant 0 : index
    %c0_61 = arith.constant 0 : index
    %133 = vector.load %arg15[%c0_60, %c0_61] : memref<1x32xf32, #tpu.memory_space<vmem>>, vector<1x32xf32>
    %cst_62 = arith.constant dense<0.000000e+00> : vector<8xf32>
    %134 = vector.multi_reduction <add>, %131, %cst_62 [1] : vector<8x32xf32> to vector<8xf32>
    %135 = vector.shape_cast %134 : vector<8xf32> to vector<8x1xf32>
    %cst_63 = arith.constant 3.200000e+01 : f32
    %136 = vector.broadcast %cst_63 : f32 to vector<8x1xf32>
    %137 = arith.divf %135, %136 : vector<8x1xf32>
    %138 = vector.broadcast %137 : vector<8x1xf32> to vector<8x32xf32>
    %139 = arith.subf %131, %138 : vector<8x32xf32>
    %140 = arith.mulf %139, %139 : vector<8x32xf32>
    %cst_64 = arith.constant dense<0.000000e+00> : vector<8xf32>
    %141 = vector.multi_reduction <add>, %140, %cst_64 [1] : vector<8x32xf32> to vector<8xf32>
    %142 = vector.shape_cast %141 : vector<8xf32> to vector<8x1xf32>
    %cst_65 = arith.constant 3.200000e+01 : f32
    %143 = vector.broadcast %cst_65 : f32 to vector<8x1xf32>
    %144 = arith.divf %142, %143 : vector<8x1xf32>
    %145 = vector.broadcast %137 : vector<8x1xf32> to vector<8x32xf32>
    %146 = arith.subf %131, %145 : vector<8x32xf32>
    %cst_66 = arith.constant 9.99999974E-6 : f32
    %147 = vector.broadcast %cst_66 : f32 to vector<8x1xf32>
    %148 = arith.addf %144, %147 : vector<8x1xf32>
    %149 = math.rsqrt %148 : vector<8x1xf32>
    %150 = vector.broadcast %149 : vector<8x1xf32> to vector<8x32xf32>
    %151 = arith.mulf %146, %150 : vector<8x32xf32>
    %152 = vector.broadcast %132 : vector<1x32xf32> to vector<8x32xf32>
    %153 = arith.mulf %151, %152 : vector<8x32xf32>
    %154 = vector.broadcast %133 : vector<1x32xf32> to vector<8x32xf32>
    %155 = arith.addf %153, %154 : vector<8x32xf32>
    %c0_67 = arith.constant 0 : index
    %c0_68 = arith.constant 0 : index
    %c0_69 = arith.constant 0 : index
    %156 = vector.load %arg16[%c0_67, %c0_68, %c0_69] : memref<1x8x32xf32, #tpu.memory_space<vmem>>, vector<1x8x32xf32>
    %157 = vector.shape_cast %156 : vector<1x8x32xf32> to vector<8x32xf32>
    %158 = vector.shape_cast %155 : vector<8x32xf32> to vector<1x8x32xf32>
    tpu.vector_store %arg16[%c0_67, %c0_68, %c0_69], %158 {strides = array<i32>} : memref<1x8x32xf32, #tpu.memory_space<vmem>>, vector<1x8x32xf32>,
    return
  }
  func.func @transform_0(%arg0: i32, %arg1: i32) -> (i32, i32, i32) {
    %c0_i32 = arith.constant 0 : i32
    %c0_i32_0 = arith.constant 0 : i32
    return %arg0, %arg1, %c0_i32 : i32, i32, i32
  }
  func.func @transform_1(%arg0: i32, %arg1: i32) -> (i32, i32, i32) {
    %c0_i32 = arith.constant 0 : i32
    %c0_i32_0 = arith.constant 0 : i32
    return %arg0, %arg1, %c0_i32 : i32, i32, i32
  }
  func.func @transform_2(%arg0: i32, %arg1: i32) -> (i32, i32, i32) {
    %c0_i32 = arith.constant 0 : i32
    %c0_i32_0 = arith.constant 0 : i32
    %c0_i32_1 = arith.constant 0 : i32
    return %arg0, %c0_i32, %c0_i32_0 : i32, i32, i32
  }
  func.func @transform_3(%arg0: i32, %arg1: i32) -> (i32, i32, i32) {
    %c0_i32 = arith.constant 0 : i32
    %c0_i32_0 = arith.constant 0 : i32
    %c0_i32_1 = arith.constant 0 : i32
    return %arg0, %c0_i32, %c0_i32_0 : i32, i32, i32
  }
  func.func @transform_4(%arg0: i32, %arg1: i32) -> (i32, i32) {
    %c0_i32 = arith.constant 0 : i32
    %c0_i32_0 = arith.constant 0 : i32
    %c0_i32_1 = arith.constant 0 : i32
    return %c0_i32, %c0_i32_0 : i32, i32
  }
  func.func @transform_5(%arg0: i32, %arg1: i32) -> (i32, i32) {
    %c0_i32 = arith.constant 0 : i32
    %c0_i32_0 = arith.constant 0 : i32
    %c0_i32_1 = arith.constant 0 : i32
    return %c0_i32, %c0_i32_0 : i32, i32
  }
  func.func @transform_6(%arg0: i32, %arg1: i32) -> (i32, i32) {
    %c0_i32 = arith.constant 0 : i32
    %c0_i32_0 = arith.constant 0 : i32
    %c0_i32_1 = arith.constant 0 : i32
    return %c0_i32, %c0_i32_0 : i32, i32
  }
  func.func @transform_7(%arg0: i32, %arg1: i32) -> (i32, i32) {
    %c0_i32 = arith.constant 0 : i32
    %c0_i32_0 = arith.constant 0 : i32
    %c0_i32_1 = arith.constant 0 : i32
    return %c0_i32, %c0_i32_0 : i32, i32
  }
  func.func @transform_8(%arg0: i32, %arg1: i32) -> (i32, i32) {
    %c0_i32 = arith.constant 0 : i32
    %c0_i32_0 = arith.constant 0 : i32
    %c0_i32_1 = arith.constant 0 : i32
    return %c0_i32, %c0_i32_0 : i32, i32
  }
  func.func @transform_9(%arg0: i32, %arg1: i32) -> (i32, i32) {
    %c0_i32 = arith.constant 0 : i32
    %c0_i32_0 = arith.constant 0 : i32
    %c0_i32_1 = arith.constant 0 : i32
    return %c0_i32, %c0_i32_0 : i32, i32
  }
  func.func @transform_10(%arg0: i32, %arg1: i32) -> (i32, i32) {
    %c0_i32 = arith.constant 0 : i32
    %c0_i32_0 = arith.constant 0 : i32
    %c0_i32_1 = arith.constant 0 : i32
    return %c0_i32, %c0_i32_0 : i32, i32
  }
  func.func @transform_11(%arg0: i32, %arg1: i32) -> (i32, i32) {
    %c0_i32 = arith.constant 0 : i32
    %c0_i32_0 = arith.constant 0 : i32
    %c0_i32_1 = arith.constant 0 : i32
    return %c0_i32, %c0_i32_0 : i32, i32
  }
  func.func @transform_12(%arg0: i32, %arg1: i32) -> (i32, i32) {
    %c0_i32 = arith.constant 0 : i32
    %c0_i32_0 = arith.constant 0 : i32
    %c0_i32_1 = arith.constant 0 : i32
    return %c0_i32, %c0_i32_0 : i32, i32
  }
  func.func @transform_13(%arg0: i32, %arg1: i32) -> (i32, i32) {
    %c0_i32 = arith.constant 0 : i32
    %c0_i32_0 = arith.constant 0 : i32
    %c0_i32_1 = arith.constant 0 : i32
    return %c0_i32, %c0_i32_0 : i32, i32
  }
  func.func @transform_14(%arg0: i32, %arg1: i32) -> (i32, i32, i32) {
    %c0_i32 = arith.constant 0 : i32
    %c0_i32_0 = arith.constant 0 : i32
    return %arg0, %arg1, %c0_i32 : i32, i32, i32
  }
}

module attributes {stable_mosaic.version = 11 : i64} {
  func.func @_slot_kernel(%arg0: i32, %arg1: memref<1x8x32xbf16, #tpu.memory_space<vmem>>, %arg2: memref<1x8x32xbf16, #tpu.memory_space<vmem>>, %arg3: memref<4x32xbf16, #tpu.memory_space<vmem>>, %arg4: memref<1x4x32xf32, #tpu.memory_space<vmem>>, %arg5: memref<1x4x8xf32, #tpu.memory_space<vmem>>, %arg6: memref<1x4x8xf32, #tpu.memory_space<vmem>>) attributes {dimension_semantics = [#tpu.dimension_semantics<parallel>], iteration_bounds = array<i64: 2>, scalar_prefetch = 0 : i64, scratch_operands = 0 : i64, tpu.core_type = #tpu.core_type<tc>, window_params = [{transform_indices = @transform_0, window_bounds = array<i64: 1, 8, 32>}, {transform_indices = @transform_1, window_bounds = array<i64: 1, 8, 32>}, {pipeline_mode = #tpu.pipeline_mode<synchronous>, transform_indices = @transform_2, window_bounds = array<i64: 4, 32>}, {transform_indices = @transform_3, window_bounds = array<i64: 1, 4, 32>}, {transform_indices = @transform_4, window_bounds = array<i64: 1, 4, 8>}, {transform_indices = @transform_5, window_bounds = array<i64: 1, 4, 8>}]} {
    %c0 = arith.constant 0 : index
    %c0_0 = arith.constant 0 : index
    %c0_1 = arith.constant 0 : index
    %0 = vector.load %arg1[%c0, %c0_0, %c0_1] : memref<1x8x32xbf16, #tpu.memory_space<vmem>>, vector<1x8x32xbf16>
    %1 = vector.shape_cast %0 : vector<1x8x32xbf16> to vector<8x32xbf16>
    %c0_2 = arith.constant 0 : index
    %c0_3 = arith.constant 0 : index
    %c0_4 = arith.constant 0 : index
    %2 = vector.load %arg2[%c0_2, %c0_3, %c0_4] : memref<1x8x32xbf16, #tpu.memory_space<vmem>>, vector<1x8x32xbf16>
    %3 = vector.shape_cast %2 : vector<1x8x32xbf16> to vector<8x32xbf16>
    %c0_5 = arith.constant 0 : index
    %c0_6 = arith.constant 0 : index
    %4 = vector.load %arg3[%c0_5, %c0_6] : memref<4x32xbf16, #tpu.memory_space<vmem>>, vector<4x32xbf16>
    %cst = arith.constant dense<0.000000e+00> : vector<4x8xf32>
    %5 = tpu.matmul %4, %1, %cst {dimension_numbers = #tpu.dot_dimension_numbers<[1], [1], [0], [0], [0, 0, 1, 0], [], []>} : vector<4x32xbf16>, vector<8x32xbf16>, vector<4x8xf32> -> vector<4x8xf32>
    %cst_7 = arith.constant 0.176776692 : f32
    %6 = vector.broadcast %cst_7 : f32 to vector<4x8xf32>
    %7 = arith.mulf %5, %6 : vector<4x8xf32>
    %cst_8 = arith.constant dense<0xFF800000> : vector<4xf32>
    %8 = vector.multi_reduction <maximumf>, %7, %cst_8 [1] : vector<4x8xf32> to vector<4xf32>
    %9 = vector.shape_cast %8 : vector<4xf32> to vector<4x1xf32>
    %10 = vector.broadcast %9 : vector<4x1xf32> to vector<4x8xf32>
    %11 = arith.subf %7, %10 : vector<4x8xf32>
    %12 = math.exp %11 : vector<4x8xf32>
    %cst_9 = arith.constant dense<0.000000e+00> : vector<4xf32>
    %13 = vector.multi_reduction <add>, %12, %cst_9 [1] : vector<4x8xf32> to vector<4xf32>
    %14 = vector.shape_cast %13 : vector<4xf32> to vector<4x1xf32>
    %15 = vector.broadcast %14 : vector<4x1xf32> to vector<4x8xf32>
    %16 = arith.divf %12, %15 : vector<4x8xf32>
    %cst_10 = arith.constant dense<0xFF800000> : vector<8xf32>
    %17 = vector.multi_reduction <maximumf>, %7, %cst_10 [0] : vector<4x8xf32> to vector<8xf32>
    %18 = vector.shape_cast %17 : vector<8xf32> to vector<1x8xf32>
    %19 = vector.broadcast %18 : vector<1x8xf32> to vector<4x8xf32>
    %20 = arith.subf %7, %19 : vector<4x8xf32>
    %21 = math.exp %20 : vector<4x8xf32>
    %cst_11 = arith.constant dense<0.000000e+00> : vector<8xf32>
    %22 = vector.multi_reduction <add>, %21, %cst_11 [0] : vector<4x8xf32> to vector<8xf32>
    %23 = vector.shape_cast %22 : vector<8xf32> to vector<1x8xf32>
    %24 = vector.broadcast %23 : vector<1x8xf32> to vector<4x8xf32>
    %25 = arith.divf %21, %24 : vector<4x8xf32>
    %c0_12 = arith.constant 0 : index
    %c0_13 = arith.constant 0 : index
    %c0_14 = arith.constant 0 : index
    %26 = vector.load %arg6[%c0_12, %c0_13, %c0_14] : memref<1x4x8xf32, #tpu.memory_space<vmem>>, vector<1x4x8xf32>
    %27 = vector.shape_cast %26 : vector<1x4x8xf32> to vector<4x8xf32>
    %28 = vector.shape_cast %16 : vector<4x8xf32> to vector<1x4x8xf32>
    tpu.vector_store %arg6[%c0_12, %c0_13, %c0_14], %28 {strides = array<i32>} : memref<1x4x8xf32, #tpu.memory_space<vmem>>, vector<1x4x8xf32>,
    %c0_15 = arith.constant 0 : index
    %c0_16 = arith.constant 0 : index
    %c0_17 = arith.constant 0 : index
    %29 = vector.load %arg5[%c0_15, %c0_16, %c0_17] : memref<1x4x8xf32, #tpu.memory_space<vmem>>, vector<1x4x8xf32>
    %30 = vector.shape_cast %29 : vector<1x4x8xf32> to vector<4x8xf32>
    %31 = vector.shape_cast %25 : vector<4x8xf32> to vector<1x4x8xf32>
    tpu.vector_store %arg5[%c0_15, %c0_16, %c0_17], %31 {strides = array<i32>} : memref<1x4x8xf32, #tpu.memory_space<vmem>>, vector<1x4x8xf32>,
    %32 = arith.truncf %16 : vector<4x8xf32> to vector<4x8xbf16>
    %cst_18 = arith.constant dense<0.000000e+00> : vector<4x32xf32>
    %33 = tpu.matmul %32, %3, %cst_18 {dimension_numbers = #tpu.dot_dimension_numbers<[1], [0], [0], [1], [0, 0, 1, 1], [], []>} : vector<4x8xbf16>, vector<8x32xbf16>, vector<4x32xf32> -> vector<4x32xf32>
    %c0_19 = arith.constant 0 : index
    %c0_20 = arith.constant 0 : index
    %c0_21 = arith.constant 0 : index
    %34 = vector.load %arg4[%c0_19, %c0_20, %c0_21] : memref<1x4x32xf32, #tpu.memory_space<vmem>>, vector<1x4x32xf32>
    %35 = vector.shape_cast %34 : vector<1x4x32xf32> to vector<4x32xf32>
    %36 = vector.shape_cast %33 : vector<4x32xf32> to vector<1x4x32xf32>
    tpu.vector_store %arg4[%c0_19, %c0_20, %c0_21], %36 {strides = array<i32>} : memref<1x4x32xf32, #tpu.memory_space<vmem>>, vector<1x4x32xf32>,
    return
  }
  func.func @transform_0(%arg0: i32) -> (i32, i32, i32) {
    %c0_i32 = arith.constant 0 : i32
    %c0_i32_0 = arith.constant 0 : i32
    %c0_i32_1 = arith.constant 0 : i32
    return %arg0, %c0_i32, %c0_i32_0 : i32, i32, i32
  }
  func.func @transform_1(%arg0: i32) -> (i32, i32, i32) {
    %c0_i32 = arith.constant 0 : i32
    %c0_i32_0 = arith.constant 0 : i32
    %c0_i32_1 = arith.constant 0 : i32
    return %arg0, %c0_i32, %c0_i32_0 : i32, i32, i32
  }
  func.func @transform_2(%arg0: i32) -> (i32, i32) {
    %c0_i32 = arith.constant 0 : i32
    %c0_i32_0 = arith.constant 0 : i32
    %c0_i32_1 = arith.constant 0 : i32
    return %c0_i32, %c0_i32_0 : i32, i32
  }
  func.func @transform_3(%arg0: i32) -> (i32, i32, i32) {
    %c0_i32 = arith.constant 0 : i32
    %c0_i32_0 = arith.constant 0 : i32
    %c0_i32_1 = arith.constant 0 : i32
    return %arg0, %c0_i32, %c0_i32_0 : i32, i32, i32
  }
  func.func @transform_4(%arg0: i32) -> (i32, i32, i32) {
    %c0_i32 = arith.constant 0 : i32
    %c0_i32_0 = arith.constant 0 : i32
    %c0_i32_1 = arith.constant 0 : i32
    return %arg0, %c0_i32, %c0_i32_0 : i32, i32, i32
  }
  func.func @transform_5(%arg0: i32) -> (i32, i32, i32) {
    %c0_i32 = arith.constant 0 : i32
    %c0_i32_0 = arith.constant 0 : i32
    %c0_i32_1 = arith.constant 0 : i32
    return %arg0, %c0_i32, %c0_i32_0 : i32, i32, i32
  }
}

</mosaic_0001>

<llo_original>
// kernel: transformer_encoder.6
$region0: #{transformer_encoder.6}
  #allocation0 [shape = 'u32[]', space=smem, size = 0x4, offset = 0x4, fixed_abs, tag = 'smem constant byte address 0x4 - core index']
  #allocation1 [shape = 'u32[144,128]{1,0:T(1,128)}', space=vmem, size = 0x12000, scoped, tag = 'internal scratch']
  %s0 = inlined_call_operand.hbm [shape: f32[2,8,32], index: 0, kind: input, shape index: {}]
  %s1 = inlined_call_operand.vmem [shape: bf16[32,96], index: 1, kind: input, shape index: {}]
  %s2 = inlined_call_operand.vmem [shape: f32[1,96], index: 2, kind: input, shape index: {}]
  %s3 = inlined_call_operand.vmem [shape: bf16[2,8,32], index: 3, kind: output, shape index: {0}]
  %s4 = inlined_call_operand.vmem [shape: bf16[2,8,32], index: 4, kind: output, shape index: {1}]
  %s5 = inlined_call_operand.vmem [shape: bf16[2,8,32], index: 5, kind: output, shape index: {2}]
  %6 = xla_tuple %s3, %s4, %s5
  %s7 = sld [smem:[#allocation0]]
  $region65: #{transformer_encoder.6} parent=0
    _
  %s9 = ssub.s32 1, %s7
  %s10 = scalar_select 0, %s9, %s7
  $region1: #{transformer_encoder.6} parent=0
    #allocation2 [shape = 'u8[8192]{0}', space=vmem, size = 0x2000, scoped, tag = 'input window, operand 0']
    #allocation3 [shape = 's32[2]{0}', space=sflag, size = 0x8, scoped, tag = 'scoped memory for transformer_encoder.6']
    %11 = vsyncpa [#allocation3], 0
    %s12 = scalar_lea.sflag [#allocation3], 1
    %13 = vsyncpa %s12, 0
    loop: start=0, step=1, limit=4
    $region2: #{transformer_encoder.6} parent=1 // loop_pre_header
      _
    $region3: #{transformer_encoder.6} parent=1 // loop_header
      %s15 = sphi 0, %s19
      %p16 = scmp.ge.s32.totalorder %s15, 4
      %s22 = sphi 0, %s34
      %s23 = sphi 0, %s30
      %s24 = sphi 0, %s22
      %s25 = sphi 0, %s23
      %s26 = sphi 0, %s24
      %s27 = sphi 0, %s25
      %s39 = sphi 0, %s41
      %s42 = sphi 0, %s39
      %s43 = sphi 0, %s42
      %s59 = sphi 0, %s43
      %s63 = sphi 0, %s63
      %s65 = sphi 0, %s63
      %s66 = sphi 0, %s65
      %s80 = sphi 0, %s66
      %s84 = sphi 0, %s84
      %s86 = sphi 0, %s84
      %s87 = sphi 0, %s86
      %s101 = sphi 0, %s87
      %s109 = sphi 0, %s111
      %s112 = sphi 0, %s109
      %s113 = sphi 0, %s112
      %s129 = sphi 0, %s113
      %s137 = sphi 0, %s139
      %s140 = sphi 0, %s137
      %s141 = sphi 0, %s140
      %s157 = sphi 0, %s141
      %s165 = sphi 0, %s167
      %s168 = sphi 0, %s165
      %s169 = sphi 0, %s168
      %s185 = sphi 0, %s169
    $region4: #{transformer_encoder.6} parent=1 // loop_header_branch
      %18 = sbr.rel (%p16) target = $region8
    $region5: #{transformer_encoder.6} parent=1 // loop_body
      %s20 = ssub.s32 %s15, 1
      %s21 = ssub.s32 %s15, 2
      %s28 = sadd.s32 1, %s23
      %p29 = scmp.ge.s32.totalorder %s28, 1
      %s30 = scalar_select %p29, 0, %s28
      %s31 = sadd.s32 1, %s22
      %s32 = scalar_select %p29, %s31, %s22
      %p33 = scmp.ge.s32.totalorder %s32, 2
      %s34 = scalar_select %p33, 0, %s32
      %s35 = ssub.s32 %s22, %s34
      %s36 = ssub.s32 %s23, %s30
      %s37 = sor.u32 %s35, %s36
      %p38 = scmp.eq.s32.totalorder %s37, 0
      %s40 = sadd.s32 %s39, 1
      %s41 = scalar_select %p38, %s39, %s40
      %p44 = pneg %p38
      %p45 = scmp.eq.s32.totalorder %s15, 1
      %p46 = por %p44, %p45
      %p47 = scmp.ne.s32.totalorder %s39, %s42
      %p48 = scmp.eq.s32.totalorder %s15, 0
      %p49 = por %p47, %p48
      %p50 = scmp.ne.s32.totalorder %s39, %s42
      %p51 = scmp.eq.s32.totalorder %s20, 1
      %p52 = por %p50, %p51
      %p53 = scmp.ne.s32.totalorder %s42, %s43
      %p54 = scmp.eq.s32.totalorder %s20, 0
      %p55 = por %p53, %p54
      %p56 = scmp.ne.s32.totalorder %s42, %s43
      %p57 = scmp.eq.s32.totalorder %s21, 1
      %p58 = por %p56, %p57
      %p60 = scmp.ne.s32.totalorder %s43, %s59
      %p61 = scmp.eq.s32.totalorder %s21, 0
      %p62 = por %p60, %p61
      %s64 = sadd.s32 %s63, 1
      %p67 = scmp.eq.s32.totalorder %s15, 1
      %p68 = scmp.ne.s32.totalorder %s63, %s65
      %p69 = scmp.eq.s32.totalorder %s15, 0
      %p70 = por %p68, %p69
      %p71 = scmp.ne.s32.totalorder %s63, %s65
      %p72 = scmp.eq.s32.totalorder %s20, 1
      %p73 = por %p71, %p72
      %p74 = scmp.ne.s32.totalorder %s65, %s66
      %p75 = scmp.eq.s32.totalorder %s20, 0
      %p76 = por %p74, %p75
      %p77 = scmp.ne.s32.totalorder %s65, %s66
      %p78 = scmp.eq.s32.totalorder %s21, 1
      %p79 = por %p77, %p78
      %p81 = scmp.ne.s32.totalorder %s66, %s80
      %p82 = scmp.eq.s32.totalorder %s21, 0
      %p83 = por %p81, %p82
      %s85 = sadd.s32 %s84, 1
      %p88 = scmp.eq.s32.totalorder %s15, 1
      %p89 = scmp.ne.s32.totalorder %s84, %s86
      %p90 = scmp.eq.s32.totalorder %s15, 0
      %p91 = por %p89, %p90
      %p92 = scmp.ne.s32.totalorder %s84, %s86
      %p93 = scmp.eq.s32.totalorder %s20, 1
      %p94 = por %p92, %p93
      %p95 = scmp.ne.s32.totalorder %s86, %s87
      %p96 = scmp.eq.s32.totalorder %s20, 0
      %p97 = por %p95, %p96
      %p98 = scmp.ne.s32.totalorder %s86, %s87
      %p99 = scmp.eq.s32.totalorder %s21, 1
      %p100 = por %p98, %p99
      %p102 = scmp.ne.s32.totalorder %s87, %s101
      %p103 = scmp.eq.s32.totalorder %s21, 0
      %p104 = por %p102, %p103
      %s105 = ssub.s32 %s22, %s34
      %s106 = ssub.s32 %s23, %s30
      %s107 = sor.u32 %s105, %s106
      %p108 = scmp.eq.s32.totalorder %s107, 0
      %s110 = sadd.s32 %s109, 1
      %s111 = scalar_select %p108, %s109, %s110
      %p114 = pneg %p108
      %p115 = scmp.eq.s32.totalorder %s15, 1
      %p116 = por %p114, %p115
      %p117 = scmp.ne.s32.totalorder %s109, %s112
      %p118 = scmp.eq.s32.totalorder %s15, 0
      %p119 = por %p117, %p118
      %p120 = scmp.ne.s32.totalorder %s109, %s112
      %p121 = scmp.eq.s32.totalorder %s20, 1
      %p122 = por %p120, %p121
      %p123 = scmp.ne.s32.totalorder %s112, %s113
      %p124 = scmp.eq.s32.totalorder %s20, 0
      %p125 = por %p123, %p124
      %p126 = scmp.ne.s32.totalorder %s112, %s113
      %p127 = scmp.eq.s32.totalorder %s21, 1
      %p128 = por %p126, %p127
      %p130 = scmp.ne.s32.totalorder %s113, %s129
      %p131 = scmp.eq.s32.totalorder %s21, 0
      %p132 = por %p130, %p131
      %s133 = ssub.s32 %s22, %s34
      %s134 = ssub.s32 %s23, %s30
      %s135 = sor.u32 %s133, %s134
      %p136 = scmp.eq.s32.totalorder %s135, 0
      %s138 = sadd.s32 %s137, 1
      %s139 = scalar_select %p136, %s137, %s138
      %p142 = pneg %p136
      %p143 = scmp.eq.s32.totalorder %s15, 1
      %p144 = por %p142, %p143
      %p145 = scmp.ne.s32.totalorder %s137, %s140
      %p146 = scmp.eq.s32.totalorder %s15, 0
      %p147 = por %p145, %p146
      %p148 = scmp.ne.s32.totalorder %s137, %s140
      %p149 = scmp.eq.s32.totalorder %s20, 1
      %p150 = por %p148, %p149
      %p151 = scmp.ne.s32.totalorder %s140, %s141
      %p152 = scmp.eq.s32.totalorder %s20, 0
      %p153 = por %p151, %p152
      %p154 = scmp.ne.s32.totalorder %s140, %s141
      %p155 = scmp.eq.s32.totalorder %s21, 1
      %p156 = por %p154, %p155
      %p158 = scmp.ne.s32.totalorder %s141, %s157
      %p159 = scmp.eq.s32.totalorder %s21, 0
      %p160 = por %p158, %p159
      %s161 = ssub.s32 %s22, %s34
      %s162 = ssub.s32 %s23, %s30
      %s163 = sor.u32 %s161, %s162
      %p164 = scmp.eq.s32.totalorder %s163, 0
      %s166 = sadd.s32 %s165, 1
      %s167 = scalar_select %p164, %s165, %s166
      %p170 = pneg %p164
      %p171 = scmp.eq.s32.totalorder %s15, 1
      %p172 = por %p170, %p171
      %p173 = scmp.ne.s32.totalorder %s165, %s168
      %p174 = scmp.eq.s32.totalorder %s15, 0
      %p175 = por %p173, %p174
      %p176 = scmp.ne.s32.totalorder %s165, %s168
      %p177 = scmp.eq.s32.totalorder %s20, 1
      %p178 = por %p176, %p177
      %p179 = scmp.ne.s32.totalorder %s168, %s169
      %p180 = scmp.eq.s32.totalorder %s20, 0
      %p181 = por %p179, %p180
      %p182 = scmp.ne.s32.totalorder %s168, %s169
      %p183 = scmp.eq.s32.totalorder %s21, 1
      %p184 = por %p182, %p183
      %p186 = scmp.ne.s32.totalorder %s169, %s185
      %p187 = scmp.eq.s32.totalorder %s21, 0
      %p188 = por %p186, %p187
      %p189 = scmp.le.s32.totalorder 1, %s15
      %p190 = scmp.lt.s32.totalorder %s15, 3
      %p191 = pnand %p189, %p190
      %p192 = pneg %p191
      // Predicated region
      $region9: #{transformer_encoder.6} parent=5 // pred_check
        _
      $region10: #{transformer_encoder.6} parent=5 // pred_check_branch
        %194 = sbr.rel (%p191) target = $region12
      $region11: #{transformer_encoder.6} parent=5 // pred_region
        %s195 = ssub.s32 %s15, 1
        // Predicated region
        $region13: #{transformer_encoder.6} parent=11 // pred_check
          %p196 = pneg %p76
        $region14: #{transformer_encoder.6} parent=11 // pred_check_branch
          %198 = sbr.rel (%p196) target = $region16
        $region15: #{transformer_encoder.6} parent=11 // pred_region
          _
        $region16: #{transformer_encoder.6} parent=11 // pred_fallthru
          _
        // Predicated region
        $region17: #{transformer_encoder.6} parent=11 // pred_check
          %p199 = pneg %p97
        $region18: #{transformer_encoder.6} parent=11 // pred_check_branch
          %201 = sbr.rel (%p199) target = $region20
        $region19: #{transformer_encoder.6} parent=11 // pred_region
          _
        $region20: #{transformer_encoder.6} parent=11 // pred_fallthru
          _
      $region12: #{transformer_encoder.6} parent=5 // pred_fallthru
        _
      %p202 = scmp.lt.s32.totalorder %s15, 2
      // Predicated region
      $region21: #{transformer_encoder.6} parent=5 // pred_check
        %p203 = pneg %p202
      $region22: #{transformer_encoder.6} parent=5 // pred_check_branch
        %205 = sbr.rel (%p203) target = $region24
      $region23: #{transformer_encoder.6} parent=5 // pred_region
        // Predicated region
        $region25: #{transformer_encoder.6} parent=23 // pred_check
          %p206 = pneg %p49
        $region26: #{transformer_encoder.6} parent=23 // pred_check_branch
          %208 = sbr.rel (%p206) target = $region28
        $region27: #{transformer_encoder.6} parent=23 // pred_region
          %s209 = sand.u32 %s39, 1
          %s210 = scalar_lea.sflag [#allocation3], %s209
          %s211 = sand.u32 %s39, 1
          %s212 = smul.addr %s211, 8
          %s213 = scalar_lea.vmem [#allocation2], %s212
          %s215 = ssub.s32 128, 128
          %216 = vsyncadd %s210, %s215
          %s217 = sadd.s32 %s23, %s22
          %s218 = smul.addr %s217, 128
          %s219 = scalar_lea.hbm %s0, %s218
          %s221 = sshll.u32 %s213, 4
          %s222 = int_to_ptr.vmem [resolvable:$true] %s221
          %224 = dma.hbm_to_vmem [thread:$0]  %s219, 128, %s222, %s210
        $region28: #{transformer_encoder.6} parent=23 // pred_fallthru
          _
      $region24: #{transformer_encoder.6} parent=5 // pred_fallthru
        _
      %p225 = scmp.le.s32.totalorder 1, %s15
      %p226 = scmp.lt.s32.totalorder %s15, 3
      %p227 = pnand %p225, %p226
      %p228 = pneg %p227
      // Predicated region
      $region29: #{transformer_encoder.6} parent=5 // pred_check
        _
      $region30: #{transformer_encoder.6} parent=5 // pred_check_branch
        %230 = sbr.rel (%p227) target = $region32
      $region31: #{transformer_encoder.6} parent=5 // pred_region
        %s231 = ssub.s32 %s15, 1
        %s232 = sand.u32 %s42, 1
        %s233 = scalar_lea.sflag [#allocation3], %s232
        %s234 = sand.u32 %s42, 1
        %s235 = smul.addr %s234, 8
        %s236 = scalar_lea.vmem [#allocation2], %s235
        // Predicated region
        $region33: #{transformer_encoder.6} parent=31 // pred_check
          %p237 = pneg %p55
        $region34: #{transformer_encoder.6} parent=31 // pred_check_branch
          %239 = sbr.rel (%p237) target = $region36
        $region35: #{transformer_encoder.6} parent=31 // pred_region
          %240 = dma.done %s233, 128
        $region36: #{transformer_encoder.6} parent=31 // pred_fallthru
          _
        %s241 = sand.u32 %s42, 1
        %s242 = scalar_lea.sflag [#allocation3], %s241
        %s243 = sand.u32 %s42, 1
        %s244 = smul.addr %s243, 8
        %s245 = scalar_lea.vmem [#allocation2], %s244
        %p246 = pneg %p55
        %p247 = pneg %p52
        %p248 = pneg %p76
        %p249 = pneg %p73
        %p250 = pneg %p97
        %p251 = pneg %p94
        %p252 = pneg %p125
        %p253 = pneg %p122
        %p254 = scmp.lt.s32.totalorder %s24, 1
        %s255 = scalar_select %p254, %s24, 1
        %p256 = scmp.lt.s32.totalorder %s25, 0
        %s257 = scalar_select %p256, %s25, 0
        %s258 = sadd.s32 %s257, %s255
        %s259 = smul.addr %s258, 4
        %s260 = scalar_lea.vmem %s3, %s259
        %p261 = pneg %p153
        %p262 = pneg %p150
        %p263 = scmp.lt.s32.totalorder %s24, 1
        %s264 = scalar_select %p263, %s24, 1
        %p265 = scmp.lt.s32.totalorder %s25, 0
        %s266 = scalar_select %p265, %s25, 0
        %s267 = sadd.s32 %s266, %s264
        %s268 = smul.addr %s267, 4
        %s269 = scalar_lea.vmem %s4, %s268
        %p270 = pneg %p181
        %p271 = pneg %p178
        %p272 = scmp.lt.s32.totalorder %s24, 1
        %s273 = scalar_select %p272, %s24, 1
        %p274 = scmp.lt.s32.totalorder %s25, 0
        %s275 = scalar_select %p274, %s25, 0
        %s276 = sadd.s32 %s275, %s273
        %s277 = smul.addr %s276, 4
        %s278 = scalar_lea.vmem %s5, %s277
        %p279 = scmp.lt.s32.totalorder %s24, 1
        %s280 = scalar_select %p279, %s24, 1
        %p281 = scmp.lt.s32.totalorder %s25, 0
        %s282 = scalar_select %p281, %s25, 0
        %s283 = sadd.s32 %s282, %s280
        %s284 = smul.addr %s283, 4
        %s285 = scalar_lea.vmem %s3, %s284
        %p286 = scmp.lt.s32.totalorder %s24, 1
        %s287 = scalar_select %p286, %s24, 1
        %p288 = scmp.lt.s32.totalorder %s25, 0
        %s289 = scalar_select %p288, %s25, 0
        %s290 = sadd.s32 %s289, %s287
        %s291 = smul.addr %s290, 4
        %s292 = scalar_lea.vmem %s4, %s291
        %p293 = scmp.lt.s32.totalorder %s24, 1
        %s294 = scalar_select %p293, %s24, 1
        %p295 = scmp.lt.s32.totalorder %s25, 0
        %s296 = scalar_select %p295, %s25, 0
        %s297 = sadd.s32 %s296, %s294
        %s298 = smul.addr %s297, 4
        %s299 = scalar_lea.vmem %s5, %s298
        %v301 = vld [vmem:[%s236] sm:$0xff]
        %v302 = vpack.c.bf16 %v301, %v301
        %v303 = vld [vmem:[%s1] sm:$0xf]
        %v304 = vld [vmem:[%s1 + $0x4] sm:$0xf]
        %v305 = vld [vmem:[%s1 + $0x8] sm:$0xf]
        %v306 = vld [vmem:[%s1 + $0xc] sm:$0xf]
        %v307 = vld [vmem:[%s2] sm:$0x1]
        %v309 = vlaneseq
        %v310 = vshrl.u32 %v309, 7
        %v311 = vsub.s32 0, %v310
        %v312 = vrot.slane %v307, %v311
        %v318 = vunpack.c.l.b16 %v303
        %v319 = vunpack.c.l.b16 %v304
        %v320 = vunpack.c.l.b16 %v305
        %v321 = vunpack.c.l.b16 %v306
        %v322 = vpack.c.b16 %v319, %v318
        %v323 = vpack.c.b16 %v321, %v320
        %vm326 = vcmask 261120
        %v328 = vsel %vm326, %v302, 0
        %330 = vmatprep.subr.bf16.mxu0 0
        %331 = vmatpush1.bf16.msra.mxu0 %v322
        %332 = vmatprep.subr.bf16.mxu0 0
        %333 = vmatpush1.bf16.msra.mxu0 %v323
        %334 = vmatprep.subr.bf16.mxu0 0
        %335 = vmatpush1.bf16.msra.mxu0 0
        %336 = vmatprep.subr.bf16.mxu0 0
        %337 = vmatpush1.bf16.msra.mxu0 0
        %338 = vmatprep.subr.bf16.mxu0 0
        %339 = vmatpush1.bf16.msra.mxu0 0
        %340 = vmatprep.subr.bf16.mxu0 0
        %341 = vmatpush1.bf16.msra.mxu0 0
        %342 = vmatprep.subr.bf16.mxu0 0
        %343 = vmatpush1.bf16.msra.mxu0 0
        %344 = vmatprep.subr.bf16.mxu0 0
        %345 = vmatpush1.bf16.msra.mxu0 0
        %346 = vmatprep.subr.bf16.mxu0 0
        %347 = vmatpush1.bf16.msra.mxu0 0
        %348 = vmatprep.subr.bf16.mxu0 0
        %349 = vmatpush1.bf16.msra.mxu0 0
        %350 = vmatprep.subr.bf16.mxu0 0
        %351 = vmatpush1.bf16.msra.mxu0 0
        %352 = vmatprep.subr.bf16.mxu0 0
        %353 = vmatpush1.bf16.msra.mxu0 0
        %354 = vmatprep.subr.bf16.mxu0 0
        %355 = vmatpush1.bf16.msra.mxu0 0
        %356 = vmatprep.subr.bf16.mxu0 0
        %357 = vmatpush1.bf16.msra.mxu0 0
        %358 = vmatprep.subr.bf16.mxu0 0
        %359 = vmatpush1.bf16.msra.mxu0 0
        %360 = vmatprep.subr.bf16.mxu0 0
        %361 = vmatpush1.bf16.msra.mxu0 0
        %362 = vmatprep.mubr.bf16.mxu0 0
        %363 = vmatmul.mubr.bf16.gmra.mrb[0].mxu0 %v328
        %v364 = vpop.f32.mrb[0].mxu0
        %v365 = vadd.f32 %v312, %v364
        %v366 = vpop.f32.mrb[0].mxu0
        %v367 = vpop.f32.mrb[0].mxu0
        %v368 = vpop.f32.mrb[0].mxu0
        %369 = vdwg.mxu0
        %v370 = vpack.c.bf16 %v365, %v365
        %vm371 = vcmask 257024
        %372 = vst.msk [vmem:[%s285] sm:$0xf] %vm371, %v370
        %v374 = vunpack.c.l.b16 %v370
        %v375 = vpack.c.b16 %v374, %v374
        %376 = vrot.lane.b32.xlu0 %v375, 96
        %v377 = vpop.permute.xlu0 %376
        %379 = vst.msk [vmem:[%s292] sm:$0xf] %vm371, %v377
        %380 = vrot.lane.b32.xlu0 %v375, 64
        %v381 = vpop.permute.xlu0 %380
        %383 = vst.msk [vmem:[%s299] sm:$0xf] %vm371, %v381
        %p384 = scmp.lt.s32.totalorder %s24, 1
        %s385 = scalar_select %p384, %s24, 1
        %p386 = scmp.lt.s32.totalorder %s25, 0
        %s387 = scalar_select %p386, %s25, 0
        %s388 = sadd.s32 %s387, %s385
        %s389 = smul.addr %s388, 4
        %s390 = scalar_lea.vmem %s3, %s389
        %p391 = scmp.lt.s32.totalorder %s24, 1
        %s392 = scalar_select %p391, %s24, 1
        %p393 = scmp.lt.s32.totalorder %s25, 0
        %s394 = scalar_select %p393, %s25, 0
        %s395 = sadd.s32 %s394, %s392
        %s396 = smul.addr %s395, 4
        %s397 = scalar_lea.vmem %s4, %s396
        %p398 = scmp.lt.s32.totalorder %s24, 1
        %s399 = scalar_select %p398, %s24, 1
        %p400 = scmp.lt.s32.totalorder %s25, 0
        %s401 = scalar_select %p400, %s25, 0
        %s402 = sadd.s32 %s401, %s399
        %s403 = smul.addr %s402, 4
        %s404 = scalar_lea.vmem %s5, %s403
        // Predicated region
        $region37: #{transformer_encoder.6} parent=31 // pred_check
          %p405 = pneg %p122
        $region38: #{transformer_encoder.6} parent=31 // pred_check_branch
          %407 = sbr.rel (%p405) target = $region40
        $region39: #{transformer_encoder.6} parent=31 // pred_region
          _
        $region40: #{transformer_encoder.6} parent=31 // pred_fallthru
          _
        // Predicated region
        $region41: #{transformer_encoder.6} parent=31 // pred_check
          %p408 = pneg %p150
        $region42: #{transformer_encoder.6} parent=31 // pred_check_branch
          %410 = sbr.rel (%p408) target = $region44
        $region43: #{transformer_encoder.6} parent=31 // pred_region
          _
        $region44: #{transformer_encoder.6} parent=31 // pred_fallthru
          _
        // Predicated region
        $region45: #{transformer_encoder.6} parent=31 // pred_check
          %p411 = pneg %p178
        $region46: #{transformer_encoder.6} parent=31 // pred_check_branch
          %413 = sbr.rel (%p411) target = $region48
        $region47: #{transformer_encoder.6} parent=31 // pred_region
          _
        $region48: #{transformer_encoder.6} parent=31 // pred_fallthru
          _
      $region32: #{transformer_encoder.6} parent=5 // pred_fallthru
        _
      %p414 = scmp.le.s32.totalorder 2, %s15
      // Predicated region
      $region49: #{transformer_encoder.6} parent=5 // pred_check
        %p415 = pneg %p414
      $region50: #{transformer_encoder.6} parent=5 // pred_check_branch
        %417 = sbr.rel (%p415) target = $region52
      $region51: #{transformer_encoder.6} parent=5 // pred_region
        %s418 = ssub.s32 %s15, 2
        // Predicated region
        $region53: #{transformer_encoder.6} parent=51 // pred_check
          %p419 = pneg %p128
        $region54: #{transformer_encoder.6} parent=51 // pred_check_branch
          %421 = sbr.rel (%p419) target = $region56
        $region55: #{transformer_encoder.6} parent=51 // pred_region
          %p422 = scmp.lt.s32.totalorder %s26, 1
          %s423 = scalar_select %p422, %s26, 1
          %p424 = scmp.lt.s32.totalorder %s27, 0
          %s425 = scalar_select %p424, %s27, 0
          %s426 = sadd.s32 %s425, %s423
          %s427 = smul.addr %s426, 4
          %s428 = scalar_lea.vmem %s3, %s427
        $region56: #{transformer_encoder.6} parent=51 // pred_fallthru
          _
        // Predicated region
        $region57: #{transformer_encoder.6} parent=51 // pred_check
          %p429 = pneg %p156
        $region58: #{transformer_encoder.6} parent=51 // pred_check_branch
          %431 = sbr.rel (%p429) target = $region60
        $region59: #{transformer_encoder.6} parent=51 // pred_region
          %p432 = scmp.lt.s32.totalorder %s26, 1
          %s433 = scalar_select %p432, %s26, 1
          %p434 = scmp.lt.s32.totalorder %s27, 0
          %s435 = scalar_select %p434, %s27, 0
          %s436 = sadd.s32 %s435, %s433
          %s437 = smul.addr %s436, 4
          %s438 = scalar_lea.vmem %s4, %s437
        $region60: #{transformer_encoder.6} parent=51 // pred_fallthru
          _
        // Predicated region
        $region61: #{transformer_encoder.6} parent=51 // pred_check
          %p439 = pneg %p184
        $region62: #{transformer_encoder.6} parent=51 // pred_check_branch
          %441 = sbr.rel (%p439) target = $region64
        $region63: #{transformer_encoder.6} parent=51 // pred_region
          %p442 = scmp.lt.s32.totalorder %s26, 1
          %s443 = scalar_select %p442, %s26, 1
          %p444 = scmp.lt.s32.totalorder %s27, 0
          %s445 = scalar_select %p444, %s27, 0
          %s446 = sadd.s32 %s445, %s443
          %s447 = smul.addr %s446, 4
          %s448 = scalar_lea.vmem %s5, %s447
        $region64: #{transformer_encoder.6} parent=51 // pred_fallthru
          _
      $region52: #{transformer_encoder.6} parent=5 // pred_fallthru
        _
    $region6: #{transformer_encoder.6} parent=1 // loop_footer
      %s19 = sadd.s32 1, %s15
    $region7: #{transformer_encoder.6} parent=1 // loop_footer_branch
      %14 = sbr.rel target = $region3
    $region8: #{transformer_encoder.6} parent=1 // loop_exit
      _
    %449 = vsyncpa [#allocation3], 1
    %s450 = scalar_lea.sflag [#allocation3], 1
    %451 = vsyncpa %s450, 1

// kernel: transformer_encoder.8
$region0: #{transformer_encoder.8}
  #allocation0 [shape = 'u32[]', space=smem, size = 0x4, offset = 0x4, fixed_abs, tag = 'smem constant byte address 0x4 - core index']
  #allocation1 [shape = 'u32[144,128]{1,0:T(1,128)}', space=vmem, size = 0x12000, scoped, tag = 'internal scratch']
  %s0 = inlined_call_operand.vmem [shape: f32[2,8,32], index: 0, kind: input, shape index: {}]
  %s1 = inlined_call_operand.vmem [shape: bf16[32,96], index: 1, kind: input, shape index: {}]
  %s2 = inlined_call_operand.vmem [shape: f32[1,96], index: 2, kind: input, shape index: {}]
  %s3 = inlined_call_operand.vmem [shape: bf16[2,8,32], index: 3, kind: output, shape index: {0}]
  %s4 = inlined_call_operand.vmem [shape: bf16[2,8,32], index: 4, kind: output, shape index: {1}]
  %s5 = inlined_call_operand.vmem [shape: bf16[2,8,32], index: 5, kind: output, shape index: {2}]
  %6 = xla_tuple %s3, %s4, %s5
  %s7 = sld [smem:[#allocation0]]
  $region61: #{transformer_encoder.8} parent=0
    _
  %s9 = ssub.s32 1, %s7
  %s10 = scalar_select 0, %s9, %s7
  loop: start=0, step=1, limit=4
  $region2: #{transformer_encoder.8} parent=0 // loop_pre_header
    _
  $region3: #{transformer_encoder.8} parent=0 // loop_header
    %s12 = sphi 0, %s16
    %p13 = scmp.ge.s32.totalorder %s12, 4
    %s19 = sphi 0, %s31
    %s20 = sphi 0, %s27
    %s21 = sphi 0, %s19
    %s22 = sphi 0, %s20
    %s23 = sphi 0, %s21
    %s24 = sphi 0, %s22
    %s36 = sphi 0, %s38
    %s39 = sphi 0, %s36
    %s40 = sphi 0, %s39
    %s56 = sphi 0, %s40
    %s60 = sphi 0, %s60
    %s62 = sphi 0, %s60
    %s63 = sphi 0, %s62
    %s77 = sphi 0, %s63
    %s81 = sphi 0, %s81
    %s83 = sphi 0, %s81
    %s84 = sphi 0, %s83
    %s98 = sphi 0, %s84
    %s106 = sphi 0, %s108
    %s109 = sphi 0, %s106
    %s110 = sphi 0, %s109
    %s126 = sphi 0, %s110
    %s134 = sphi 0, %s136
    %s137 = sphi 0, %s134
    %s138 = sphi 0, %s137
    %s154 = sphi 0, %s138
    %s162 = sphi 0, %s164
    %s165 = sphi 0, %s162
    %s166 = sphi 0, %s165
    %s182 = sphi 0, %s166
  $region4: #{transformer_encoder.8} parent=0 // loop_header_branch
    %15 = sbr.rel (%p13) target = $region8
  $region5: #{transformer_encoder.8} parent=0 // loop_body
    %s17 = ssub.s32 %s12, 1
    %s18 = ssub.s32 %s12, 2
    %s25 = sadd.s32 1, %s20
    %p26 = scmp.ge.s32.totalorder %s25, 1
    %s27 = scalar_select %p26, 0, %s25
    %s28 = sadd.s32 1, %s19
    %s29 = scalar_select %p26, %s28, %s19
    %p30 = scmp.ge.s32.totalorder %s29, 2
    %s31 = scalar_select %p30, 0, %s29
    %s32 = ssub.s32 %s19, %s31
    %s33 = ssub.s32 %s20, %s27
    %s34 = sor.u32 %s32, %s33
    %p35 = scmp.eq.s32.totalorder %s34, 0
    %s37 = sadd.s32 %s36, 1
    %s38 = scalar_select %p35, %s36, %s37
    %p41 = pneg %p35
    %p42 = scmp.eq.s32.totalorder %s12, 1
    %p43 = por %p41, %p42
    %p44 = scmp.ne.s32.totalorder %s36, %s39
    %p45 = scmp.eq.s32.totalorder %s12, 0
    %p46 = por %p44, %p45
    %p47 = scmp.ne.s32.totalorder %s36, %s39
    %p48 = scmp.eq.s32.totalorder %s17, 1
    %p49 = por %p47, %p48
    %p50 = scmp.ne.s32.totalorder %s39, %s40
    %p51 = scmp.eq.s32.totalorder %s17, 0
    %p52 = por %p50, %p51
    %p53 = scmp.ne.s32.totalorder %s39, %s40
    %p54 = scmp.eq.s32.totalorder %s18, 1
    %p55 = por %p53, %p54
    %p57 = scmp.ne.s32.totalorder %s40, %s56
    %p58 = scmp.eq.s32.totalorder %s18, 0
    %p59 = por %p57, %p58
    %s61 = sadd.s32 %s60, 1
    %p64 = scmp.eq.s32.totalorder %s12, 1
    %p65 = scmp.ne.s32.totalorder %s60, %s62
    %p66 = scmp.eq.s32.totalorder %s12, 0
    %p67 = por %p65, %p66
    %p68 = scmp.ne.s32.totalorder %s60, %s62
    %p69 = scmp.eq.s32.totalorder %s17, 1
    %p70 = por %p68, %p69
    %p71 = scmp.ne.s32.totalorder %s62, %s63
    %p72 = scmp.eq.s32.totalorder %s17, 0
    %p73 = por %p71, %p72
    %p74 = scmp.ne.s32.totalorder %s62, %s63
    %p75 = scmp.eq.s32.totalorder %s18, 1
    %p76 = por %p74, %p75
    %p78 = scmp.ne.s32.totalorder %s63, %s77
    %p79 = scmp.eq.s32.totalorder %s18, 0
    %p80 = por %p78, %p79
    %s82 = sadd.s32 %s81, 1
    %p85 = scmp.eq.s32.totalorder %s12, 1
    %p86 = scmp.ne.s32.totalorder %s81, %s83
    %p87 = scmp.eq.s32.totalorder %s12, 0
    %p88 = por %p86, %p87
    %p89 = scmp.ne.s32.totalorder %s81, %s83
    %p90 = scmp.eq.s32.totalorder %s17, 1
    %p91 = por %p89, %p90
    %p92 = scmp.ne.s32.totalorder %s83, %s84
    %p93 = scmp.eq.s32.totalorder %s17, 0
    %p94 = por %p92, %p93
    %p95 = scmp.ne.s32.totalorder %s83, %s84
    %p96 = scmp.eq.s32.totalorder %s18, 1
    %p97 = por %p95, %p96
    %p99 = scmp.ne.s32.totalorder %s84, %s98
    %p100 = scmp.eq.s32.totalorder %s18, 0
    %p101 = por %p99, %p100
    %s102 = ssub.s32 %s19, %s31
    %s103 = ssub.s32 %s20, %s27
    %s104 = sor.u32 %s102, %s103
    %p105 = scmp.eq.s32.totalorder %s104, 0
    %s107 = sadd.s32 %s106, 1
    %s108 = scalar_select %p105, %s106, %s107
    %p111 = pneg %p105
    %p112 = scmp.eq.s32.totalorder %s12, 1
    %p113 = por %p111, %p112
    %p114 = scmp.ne.s32.totalorder %s106, %s109
    %p115 = scmp.eq.s32.totalorder %s12, 0
    %p116 = por %p114, %p115
    %p117 = scmp.ne.s32.totalorder %s106, %s109
    %p118 = scmp.eq.s32.totalorder %s17, 1
    %p119 = por %p117, %p118
    %p120 = scmp.ne.s32.totalorder %s109, %s110
    %p121 = scmp.eq.s32.totalorder %s17, 0
    %p122 = por %p120, %p121
    %p123 = scmp.ne.s32.totalorder %s109, %s110
    %p124 = scmp.eq.s32.totalorder %s18, 1
    %p125 = por %p123, %p124
    %p127 = scmp.ne.s32.totalorder %s110, %s126
    %p128 = scmp.eq.s32.totalorder %s18, 0
    %p129 = por %p127, %p128
    %s130 = ssub.s32 %s19, %s31
    %s131 = ssub.s32 %s20, %s27
    %s132 = sor.u32 %s130, %s131
    %p133 = scmp.eq.s32.totalorder %s132, 0
    %s135 = sadd.s32 %s134, 1
    %s136 = scalar_select %p133, %s134, %s135
    %p139 = pneg %p133
    %p140 = scmp.eq.s32.totalorder %s12, 1
    %p141 = por %p139, %p140
    %p142 = scmp.ne.s32.totalorder %s134, %s137
    %p143 = scmp.eq.s32.totalorder %s12, 0
    %p144 = por %p142, %p143
    %p145 = scmp.ne.s32.totalorder %s134, %s137
    %p146 = scmp.eq.s32.totalorder %s17, 1
    %p147 = por %p145, %p146
    %p148 = scmp.ne.s32.totalorder %s137, %s138
    %p149 = scmp.eq.s32.totalorder %s17, 0
    %p150 = por %p148, %p149
    %p151 = scmp.ne.s32.totalorder %s137, %s138
    %p152 = scmp.eq.s32.totalorder %s18, 1
    %p153 = por %p151, %p152
    %p155 = scmp.ne.s32.totalorder %s138, %s154
    %p156 = scmp.eq.s32.totalorder %s18, 0
    %p157 = por %p155, %p156
    %s158 = ssub.s32 %s19, %s31
    %s159 = ssub.s32 %s20, %s27
    %s160 = sor.u32 %s158, %s159
    %p161 = scmp.eq.s32.totalorder %s160, 0
    %s163 = sadd.s32 %s162, 1
    %s164 = scalar_select %p161, %s162, %s163
    %p167 = pneg %p161
    %p168 = scmp.eq.s32.totalorder %s12, 1
    %p169 = por %p167, %p168
    %p170 = scmp.ne.s32.totalorder %s162, %s165
    %p171 = scmp.eq.s32.totalorder %s12, 0
    %p172 = por %p170, %p171
    %p173 = scmp.ne.s32.totalorder %s162, %s165
    %p174 = scmp.eq.s32.totalorder %s17, 1
    %p175 = por %p173, %p174
    %p176 = scmp.ne.s32.totalorder %s165, %s166
    %p177 = scmp.eq.s32.totalorder %s17, 0
    %p178 = por %p176, %p177
    %p179 = scmp.ne.s32.totalorder %s165, %s166
    %p180 = scmp.eq.s32.totalorder %s18, 1
    %p181 = por %p179, %p180
    %p183 = scmp.ne.s32.totalorder %s166, %s182
    %p184 = scmp.eq.s32.totalorder %s18, 0
    %p185 = por %p183, %p184
    %p186 = scmp.le.s32.totalorder 1, %s12
    %p187 = scmp.lt.s32.totalorder %s12, 3
    %p188 = pnand %p186, %p187
    %p189 = pneg %p188
    // Predicated region
    $region9: #{transformer_encoder.8} parent=5 // pred_check
      _
    $region10: #{transformer_encoder.8} parent=5 // pred_check_branch
      %191 = sbr.rel (%p188) target = $region12
    $region11: #{transformer_encoder.8} parent=5 // pred_region
      %s192 = ssub.s32 %s12, 1
      // Predicated region
      $region13: #{transformer_encoder.8} parent=11 // pred_check
        %p193 = pneg %p73
      $region14: #{transformer_encoder.8} parent=11 // pred_check_branch
        %195 = sbr.rel (%p193) target = $region16
      $region15: #{transformer_encoder.8} parent=11 // pred_region
        _
      $region16: #{transformer_encoder.8} parent=11 // pred_fallthru
        _
      // Predicated region
      $region17: #{transformer_encoder.8} parent=11 // pred_check
        %p196 = pneg %p94
      $region18: #{transformer_encoder.8} parent=11 // pred_check_branch
        %198 = sbr.rel (%p196) target = $region20
      $region19: #{transformer_encoder.8} parent=11 // pred_region
        _
      $region20: #{transformer_encoder.8} parent=11 // pred_fallthru
        _
    $region12: #{transformer_encoder.8} parent=5 // pred_fallthru
      _
    %p199 = scmp.lt.s32.totalorder %s12, 2
    // Predicated region
    $region21: #{transformer_encoder.8} parent=5 // pred_check
      %p200 = pneg %p199
    $region22: #{transformer_encoder.8} parent=5 // pred_check_branch
      %202 = sbr.rel (%p200) target = $region24
    $region23: #{transformer_encoder.8} parent=5 // pred_region
      // Predicated region
      $region25: #{transformer_encoder.8} parent=23 // pred_check
        %p203 = pneg %p46
      $region26: #{transformer_encoder.8} parent=23 // pred_check_branch
        %205 = sbr.rel (%p203) target = $region28
      $region27: #{transformer_encoder.8} parent=23 // pred_region
        %p206 = scmp.lt.s32.totalorder %s19, 1
        %s207 = scalar_select %p206, %s19, 1
        %p208 = scmp.lt.s32.totalorder %s20, 0
        %s209 = scalar_select %p208, %s20, 0
        %s210 = sadd.s32 %s209, %s207
        %s211 = smul.addr %s210, 8
        %s212 = scalar_lea.vmem %s0, %s211
      $region28: #{transformer_encoder.8} parent=23 // pred_fallthru
        _
    $region24: #{transformer_encoder.8} parent=5 // pred_fallthru
      _
    %p213 = scmp.le.s32.totalorder 1, %s12
    %p214 = scmp.lt.s32.totalorder %s12, 3
    %p215 = pnand %p213, %p214
    %p216 = pneg %p215
    // Predicated region
    $region29: #{transformer_encoder.8} parent=5 // pred_check
      _
    $region30: #{transformer_encoder.8} parent=5 // pred_check_branch
      %218 = sbr.rel (%p215) target = $region32
    $region31: #{transformer_encoder.8} parent=5 // pred_region
      %s219 = ssub.s32 %s12, 1
      %p220 = scmp.lt.s32.totalorder %s21, 1
      %s221 = scalar_select %p220, %s21, 1
      %p222 = scmp.lt.s32.totalorder %s22, 0
      %s223 = scalar_select %p222, %s22, 0
      %s224 = sadd.s32 %s223, %s221
      %s225 = smul.addr %s224, 8
      %s226 = scalar_lea.vmem %s0, %s225
      %p227 = pneg %p52
      %p228 = pneg %p49
      %p229 = pneg %p73
      %p230 = pneg %p70
      %p231 = pneg %p94
      %p232 = pneg %p91
      %p233 = pneg %p122
      %p234 = pneg %p119
      %p235 = scmp.lt.s32.totalorder %s21, 1
      %s236 = scalar_select %p235, %s21, 1
      %p237 = scmp.lt.s32.totalorder %s22, 0
      %s238 = scalar_select %p237, %s22, 0
      %s239 = sadd.s32 %s238, %s236
      %s240 = smul.addr %s239, 4
      %s241 = scalar_lea.vmem %s3, %s240
      %p242 = pneg %p150
      %p243 = pneg %p147
      %p244 = scmp.lt.s32.totalorder %s21, 1
      %s245 = scalar_select %p244, %s21, 1
      %p246 = scmp.lt.s32.totalorder %s22, 0
      %s247 = scalar_select %p246, %s22, 0
      %s248 = sadd.s32 %s247, %s245
      %s249 = smul.addr %s248, 4
      %s250 = scalar_lea.vmem %s4, %s249
      %p251 = pneg %p178
      %p252 = pneg %p175
      %p253 = scmp.lt.s32.totalorder %s21, 1
      %s254 = scalar_select %p253, %s21, 1
      %p255 = scmp.lt.s32.totalorder %s22, 0
      %s256 = scalar_select %p255, %s22, 0
      %s257 = sadd.s32 %s256, %s254
      %s258 = smul.addr %s257, 4
      %s259 = scalar_lea.vmem %s5, %s258
      %p260 = scmp.lt.s32.totalorder %s21, 1
      %s261 = scalar_select %p260, %s21, 1
      %p262 = scmp.lt.s32.totalorder %s22, 0
      %s263 = scalar_select %p262, %s22, 0
      %s264 = sadd.s32 %s263, %s261
      %s265 = smul.addr %s264, 8
      %s266 = scalar_lea.vmem %s0, %s265
      %p267 = scmp.lt.s32.totalorder %s21, 1
      %s268 = scalar_select %p267, %s21, 1
      %p269 = scmp.lt.s32.totalorder %s22, 0
      %s270 = scalar_select %p269, %s22, 0
      %s271 = sadd.s32 %s270, %s268
      %s272 = smul.addr %s271, 4
      %s273 = scalar_lea.vmem %s3, %s272
      %p274 = scmp.lt.s32.totalorder %s21, 1
      %s275 = scalar_select %p274, %s21, 1
      %p276 = scmp.lt.s32.totalorder %s22, 0
      %s277 = scalar_select %p276, %s22, 0
      %s278 = sadd.s32 %s277, %s275
      %s279 = smul.addr %s278, 4
      %s280 = scalar_lea.vmem %s4, %s279
      %p281 = scmp.lt.s32.totalorder %s21, 1
      %s282 = scalar_select %p281, %s21, 1
      %p283 = scmp.lt.s32.totalorder %s22, 0
      %s284 = scalar_select %p283, %s22, 0
      %s285 = sadd.s32 %s284, %s282
      %s286 = smul.addr %s285, 4
      %s287 = scalar_lea.vmem %s5, %s286
      %v289 = vld [vmem:[%s266] sm:$0xff]
      %v290 = vpack.c.bf16 %v289, %v289
      %v291 = vld [vmem:[%s1] sm:$0xf]
      %v292 = vld [vmem:[%s1 + $0x4] sm:$0xf]
      %v293 = vld [vmem:[%s1 + $0x8] sm:$0xf]
      %v294 = vld [vmem:[%s1 + $0xc] sm:$0xf]
      %v295 = vld [vmem:[%s2] sm:$0x1]
      %v297 = vlaneseq
      %v298 = vshrl.u32 %v297, 7
      %v299 = vsub.s32 0, %v298
      %v300 = vrot.slane %v295, %v299
      %v306 = vunpack.c.l.b16 %v291
      %v307 = vunpack.c.l.b16 %v292
      %v308 = vunpack.c.l.b16 %v293
      %v309 = vunpack.c.l.b16 %v294
      %v310 = vpack.c.b16 %v307, %v306
      %v311 = vpack.c.b16 %v309, %v308
      %vm314 = vcmask 261120
      %v316 = vsel %vm314, %v290, 0
      %318 = vmatprep.subr.bf16.mxu0 0
      %319 = vmatpush1.bf16.msra.mxu0 %v310
      %320 = vmatprep.subr.bf16.mxu0 0
      %321 = vmatpush1.bf16.msra.mxu0 %v311
      %322 = vmatprep.subr.bf16.mxu0 0
      %323 = vmatpush1.bf16.msra.mxu0 0
      %324 = vmatprep.subr.bf16.mxu0 0
      %325 = vmatpush1.bf16.msra.mxu0 0
      %326 = vmatprep.subr.bf16.mxu0 0
      %327 = vmatpush1.bf16.msra.mxu0 0
      %328 = vmatprep.subr.bf16.mxu0 0
      %329 = vmatpush1.bf16.msra.mxu0 0
      %330 = vmatprep.subr.bf16.mxu0 0
      %331 = vmatpush1.bf16.msra.mxu0 0
      %332 = vmatprep.subr.bf16.mxu0 0
      %333 = vmatpush1.bf16.msra.mxu0 0
      %334 = vmatprep.subr.bf16.mxu0 0
      %335 = vmatpush1.bf16.msra.mxu0 0
      %336 = vmatprep.subr.bf16.mxu0 0
      %337 = vmatpush1.bf16.msra.mxu0 0
      %338 = vmatprep.subr.bf16.mxu0 0
      %339 = vmatpush1.bf16.msra.mxu0 0
      %340 = vmatprep.subr.bf16.mxu0 0
      %341 = vmatpush1.bf16.msra.mxu0 0
      %342 = vmatprep.subr.bf16.mxu0 0
      %343 = vmatpush1.bf16.msra.mxu0 0
      %344 = vmatprep.subr.bf16.mxu0 0
      %345 = vmatpush1.bf16.msra.mxu0 0
      %346 = vmatprep.subr.bf16.mxu0 0
      %347 = vmatpush1.bf16.msra.mxu0 0
      %348 = vmatprep.subr.bf16.mxu0 0
      %349 = vmatpush1.bf16.msra.mxu0 0
      %350 = vmatprep.mubr.bf16.mxu0 0
      %351 = vmatmul.mubr.bf16.gmra.mrb[0].mxu0 %v316
      %v352 = vpop.f32.mrb[0].mxu0
      %v353 = vadd.f32 %v300, %v352
      %v354 = vpop.f32.mrb[0].mxu0
      %v355 = vpop.f32.mrb[0].mxu0
      %v356 = vpop.f32.mrb[0].mxu0
      %357 = vdwg.mxu0
      %v358 = vpack.c.bf16 %v353, %v353
      %vm359 = vcmask 257024
      %360 = vst.msk [vmem:[%s273] sm:$0xf] %vm359, %v358
      %v362 = vunpack.c.l.b16 %v358
      %v363 = vpack.c.b16 %v362, %v362
      %364 = vrot.lane.b32.xlu0 %v363, 96
      %v365 = vpop.permute.xlu0 %364
      %367 = vst.msk [vmem:[%s280] sm:$0xf] %vm359, %v365
      %368 = vrot.lane.b32.xlu0 %v363, 64
      %v369 = vpop.permute.xlu0 %368
      %371 = vst.msk [vmem:[%s287] sm:$0xf] %vm359, %v369
      %p372 = scmp.lt.s32.totalorder %s21, 1
      %s373 = scalar_select %p372, %s21, 1
      %p374 = scmp.lt.s32.totalorder %s22, 0
      %s375 = scalar_select %p374, %s22, 0
      %s376 = sadd.s32 %s375, %s373
      %s377 = smul.addr %s376, 4
      %s378 = scalar_lea.vmem %s3, %s377
      %p379 = scmp.lt.s32.totalorder %s21, 1
      %s380 = scalar_select %p379, %s21, 1
      %p381 = scmp.lt.s32.totalorder %s22, 0
      %s382 = scalar_select %p381, %s22, 0
      %s383 = sadd.s32 %s382, %s380
      %s384 = smul.addr %s383, 4
      %s385 = scalar_lea.vmem %s4, %s384
      %p386 = scmp.lt.s32.totalorder %s21, 1
      %s387 = scalar_select %p386, %s21, 1
      %p388 = scmp.lt.s32.totalorder %s22, 0
      %s389 = scalar_select %p388, %s22, 0
      %s390 = sadd.s32 %s389, %s387
      %s391 = smul.addr %s390, 4
      %s392 = scalar_lea.vmem %s5, %s391
      // Predicated region
      $region33: #{transformer_encoder.8} parent=31 // pred_check
        %p393 = pneg %p119
      $region34: #{transformer_encoder.8} parent=31 // pred_check_branch
        %395 = sbr.rel (%p393) target = $region36
      $region35: #{transformer_encoder.8} parent=31 // pred_region
        _
      $region36: #{transformer_encoder.8} parent=31 // pred_fallthru
        _
      // Predicated region
      $region37: #{transformer_encoder.8} parent=31 // pred_check
        %p396 = pneg %p147
      $region38: #{transformer_encoder.8} parent=31 // pred_check_branch
        %398 = sbr.rel (%p396) target = $region40
      $region39: #{transformer_encoder.8} parent=31 // pred_region
        _
      $region40: #{transformer_encoder.8} parent=31 // pred_fallthru
        _
      // Predicated region
      $region41: #{transformer_encoder.8} parent=31 // pred_check
        %p399 = pneg %p175
      $region42: #{transformer_encoder.8} parent=31 // pred_check_branch
        %401 = sbr.rel (%p399) target = $region44
      $region43: #{transformer_encoder.8} parent=31 // pred_region
        _
      $region44: #{transformer_encoder.8} parent=31 // pred_fallthru
        _
    $region32: #{transformer_encoder.8} parent=5 // pred_fallthru
      _
    %p402 = scmp.le.s32.totalorder 2, %s12
    // Predicated region
    $region45: #{transformer_encoder.8} parent=5 // pred_check
      %p403 = pneg %p402
    $region46: #{transformer_encoder.8} parent=5 // pred_check_branch
      %405 = sbr.rel (%p403) target = $region48
    $region47: #{transformer_encoder.8} parent=5 // pred_region
      %s406 = ssub.s32 %s12, 2
      // Predicated region
      $region49: #{transformer_encoder.8} parent=47 // pred_check
        %p407 = pneg %p125
      $region50: #{transformer_encoder.8} parent=47 // pred_check_branch
        %409 = sbr.rel (%p407) target = $region52
      $region51: #{transformer_encoder.8} parent=47 // pred_region
        %p410 = scmp.lt.s32.totalorder %s23, 1
        %s411 = scalar_select %p410, %s23, 1
        %p412 = scmp.lt.s32.totalorder %s24, 0
        %s413 = scalar_select %p412, %s24, 0
        %s414 = sadd.s32 %s413, %s411
        %s415 = smul.addr %s414, 4
        %s416 = scalar_lea.vmem %s3, %s415
      $region52: #{transformer_encoder.8} parent=47 // pred_fallthru
        _
      // Predicated region
      $region53: #{transformer_encoder.8} parent=47 // pred_check
        %p417 = pneg %p153
      $region54: #{transformer_encoder.8} parent=47 // pred_check_branch
        %419 = sbr.rel (%p417) target = $region56
      $region55: #{transformer_encoder.8} parent=47 // pred_region
        %p420 = scmp.lt.s32.totalorder %s23, 1
        %s421 = scalar_select %p420, %s23, 1
        %p422 = scmp.lt.s32.totalorder %s24, 0
        %s423 = scalar_select %p422, %s24, 0
        %s424 = sadd.s32 %s423, %s421
        %s425 = smul.addr %s424, 4
        %s426 = scalar_lea.vmem %s4, %s425
      $region56: #{transformer_encoder.8} parent=47 // pred_fallthru
        _
      // Predicated region
      $region57: #{transformer_encoder.8} parent=47 // pred_check
        %p427 = pneg %p181
      $region58: #{transformer_encoder.8} parent=47 // pred_check_branch
        %429 = sbr.rel (%p427) target = $region60
      $region59: #{transformer_encoder.8} parent=47 // pred_region
        %p430 = scmp.lt.s32.totalorder %s23, 1
        %s431 = scalar_select %p430, %s23, 1
        %p432 = scmp.lt.s32.totalorder %s24, 0
        %s433 = scalar_select %p432, %s24, 0
        %s434 = sadd.s32 %s433, %s431
        %s435 = smul.addr %s434, 4
        %s436 = scalar_lea.vmem %s5, %s435
      $region60: #{transformer_encoder.8} parent=47 // pred_fallthru
        _
    $region48: #{transformer_encoder.8} parent=5 // pred_fallthru
      _
  $region6: #{transformer_encoder.8} parent=0 // loop_footer
    %s16 = sadd.s32 1, %s12
  $region7: #{transformer_encoder.8} parent=0 // loop_footer_branch
    %11 = sbr.rel target = $region3
  $region8: #{transformer_encoder.8} parent=0 // loop_exit
    _

// kernel: transformer_encoder.11
$region0: #{transformer_encoder.11}
  #allocation0 [shape = 'u32[]', space=smem, size = 0x4, offset = 0x4, fixed_abs, tag = 'smem constant byte address 0x4 - core index']
  #allocation1 [shape = 'u32[144,128]{1,0:T(1,128)}', space=vmem, size = 0x12000, scoped, tag = 'internal scratch']
  %s0 = inlined_call_operand.vmem [shape: f32[2,8,32], index: 0, kind: input, shape index: {}]
  %s1 = inlined_call_operand.vmem [shape: f32[1,32], index: 1, kind: input, shape index: {}]
  %s2 = inlined_call_operand.vmem [shape: f32[1,32], index: 2, kind: input, shape index: {}]
  %s3 = inlined_call_operand.hbm [shape: f32[2,8,32], index: 3, kind: output, shape index: {}]
  %s4 = sld [smem:[#allocation0]]
  $region45: #{transformer_encoder.11} parent=0
    _
  %s6 = ssub.s32 1, %s4
  %s7 = scalar_select 0, %s6, %s4
  $region1: #{transformer_encoder.11} parent=0
    #allocation2 [shape = 'u8[8192]{0}', space=vmem, size = 0x2000, scoped, tag = 'output window, operand 0']
    #allocation3 [shape = 's32[2]{0}', space=sflag, size = 0x8, scoped, tag = 'scoped memory for transformer_encoder.11']
    %8 = vsyncpa [#allocation3], 0
    %s9 = scalar_lea.sflag [#allocation3], 1
    %10 = vsyncpa %s9, 0
    loop: start=0, step=1, limit=4
    $region2: #{transformer_encoder.11} parent=1 // loop_pre_header
      _
    $region3: #{transformer_encoder.11} parent=1 // loop_header
      %s12 = sphi 0, %s16
      %p13 = scmp.ge.s32.totalorder %s12, 4
      %s19 = sphi 0, %s31
      %s20 = sphi 0, %s27
      %s21 = sphi 0, %s19
      %s22 = sphi 0, %s20
      %s23 = sphi 0, %s21
      %s24 = sphi 0, %s22
      %s36 = sphi 0, %s38
      %s39 = sphi 0, %s36
      %s40 = sphi 0, %s39
      %s56 = sphi 0, %s40
      %s60 = sphi 0, %s60
      %s62 = sphi 0, %s60
      %s63 = sphi 0, %s62
      %s77 = sphi 0, %s63
      %s81 = sphi 0, %s81
      %s83 = sphi 0, %s81
      %s84 = sphi 0, %s83
      %s98 = sphi 0, %s84
      %s106 = sphi 0, %s108
      %s109 = sphi 0, %s106
      %s110 = sphi 0, %s109
      %s126 = sphi 0, %s110
    $region4: #{transformer_encoder.11} parent=1 // loop_header_branch
      %15 = sbr.rel (%p13) target = $region8
    $region5: #{transformer_encoder.11} parent=1 // loop_body
      %s17 = ssub.s32 %s12, 1
      %s18 = ssub.s32 %s12, 2
      %s25 = sadd.s32 1, %s20
      %p26 = scmp.ge.s32.totalorder %s25, 1
      %s27 = scalar_select %p26, 0, %s25
      %s28 = sadd.s32 1, %s19
      %s29 = scalar_select %p26, %s28, %s19
      %p30 = scmp.ge.s32.totalorder %s29, 2
      %s31 = scalar_select %p30, 0, %s29
      %s32 = ssub.s32 %s19, %s31
      %s33 = ssub.s32 %s20, %s27
      %s34 = sor.u32 %s32, %s33
      %p35 = scmp.eq.s32.totalorder %s34, 0
      %s37 = sadd.s32 %s36, 1
      %s38 = scalar_select %p35, %s36, %s37
      %p41 = pneg %p35
      %p42 = scmp.eq.s32.totalorder %s12, 1
      %p43 = por %p41, %p42
      %p44 = scmp.ne.s32.totalorder %s36, %s39
      %p45 = scmp.eq.s32.totalorder %s12, 0
      %p46 = por %p44, %p45
      %p47 = scmp.ne.s32.totalorder %s36, %s39
      %p48 = scmp.eq.s32.totalorder %s17, 1
      %p49 = por %p47, %p48
      %p50 = scmp.ne.s32.totalorder %s39, %s40
      %p51 = scmp.eq.s32.totalorder %s17, 0
      %p52 = por %p50, %p51
      %p53 = scmp.ne.s32.totalorder %s39, %s40
      %p54 = scmp.eq.s32.totalorder %s18, 1
      %p55 = por %p53, %p54
      %p57 = scmp.ne.s32.totalorder %s40, %s56
      %p58 = scmp.eq.s32.totalorder %s18, 0
      %p59 = por %p57, %p58
      %s61 = sadd.s32 %s60, 1
      %p64 = scmp.eq.s32.totalorder %s12, 1
      %p65 = scmp.ne.s32.totalorder %s60, %s62
      %p66 = scmp.eq.s32.totalorder %s12, 0
      %p67 = por %p65, %p66
      %p68 = scmp.ne.s32.totalorder %s60, %s62
      %p69 = scmp.eq.s32.totalorder %s17, 1
      %p70 = por %p68, %p69
      %p71 = scmp.ne.s32.totalorder %s62, %s63
      %p72 = scmp.eq.s32.totalorder %s17, 0
      %p73 = por %p71, %p72
      %p74 = scmp.ne.s32.totalorder %s62, %s63
      %p75 = scmp.eq.s32.totalorder %s18, 1
      %p76 = por %p74, %p75
      %p78 = scmp.ne.s32.totalorder %s63, %s77
      %p79 = scmp.eq.s32.totalorder %s18, 0
      %p80 = por %p78, %p79
      %s82 = sadd.s32 %s81, 1
      %p85 = scmp.eq.s32.totalorder %s12, 1
      %p86 = scmp.ne.s32.totalorder %s81, %s83
      %p87 = scmp.eq.s32.totalorder %s12, 0
      %p88 = por %p86, %p87
      %p89 = scmp.ne.s32.totalorder %s81, %s83
      %p90 = scmp.eq.s32.totalorder %s17, 1
      %p91 = por %p89, %p90
      %p92 = scmp.ne.s32.totalorder %s83, %s84
      %p93 = scmp.eq.s32.totalorder %s17, 0
      %p94 = por %p92, %p93
      %p95 = scmp.ne.s32.totalorder %s83, %s84
      %p96 = scmp.eq.s32.totalorder %s18, 1
      %p97 = por %p95, %p96
      %p99 = scmp.ne.s32.totalorder %s84, %s98
      %p100 = scmp.eq.s32.totalorder %s18, 0
      %p101 = por %p99, %p100
      %s102 = ssub.s32 %s19, %s31
      %s103 = ssub.s32 %s20, %s27
      %s104 = sor.u32 %s102, %s103
      %p105 = scmp.eq.s32.totalorder %s104, 0
      %s107 = sadd.s32 %s106, 1
      %s108 = scalar_select %p105, %s106, %s107
      %p111 = pneg %p105
      %p112 = scmp.eq.s32.totalorder %s12, 1
      %p113 = por %p111, %p112
      %p114 = scmp.ne.s32.totalorder %s106, %s109
      %p115 = scmp.eq.s32.totalorder %s12, 0
      %p116 = por %p114, %p115
      %p117 = scmp.ne.s32.totalorder %s106, %s109
      %p118 = scmp.eq.s32.totalorder %s17, 1
      %p119 = por %p117, %p118
      %p120 = scmp.ne.s32.totalorder %s109, %s110
      %p121 = scmp.eq.s32.totalorder %s17, 0
      %p122 = por %p120, %p121
      %p123 = scmp.ne.s32.totalorder %s109, %s110
      %p124 = scmp.eq.s32.totalorder %s18, 1
      %p125 = por %p123, %p124
      %p127 = scmp.ne.s32.totalorder %s110, %s126
      %p128 = scmp.eq.s32.totalorder %s18, 0
      %p129 = por %p127, %p128
      %p130 = scmp.le.s32.totalorder 1, %s12
      %p131 = scmp.lt.s32.totalorder %s12, 3
      %p132 = pnand %p130, %p131
      %p133 = pneg %p132
      // Predicated region
      $region9: #{transformer_encoder.11} parent=5 // pred_check
        _
      $region10: #{transformer_encoder.11} parent=5 // pred_check_branch
        %135 = sbr.rel (%p132) target = $region12
      $region11: #{transformer_encoder.11} parent=5 // pred_region
        %s136 = ssub.s32 %s12, 1
        // Predicated region
        $region13: #{transformer_encoder.11} parent=11 // pred_check
          %p137 = pneg %p73
        $region14: #{transformer_encoder.11} parent=11 // pred_check_branch
          %139 = sbr.rel (%p137) target = $region16
        $region15: #{transformer_encoder.11} parent=11 // pred_region
          _
        $region16: #{transformer_encoder.11} parent=11 // pred_fallthru
          _
        // Predicated region
        $region17: #{transformer_encoder.11} parent=11 // pred_check
          %p140 = pneg %p94
        $region18: #{transformer_encoder.11} parent=11 // pred_check_branch
          %142 = sbr.rel (%p140) target = $region20
        $region19: #{transformer_encoder.11} parent=11 // pred_region
          _
        $region20: #{transformer_encoder.11} parent=11 // pred_fallthru
          _
      $region12: #{transformer_encoder.11} parent=5 // pred_fallthru
        _
      %p143 = scmp.lt.s32.totalorder %s12, 2
      // Predicated region
      $region21: #{transformer_encoder.11} parent=5 // pred_check
        %p144 = pneg %p143
      $region22: #{transformer_encoder.11} parent=5 // pred_check_branch
        %146 = sbr.rel (%p144) target = $region24
      $region23: #{transformer_encoder.11} parent=5 // pred_region
        // Predicated region
        $region25: #{transformer_encoder.11} parent=23 // pred_check
          %p147 = pneg %p46
        $region26: #{transformer_encoder.11} parent=23 // pred_check_branch
          %149 = sbr.rel (%p147) target = $region28
        $region27: #{transformer_encoder.11} parent=23 // pred_region
          %p150 = scmp.lt.s32.totalorder %s19, 1
          %s151 = scalar_select %p150, %s19, 1
          %p152 = scmp.lt.s32.totalorder %s20, 0
          %s153 = scalar_select %p152, %s20, 0
          %s154 = sadd.s32 %s153, %s151
          %s155 = smul.addr %s154, 8
          %s156 = scalar_lea.vmem %s0, %s155
        $region28: #{transformer_encoder.11} parent=23 // pred_fallthru
          _
      $region24: #{transformer_encoder.11} parent=5 // pred_fallthru
        _
      %p157 = scmp.le.s32.totalorder 1, %s12
      %p158 = scmp.lt.s32.totalorder %s12, 3
      %p159 = pnand %p157, %p158
      %p160 = pneg %p159
      // Predicated region
      $region29: #{transformer_encoder.11} parent=5 // pred_check
        _
      $region30: #{transformer_encoder.11} parent=5 // pred_check_branch
        %162 = sbr.rel (%p159) target = $region32
      $region31: #{transformer_encoder.11} parent=5 // pred_region
        %s163 = ssub.s32 %s12, 1
        %p164 = scmp.lt.s32.totalorder %s21, 1
        %s165 = scalar_select %p164, %s21, 1
        %p166 = scmp.lt.s32.totalorder %s22, 0
        %s167 = scalar_select %p166, %s22, 0
        %s168 = sadd.s32 %s167, %s165
        %s169 = smul.addr %s168, 8
        %s170 = scalar_lea.vmem %s0, %s169
        %p171 = pneg %p52
        %p172 = pneg %p49
        %p173 = pneg %p73
        %p174 = pneg %p70
        %p175 = pneg %p94
        %p176 = pneg %p91
        %p177 = pneg %p122
        %p178 = pneg %p119
        %s179 = sand.u32 %s109, 1
        %s180 = scalar_lea.sflag [#allocation3], %s179
        %s181 = sand.u32 %s109, 1
        %s182 = smul.addr %s181, 8
        %s183 = scalar_lea.vmem [#allocation2], %s182
        %p184 = scmp.lt.s32.totalorder %s21, 1
        %s185 = scalar_select %p184, %s21, 1
        %p186 = scmp.lt.s32.totalorder %s22, 0
        %s187 = scalar_select %p186, %s22, 0
        %s188 = sadd.s32 %s187, %s185
        %s189 = smul.addr %s188, 8
        %s190 = scalar_lea.vmem %s0, %s189
        %v191 = vld [vmem:[%s190] sm:$0xff]
        %v192 = vld [vmem:[%s1] sm:$0x1]
        %v193 = vld [vmem:[%s2] sm:$0x1]
        %vm194 = vcmask 261120
        %v195 = vsel %vm194, %v191, 0.0
        %196 = vadd.xlane.f32.xlu0 %v195
        %v197 = vpop.xlane.xlu0 %196
        %v198 = vrcp.pop 32.0
        %v199 = vmul.f32 %v197, %v198
        %v200 = vsub.f32 %v191, %v199
        %v201 = vmul.f32 %v200, %v200
        %v202 = vsel %vm194, %v201, 0.0
        %203 = vadd.xlane.f32.xlu0 %v202
        %v204 = vpop.xlane.xlu0 %203
        %v205 = vmul.f32 %v204, %v198
        %v206 = vadd.f32 %v205, 1e-05
        %v207 = vrsqrt.pop %v206
        %v208 = vmul.f32 %v200, %v207
        %v210 = vlaneseq
        %v211 = vshrl.u32 %v210, 7
        %v212 = vsub.s32 0, %v211
        %v213 = vrot.slane %v192, %v212
        %v215 = vmul.f32 %v208, %v213
        %v217 = vlaneseq
        %v218 = vshrl.u32 %v217, 7
        %v219 = vsub.s32 0, %v218
        %v220 = vrot.slane %v193, %v219
        %v222 = vadd.f32 %v215, %v220
        %223 = vst.msk [vmem:[%s183] sm:$0xff] %vm194, %v222
        %s224 = sand.u32 %s109, 1
        %s225 = scalar_lea.sflag [#allocation3], %s224
        %s226 = sand.u32 %s109, 1
        %s227 = smul.addr %s226, 8
        %s228 = scalar_lea.vmem [#allocation2], %s227
        // Predicated region
        $region33: #{transformer_encoder.11} parent=31 // pred_check
          %p229 = pneg %p119
        $region34: #{transformer_encoder.11} parent=31 // pred_check_branch
          %231 = sbr.rel (%p229) target = $region36
        $region35: #{transformer_encoder.11} parent=31 // pred_region
          %s233 = ssub.s32 128, 128
          %234 = vsyncadd %s225, %s233
          %s235 = sadd.s32 %s22, %s21
          %s236 = smul.addr %s235, 128
          %s237 = scalar_lea.hbm %s3, %s236
          %s239 = sshll.u32 %s228, 4
          %s240 = int_to_ptr.vmem [resolvable:$true] %s239
          %242 = dma.vmem_to_hbm [thread:$0]  %s240, 128, %s237, %s225
        $region36: #{transformer_encoder.11} parent=31 // pred_fallthru
          _
      $region32: #{transformer_encoder.11} parent=5 // pred_fallthru
        _
      %p243 = scmp.le.s32.totalorder 2, %s12
      // Predicated region
      $region37: #{transformer_encoder.11} parent=5 // pred_check
        %p244 = pneg %p243
      $region38: #{transformer_encoder.11} parent=5 // pred_check_branch
        %246 = sbr.rel (%p244) target = $region40
      $region39: #{transformer_encoder.11} parent=5 // pred_region
        %s247 = ssub.s32 %s12, 2
        // Predicated region
        $region41: #{transformer_encoder.11} parent=39 // pred_check
          %p248 = pneg %p125
        $region42: #{transformer_encoder.11} parent=39 // pred_check_branch
          %250 = sbr.rel (%p248) target = $region44
        $region43: #{transformer_encoder.11} parent=39 // pred_region
          %s251 = sand.u32 %s110, 1
          %s252 = scalar_lea.sflag [#allocation3], %s251
          %s253 = sand.u32 %s110, 1
          %s254 = smul.addr %s253, 8
          %s255 = scalar_lea.vmem [#allocation2], %s254
          %256 = dma.done %s252, 128
        $region44: #{transformer_encoder.11} parent=39 // pred_fallthru
          _
      $region40: #{transformer_encoder.11} parent=5 // pred_fallthru
        _
    $region6: #{transformer_encoder.11} parent=1 // loop_footer
      %s16 = sadd.s32 1, %s12
    $region7: #{transformer_encoder.11} parent=1 // loop_footer_branch
      %11 = sbr.rel target = $region3
    $region8: #{transformer_encoder.11} parent=1 // loop_exit
      _
    %257 = vsyncpa [#allocation3], 1
    %s258 = scalar_lea.sflag [#allocation3], 1
    %259 = vsyncpa %s258, 1

// kernel: transformer_encoder.10
$region0: #{transformer_encoder.10}
  #allocation0 [shape = 'u32[]', space=smem, size = 0x4, offset = 0x4, fixed_abs, tag = 'smem constant byte address 0x4 - core index']
  #allocation1 [shape = 'u32[144,128]{1,0:T(1,128)}', space=vmem, size = 0x12000, scoped, tag = 'internal scratch']
  %s0 = inlined_call_operand.vmem [shape: bf16[2,8,32], index: 0, kind: input, shape index: {}]
  %s1 = inlined_call_operand.vmem [shape: bf16[2,8,32], index: 1, kind: input, shape index: {}]
  %s2 = inlined_call_operand.vmem [shape: bf16[4,32], index: 2, kind: input, shape index: {}]
  %s3 = inlined_call_operand.hbm [shape: f32[2,4,32], index: 3, kind: output, shape index: {0}]
  %s4 = inlined_call_operand.hbm [shape: f32[2,4,8], index: 4, kind: output, shape index: {1}]
  %s5 = inlined_call_operand.hbm [shape: f32[2,4,8], index: 5, kind: output, shape index: {2}]
  %6 = xla_tuple %s3, %s4, %s5
  %s7 = sld [smem:[#allocation0]]
  $region61: #{transformer_encoder.10} parent=0
    _
  %s9 = ssub.s32 1, %s7
  %s10 = scalar_select 0, %s9, %s7
  $region1: #{transformer_encoder.10} parent=0
    #allocation2 [shape = 'u8[4096]{0}', space=vmem, size = 0x1000, scoped, tag = 'output window, operand 0']
    #allocation3 [shape = 's32[2]{0}', space=sflag, size = 0x8, scoped, tag = 'scoped memory for transformer_encoder.10']
    #allocation4 [shape = 'u8[4096]{0}', space=vmem, size = 0x1000, scoped, tag = 'output window, operand 1']
    #allocation5 [shape = 's32[2]{0}', space=sflag, size = 0x8, scoped, tag = 'scoped memory for transformer_encoder.10']
    #allocation6 [shape = 'u8[4096]{0}', space=vmem, size = 0x1000, scoped, tag = 'output window, operand 2']
    %11 = vsyncpa [#allocation3], 0
    %s12 = scalar_lea.sflag [#allocation3], 1
    %13 = vsyncpa %s12, 0
    %14 = vsyncpa [#allocation5], 0
    %s15 = scalar_lea.sflag [#allocation5], 1
    %16 = vsyncpa %s15, 0
    loop: start=0, step=1, limit=4
    $region2: #{transformer_encoder.10} parent=1 // loop_pre_header
      _
    $region3: #{transformer_encoder.10} parent=1 // loop_header
      %s18 = sphi 0, %s22
      %p19 = scmp.ge.s32.totalorder %s18, 4
      %s28 = sphi 0, %s30
      %s31 = sphi 0, %s28
      %s32 = sphi 0, %s31
      %s48 = sphi 0, %s32
      %s54 = sphi 0, %s56
      %s57 = sphi 0, %s54
      %s58 = sphi 0, %s57
      %s74 = sphi 0, %s58
      %s78 = sphi 0, %s78
      %s80 = sphi 0, %s78
      %s81 = sphi 0, %s80
      %s95 = sphi 0, %s81
      %s101 = sphi 0, %s103
      %s104 = sphi 0, %s101
      %s105 = sphi 0, %s104
      %s121 = sphi 0, %s105
      %s127 = sphi 0, %s129
      %s130 = sphi 0, %s127
      %s131 = sphi 0, %s130
      %s147 = sphi 0, %s131
      %s153 = sphi 0, %s155
      %s156 = sphi 0, %s153
      %s157 = sphi 0, %s156
      %s173 = sphi 0, %s157
    $region4: #{transformer_encoder.10} parent=1 // loop_header_branch
      %21 = sbr.rel (%p19) target = $region8
    $region5: #{transformer_encoder.10} parent=1 // loop_body
      %s23 = ssub.s32 %s18, 1
      %s24 = ssub.s32 %s18, 2
      %s25 = sadd.s32 %s18, 1
      %s26 = ssub.s32 %s18, %s25
      %p27 = scmp.eq.s32.totalorder %s26, 0
      %s29 = sadd.s32 %s28, 1
      %s30 = scalar_select %p27, %s28, %s29
      %p33 = pneg %p27
      %p34 = scmp.eq.s32.totalorder %s18, 1
      %p35 = por %p33, %p34
      %p36 = scmp.ne.s32.totalorder %s28, %s31
      %p37 = scmp.eq.s32.totalorder %s18, 0
      %p38 = por %p36, %p37
      %p39 = scmp.ne.s32.totalorder %s28, %s31
      %p40 = scmp.eq.s32.totalorder %s23, 1
      %p41 = por %p39, %p40
      %p42 = scmp.ne.s32.totalorder %s31, %s32
      %p43 = scmp.eq.s32.totalorder %s23, 0
      %p44 = por %p42, %p43
      %p45 = scmp.ne.s32.totalorder %s31, %s32
      %p46 = scmp.eq.s32.totalorder %s24, 1
      %p47 = por %p45, %p46
      %p49 = scmp.ne.s32.totalorder %s32, %s48
      %p50 = scmp.eq.s32.totalorder %s24, 0
      %p51 = por %p49, %p50
      %s52 = ssub.s32 %s18, %s25
      %p53 = scmp.eq.s32.totalorder %s52, 0
      %s55 = sadd.s32 %s54, 1
      %s56 = scalar_select %p53, %s54, %s55
      %p59 = pneg %p53
      %p60 = scmp.eq.s32.totalorder %s18, 1
      %p61 = por %p59, %p60
      %p62 = scmp.ne.s32.totalorder %s54, %s57
      %p63 = scmp.eq.s32.totalorder %s18, 0
      %p64 = por %p62, %p63
      %p65 = scmp.ne.s32.totalorder %s54, %s57
      %p66 = scmp.eq.s32.totalorder %s23, 1
      %p67 = por %p65, %p66
      %p68 = scmp.ne.s32.totalorder %s57, %s58
      %p69 = scmp.eq.s32.totalorder %s23, 0
      %p70 = por %p68, %p69
      %p71 = scmp.ne.s32.totalorder %s57, %s58
      %p72 = scmp.eq.s32.totalorder %s24, 1
      %p73 = por %p71, %p72
      %p75 = scmp.ne.s32.totalorder %s58, %s74
      %p76 = scmp.eq.s32.totalorder %s24, 0
      %p77 = por %p75, %p76
      %s79 = sadd.s32 %s78, 1
      %p82 = scmp.eq.s32.totalorder %s18, 1
      %p83 = scmp.ne.s32.totalorder %s78, %s80
      %p84 = scmp.eq.s32.totalorder %s18, 0
      %p85 = por %p83, %p84
      %p86 = scmp.ne.s32.totalorder %s78, %s80
      %p87 = scmp.eq.s32.totalorder %s23, 1
      %p88 = por %p86, %p87
      %p89 = scmp.ne.s32.totalorder %s80, %s81
      %p90 = scmp.eq.s32.totalorder %s23, 0
      %p91 = por %p89, %p90
      %p92 = scmp.ne.s32.totalorder %s80, %s81
      %p93 = scmp.eq.s32.totalorder %s24, 1
      %p94 = por %p92, %p93
      %p96 = scmp.ne.s32.totalorder %s81, %s95
      %p97 = scmp.eq.s32.totalorder %s24, 0
      %p98 = por %p96, %p97
      %s99 = ssub.s32 %s18, %s25
      %p100 = scmp.eq.s32.totalorder %s99, 0
      %s102 = sadd.s32 %s101, 1
      %s103 = scalar_select %p100, %s101, %s102
      %p106 = pneg %p100
      %p107 = scmp.eq.s32.totalorder %s18, 1
      %p108 = por %p106, %p107
      %p109 = scmp.ne.s32.totalorder %s101, %s104
      %p110 = scmp.eq.s32.totalorder %s18, 0
      %p111 = por %p109, %p110
      %p112 = scmp.ne.s32.totalorder %s101, %s104
      %p113 = scmp.eq.s32.totalorder %s23, 1
      %p114 = por %p112, %p113
      %p115 = scmp.ne.s32.totalorder %s104, %s105
      %p116 = scmp.eq.s32.totalorder %s23, 0
      %p117 = por %p115, %p116
      %p118 = scmp.ne.s32.totalorder %s104, %s105
      %p119 = scmp.eq.s32.totalorder %s24, 1
      %p120 = por %p118, %p119
      %p122 = scmp.ne.s32.totalorder %s105, %s121
      %p123 = scmp.eq.s32.totalorder %s24, 0
      %p124 = por %p122, %p123
      %s125 = ssub.s32 %s18, %s25
      %p126 = scmp.eq.s32.totalorder %s125, 0
      %s128 = sadd.s32 %s127, 1
      %s129 = scalar_select %p126, %s127, %s128
      %p132 = pneg %p126
      %p133 = scmp.eq.s32.totalorder %s18, 1
      %p134 = por %p132, %p133
      %p135 = scmp.ne.s32.totalorder %s127, %s130
      %p136 = scmp.eq.s32.totalorder %s18, 0
      %p137 = por %p135, %p136
      %p138 = scmp.ne.s32.totalorder %s127, %s130
      %p139 = scmp.eq.s32.totalorder %s23, 1
      %p140 = por %p138, %p139
      %p141 = scmp.ne.s32.totalorder %s130, %s131
      %p142 = scmp.eq.s32.totalorder %s23, 0
      %p143 = por %p141, %p142
      %p144 = scmp.ne.s32.totalorder %s130, %s131
      %p145 = scmp.eq.s32.totalorder %s24, 1
      %p146 = por %p144, %p145
      %p148 = scmp.ne.s32.totalorder %s131, %s147
      %p149 = scmp.eq.s32.totalorder %s24, 0
      %p150 = por %p148, %p149
      %s151 = ssub.s32 %s18, %s25
      %p152 = scmp.eq.s32.totalorder %s151, 0
      %s154 = sadd.s32 %s153, 1
      %s155 = scalar_select %p152, %s153, %s154
      %p158 = pneg %p152
      %p159 = scmp.eq.s32.totalorder %s18, 1
      %p160 = por %p158, %p159
      %p161 = scmp.ne.s32.totalorder %s153, %s156
      %p162 = scmp.eq.s32.totalorder %s18, 0
      %p163 = por %p161, %p162
      %p164 = scmp.ne.s32.totalorder %s153, %s156
      %p165 = scmp.eq.s32.totalorder %s23, 1
      %p166 = por %p164, %p165
      %p167 = scmp.ne.s32.totalorder %s156, %s157
      %p168 = scmp.eq.s32.totalorder %s23, 0
      %p169 = por %p167, %p168
      %p170 = scmp.ne.s32.totalorder %s156, %s157
      %p171 = scmp.eq.s32.totalorder %s24, 1
      %p172 = por %p170, %p171
      %p174 = scmp.ne.s32.totalorder %s157, %s173
      %p175 = scmp.eq.s32.totalorder %s24, 0
      %p176 = por %p174, %p175
      %p177 = scmp.le.s32.totalorder 1, %s18
      %p178 = scmp.lt.s32.totalorder %s18, 3
      %p179 = pnand %p177, %p178
      %p180 = pneg %p179
      // Predicated region
      $region9: #{transformer_encoder.10} parent=5 // pred_check
        _
      $region10: #{transformer_encoder.10} parent=5 // pred_check_branch
        %182 = sbr.rel (%p179) target = $region12
      $region11: #{transformer_encoder.10} parent=5 // pred_region
        %s183 = ssub.s32 %s18, 1
        // Predicated region
        $region13: #{transformer_encoder.10} parent=11 // pred_check
          %p184 = pneg %p91
        $region14: #{transformer_encoder.10} parent=11 // pred_check_branch
          %186 = sbr.rel (%p184) target = $region16
        $region15: #{transformer_encoder.10} parent=11 // pred_region
          _
        $region16: #{transformer_encoder.10} parent=11 // pred_fallthru
          _
      $region12: #{transformer_encoder.10} parent=5 // pred_fallthru
        _
      %p187 = scmp.lt.s32.totalorder %s18, 2
      // Predicated region
      $region17: #{transformer_encoder.10} parent=5 // pred_check
        %p188 = pneg %p187
      $region18: #{transformer_encoder.10} parent=5 // pred_check_branch
        %190 = sbr.rel (%p188) target = $region20
      $region19: #{transformer_encoder.10} parent=5 // pred_region
        // Predicated region
        $region21: #{transformer_encoder.10} parent=19 // pred_check
          %p191 = pneg %p38
        $region22: #{transformer_encoder.10} parent=19 // pred_check_branch
          %193 = sbr.rel (%p191) target = $region24
        $region23: #{transformer_encoder.10} parent=19 // pred_region
          %p194 = scmp.lt.s32.totalorder %s18, 1
          %s195 = scalar_select %p194, %s18, 1
          %s196 = smul.addr %s195, 4
          %s197 = scalar_lea.vmem %s0, %s196
        $region24: #{transformer_encoder.10} parent=19 // pred_fallthru
          _
        // Predicated region
        $region25: #{transformer_encoder.10} parent=19 // pred_check
          %p198 = pneg %p64
        $region26: #{transformer_encoder.10} parent=19 // pred_check_branch
          %200 = sbr.rel (%p198) target = $region28
        $region27: #{transformer_encoder.10} parent=19 // pred_region
          %p201 = scmp.lt.s32.totalorder %s18, 1
          %s202 = scalar_select %p201, %s18, 1
          %s203 = smul.addr %s202, 4
          %s204 = scalar_lea.vmem %s1, %s203
        $region28: #{transformer_encoder.10} parent=19 // pred_fallthru
          _
      $region20: #{transformer_encoder.10} parent=5 // pred_fallthru
        _
      %p205 = scmp.le.s32.totalorder 1, %s18
      %p206 = scmp.lt.s32.totalorder %s18, 3
      %p207 = pnand %p205, %p206
      %p208 = pneg %p207
      // Predicated region
      $region29: #{transformer_encoder.10} parent=5 // pred_check
        _
      $region30: #{transformer_encoder.10} parent=5 // pred_check_branch
        %210 = sbr.rel (%p207) target = $region32
      $region31: #{transformer_encoder.10} parent=5 // pred_region
        %s211 = ssub.s32 %s18, 1
        %p212 = scmp.lt.s32.totalorder %s23, 1
        %s213 = scalar_select %p212, %s23, 1
        %s214 = smul.addr %s213, 4
        %s215 = scalar_lea.vmem %s0, %s214
        %p216 = pneg %p44
        %p217 = pneg %p41
        %p218 = scmp.lt.s32.totalorder %s23, 1
        %s219 = scalar_select %p218, %s23, 1
        %s220 = smul.addr %s219, 4
        %s221 = scalar_lea.vmem %s1, %s220
        %p222 = pneg %p70
        %p223 = pneg %p67
        %p224 = pneg %p91
        %p225 = pneg %p88
        %p226 = pneg %p117
        %p227 = pneg %p114
        %s228 = sand.u32 %s104, 1
        %s229 = scalar_lea.sflag [#allocation3], %s228
        %s230 = sand.u32 %s104, 1
        %s231 = smul.addr %s230, 4
        %s232 = scalar_lea.vmem [#allocation2], %s231
        %p233 = pneg %p143
        %p234 = pneg %p140
        %s235 = sand.u32 %s23, 1
        %s236 = scalar_lea.sflag [#allocation5], %s235
        %s237 = sand.u32 %s130, 1
        %s238 = smul.addr %s237, 4
        %s239 = scalar_lea.vmem [#allocation4], %s238
        %p240 = pneg %p169
        %p241 = pneg %p166
        %s242 = sand.u32 %s23, 1
        %s243 = scalar_lea.sflag [#allocation5], %s242
        %s244 = sand.u32 %s156, 1
        %s245 = smul.addr %s244, 4
        %s246 = scalar_lea.vmem [#allocation6], %s245
        %p247 = scmp.lt.s32.totalorder %s23, 1
        %s248 = scalar_select %p247, %s23, 1
        %s249 = smul.addr %s248, 4
        %s250 = scalar_lea.vmem %s0, %s249
        %p251 = scmp.lt.s32.totalorder %s23, 1
        %s252 = scalar_select %p251, %s23, 1
        %s253 = smul.addr %s252, 4
        %s254 = scalar_lea.vmem %s1, %s253
        %v256 = vld [vmem:[%s250] sm:$0xf]
        %v257 = vld [vmem:[%s254] sm:$0xf]
        %v258 = vld [vmem:[%s2] sm:$0x3]
        %vm259 = vcmask 261120
        %v261 = vsel %vm259, %v258, 0
        %v264 = vsel %vm259, %v256, 0
        %266 = vmatprep.subr.bf16.mxu0 0
        %267 = vmatpush1.bf16.xpose.msra.mxu0 %v264
        %268 = vmatprep.subr.bf16.mxu0 0
        %269 = vmatpush1.bf16.xpose.msra.mxu0 0
        %270 = vmatprep.subr.bf16.mxu0 0
        %271 = vmatpush1.bf16.xpose.msra.mxu0 0
        %272 = vmatprep.subr.bf16.mxu0 0
        %273 = vmatpush1.bf16.xpose.msra.mxu0 0
        %274 = vmatprep.subr.bf16.mxu0 0
        %275 = vmatpush1.bf16.xpose.msra.mxu0 0
        %276 = vmatprep.subr.bf16.mxu0 0
        %277 = vmatpush1.bf16.xpose.msra.mxu0 0
        %278 = vmatprep.subr.bf16.mxu0 0
        %279 = vmatpush1.bf16.xpose.msra.mxu0 0
        %280 = vmatprep.subr.bf16.mxu0 0
        %281 = vmatpush1.bf16.xpose.msra.mxu0 0
        %282 = vmatprep.subr.bf16.mxu0 0
        %283 = vmatpush1.bf16.xpose.msra.mxu0 0
        %284 = vmatprep.subr.bf16.mxu0 0
        %285 = vmatpush1.bf16.xpose.msra.mxu0 0
        %286 = vmatprep.subr.bf16.mxu0 0
        %287 = vmatpush1.bf16.xpose.msra.mxu0 0
        %288 = vmatprep.subr.bf16.mxu0 0
        %289 = vmatpush1.bf16.xpose.msra.mxu0 0
        %290 = vmatprep.subr.bf16.mxu0 0
        %291 = vmatpush1.bf16.xpose.msra.mxu0 0
        %292 = vmatprep.subr.bf16.mxu0 0
        %293 = vmatpush1.bf16.xpose.msra.mxu0 0
        %294 = vmatprep.subr.bf16.mxu0 0
        %295 = vmatpush1.bf16.xpose.msra.mxu0 0
        %296 = vmatprep.subr.bf16.mxu0 0
        %297 = vmatpush1.bf16.xpose.msra.mxu0 0
        %298 = vmatprep.mubr.bf16.mxu0 0
        %299 = vmatmul.mubr.bf16.gmra.mrb[0].mxu0 %v261
        %v300 = vpop.f32.mrb[0].mxu0
        %v301 = vadd.f32 0.0, %v300
        %v302 = vpop.f32.mrb[0].mxu0
        %v303 = vpop.f32.mrb[0].mxu0
        %v304 = vpop.f32.mrb[0].mxu0
        %305 = vdwg.mxu0
        %v306 = vmul.f32 %v301, 0.17677669
        %vm307 = vcmask 60416
        %v308 = vsel %vm307, %v306, -inf
        %309 = vmax.xlane.f32.xlu0 %v308
        %v310 = vpop.xlane.xlu0 %309
        %v311 = vsub.f32 %v306, %v310
        %v312 = vmul.f32 %v311, 1.442695
        %v313 = vpow.pop %v312
        %v314 = vsel %vm307, %v313, 0.0
        %315 = vadd.xlane.f32.xlu0 %v314
        %v316 = vpop.xlane.xlu0 %315
        %v317 = vrcp.pop %v316
        %v318 = vmul.f32 %v313, %v317
        %v319 = vrot.slane %v308, 4
        %v320 = vmax.f32 %v308, %v319
        %v321 = vrot.slane %v320, 2
        %v322 = vmax.f32 %v320, %v321
        %v323 = vrot.slane %v322, 1
        %v324 = vmax.f32 %v322, %v323
        %v325 = vsub.f32 %v306, %v324
        %v326 = vmul.f32 %v325, 1.442695
        %v327 = vpow.pop %v326
        %v328 = vsel %vm307, %v327, 0.0
        %v329 = vrot.slane %v328, 4
        %v330 = vadd.f32 %v328, %v329
        %v331 = vrot.slane %v330, 2
        %v332 = vadd.f32 %v330, %v331
        %v333 = vrot.slane %v332, 1
        %v334 = vadd.f32 %v332, %v333
        %v335 = vrcp.pop %v334
        %v336 = vmul.f32 %v327, %v335
        %337 = vst.msk [vmem:[%s246] sm:$0xf] %vm307, %v318
        %338 = vst.msk [vmem:[%s239] sm:$0xf] %vm307, %v336
        %v339 = vpack.c.bf16 %v318, %v318
        %vm340 = vcmask 64512
        %v342 = vsel %vm340, %v339, 0
        %vm344 = vcmask 1043456
        %v346 = vsel %vm344, %v257, 0
        %348 = vmatprep.subr.bf16.mxu0 0
        %349 = vmatpush1.bf16.msra.mxu0 %v346
        %350 = vmatprep.subr.bf16.mxu0 0
        %351 = vmatpush1.bf16.msra.mxu0 0
        %352 = vmatprep.subr.bf16.mxu0 0
        %353 = vmatpush1.bf16.msra.mxu0 0
        %354 = vmatprep.subr.bf16.mxu0 0
        %355 = vmatpush1.bf16.msra.mxu0 0
        %356 = vmatprep.subr.bf16.mxu0 0
        %357 = vmatpush1.bf16.msra.mxu0 0
        %358 = vmatprep.subr.bf16.mxu0 0
        %359 = vmatpush1.bf16.msra.mxu0 0
        %360 = vmatprep.subr.bf16.mxu0 0
        %361 = vmatpush1.bf16.msra.mxu0 0
        %362 = vmatprep.subr.bf16.mxu0 0
        %363 = vmatpush1.bf16.msra.mxu0 0
        %364 = vmatprep.subr.bf16.mxu0 0
        %365 = vmatpush1.bf16.msra.mxu0 0
        %366 = vmatprep.subr.bf16.mxu0 0
        %367 = vmatpush1.bf16.msra.mxu0 0
        %368 = vmatprep.subr.bf16.mxu0 0
        %369 = vmatpush1.bf16.msra.mxu0 0
        %370 = vmatprep.subr.bf16.mxu0 0
        %371 = vmatpush1.bf16.msra.mxu0 0
        %372 = vmatprep.subr.bf16.mxu0 0
        %373 = vmatpush1.bf16.msra.mxu0 0
        %374 = vmatprep.subr.bf16.mxu0 0
        %375 = vmatpush1.bf16.msra.mxu0 0
        %376 = vmatprep.subr.bf16.mxu0 0
        %377 = vmatpush1.bf16.msra.mxu0 0
        %378 = vmatprep.subr.bf16.mxu0 0
        %379 = vmatpush1.bf16.msra.mxu0 0
        %380 = vmatprep.mubr.bf16.mxu0 0
        %381 = vmatmul.mubr.bf16.gmra.mrb[0].mxu0 %v342
        %v382 = vpop.f32.mrb[0].mxu0
        %v383 = vadd.f32 0.0, %v382
        %v384 = vpop.f32.mrb[0].mxu0
        %v385 = vpop.f32.mrb[0].mxu0
        %v386 = vpop.f32.mrb[0].mxu0
        %387 = vdwg.mxu0
        %vm388 = vcmask 257024
        %389 = vst.msk [vmem:[%s232] sm:$0xf] %vm388, %v383
        %s390 = sand.u32 %s104, 1
        %s391 = scalar_lea.sflag [#allocation3], %s390
        %s392 = sand.u32 %s104, 1
        %s393 = smul.addr %s392, 4
        %s394 = scalar_lea.vmem [#allocation2], %s393
        %s395 = sand.u32 %s23, 1
        %s396 = scalar_lea.sflag [#allocation5], %s395
        %s397 = sand.u32 %s130, 1
        %s398 = smul.addr %s397, 4
        %s399 = scalar_lea.vmem [#allocation4], %s398
        %s400 = sand.u32 %s23, 1
        %s401 = scalar_lea.sflag [#allocation5], %s400
        %s402 = sand.u32 %s156, 1
        %s403 = smul.addr %s402, 4
        %s404 = scalar_lea.vmem [#allocation6], %s403
        // Predicated region
        $region33: #{transformer_encoder.10} parent=31 // pred_check
          %p405 = pneg %p114
        $region34: #{transformer_encoder.10} parent=31 // pred_check_branch
          %407 = sbr.rel (%p405) target = $region36
        $region35: #{transformer_encoder.10} parent=31 // pred_region
          %s409 = ssub.s32 64, 64
          %410 = vsyncadd %s391, %s409
          %s411 = smul.addr %s23, 64
          %s412 = scalar_lea.hbm %s3, %s411
          %s414 = sshll.u32 %s394, 4
          %s415 = int_to_ptr.vmem [resolvable:$true] %s414
          %417 = dma.vmem_to_hbm [thread:$0]  %s415, 64, %s412, %s391
        $region36: #{transformer_encoder.10} parent=31 // pred_fallthru
          _
        // Predicated region
        $region37: #{transformer_encoder.10} parent=31 // pred_check
          %p418 = pneg %p140
        $region38: #{transformer_encoder.10} parent=31 // pred_check_branch
          %420 = sbr.rel (%p418) target = $region40
        $region39: #{transformer_encoder.10} parent=31 // pred_region
          %s422 = ssub.s32 64, 64
          %423 = vsyncadd %s396, %s422
          %s424 = smul.addr %s23, 64
          %s425 = scalar_lea.hbm %s4, %s424
          %s427 = sshll.u32 %s399, 4
          %s428 = int_to_ptr.vmem [resolvable:$true] %s427
          %430 = dma.vmem_to_hbm [thread:$0]  %s428, 64, %s425, %s396
        $region40: #{transformer_encoder.10} parent=31 // pred_fallthru
          _
        // Predicated region
        $region41: #{transformer_encoder.10} parent=31 // pred_check
          %p431 = pneg %p166
        $region42: #{transformer_encoder.10} parent=31 // pred_check_branch
          %433 = sbr.rel (%p431) target = $region44
        $region43: #{transformer_encoder.10} parent=31 // pred_region
          %s435 = ssub.s32 64, 64
          %436 = vsyncadd %s401, %s435
          %s437 = smul.addr %s23, 64
          %s438 = scalar_lea.hbm %s5, %s437
          %s440 = sshll.u32 %s404, 4
          %s441 = int_to_ptr.vmem [resolvable:$true] %s440
          %443 = dma.vmem_to_hbm [thread:$0]  %s441, 64, %s438, %s401
        $region44: #{transformer_encoder.10} parent=31 // pred_fallthru
          _
      $region32: #{transformer_encoder.10} parent=5 // pred_fallthru
        _
      %p444 = scmp.le.s32.totalorder 2, %s18
      // Predicated region
      $region45: #{transformer_encoder.10} parent=5 // pred_check
        %p445 = pneg %p444
      $region46: #{transformer_encoder.10} parent=5 // pred_check_branch
        %447 = sbr.rel (%p445) target = $region48
      $region47: #{transformer_encoder.10} parent=5 // pred_region
        %s448 = ssub.s32 %s18, 2
        // Predicated region
        $region49: #{transformer_encoder.10} parent=47 // pred_check
          %p449 = pneg %p120
        $region50: #{transformer_encoder.10} parent=47 // pred_check_branch
          %451 = sbr.rel (%p449) target = $region52
        $region51: #{transformer_encoder.10} parent=47 // pred_region
          %s452 = sand.u32 %s105, 1
          %s453 = scalar_lea.sflag [#allocation3], %s452
          %s454 = sand.u32 %s105, 1
          %s455 = smul.addr %s454, 4
          %s456 = scalar_lea.vmem [#allocation2], %s455
          %457 = dma.done %s453, 64
        $region52: #{transformer_encoder.10} parent=47 // pred_fallthru
          _
        // Predicated region
        $region53: #{transformer_encoder.10} parent=47 // pred_check
          %p458 = pneg %p146
        $region54: #{transformer_encoder.10} parent=47 // pred_check_branch
          %460 = sbr.rel (%p458) target = $region56
        $region55: #{transformer_encoder.10} parent=47 // pred_region
          %s461 = sand.u32 %s24, 1
          %s462 = scalar_lea.sflag [#allocation5], %s461
          %s463 = sand.u32 %s131, 1
          %s464 = smul.addr %s463, 4
          %s465 = scalar_lea.vmem [#allocation4], %s464
          %466 = dma.done %s462, 64
        $region56: #{transformer_encoder.10} parent=47 // pred_fallthru
          _
        // Predicated region
        $region57: #{transformer_encoder.10} parent=47 // pred_check
          %p467 = pneg %p172
        $region58: #{transformer_encoder.10} parent=47 // pred_check_branch
          %469 = sbr.rel (%p467) target = $region60
        $region59: #{transformer_encoder.10} parent=47 // pred_region
          %s470 = sand.u32 %s24, 1
          %s471 = scalar_lea.sflag [#allocation5], %s470
          %s472 = sand.u32 %s157, 1
          %s473 = smul.addr %s472, 4
          %s474 = scalar_lea.vmem [#allocation6], %s473
          %475 = dma.done %s471, 64
        $region60: #{transformer_encoder.10} parent=47 // pred_fallthru
          _
      $region48: #{transformer_encoder.10} parent=5 // pred_fallthru
        _
    $region6: #{transformer_encoder.10} parent=1 // loop_footer
      %s22 = sadd.s32 1, %s18
    $region7: #{transformer_encoder.10} parent=1 // loop_footer_branch
      %17 = sbr.rel target = $region3
    $region8: #{transformer_encoder.10} parent=1 // loop_exit
      _
    %476 = vsyncpa [#allocation3], 1
    %s477 = scalar_lea.sflag [#allocation3], 1
    %478 = vsyncpa %s477, 1
    %479 = vsyncpa [#allocation5], 1
    %s480 = scalar_lea.sflag [#allocation5], 1
    %481 = vsyncpa %s480, 1

// kernel: transformer_encoder.7
$region0: #{transformer_encoder.7}
  #allocation0 [shape = 'u32[]', space=smem, size = 0x4, offset = 0x4, fixed_abs, tag = 'smem constant byte address 0x4 - core index']
  #allocation1 [shape = 'u32[144,128]{1,0:T(1,128)}', space=vmem, size = 0x12000, scoped, tag = 'internal scratch']
  %s0 = inlined_call_operand.vmem [shape: f32[2,8,32], index: 0, kind: input, shape index: {}]
  %s1 = inlined_call_operand.vmem [shape: bf16[2,8,32], index: 1, kind: input, shape index: {}]
  %s2 = inlined_call_operand.vmem [shape: bf16[2,8,32], index: 2, kind: input, shape index: {}]
  %s3 = inlined_call_operand.vmem [shape: bf16[2,8,32], index: 3, kind: input, shape index: {}]
  %s4 = inlined_call_operand.vmem [shape: bf16[32,32], index: 4, kind: input, shape index: {}]
  %s5 = inlined_call_operand.vmem [shape: f32[1,32], index: 5, kind: input, shape index: {}, may-alias: {5,9,11,13}]
  %s6 = inlined_call_operand.vmem [shape: bf16[32,64], index: 6, kind: input, shape index: {}]
  %s7 = inlined_call_operand.vmem [shape: f32[1,64], index: 7, kind: input, shape index: {}]
  %s8 = inlined_call_operand.vmem [shape: bf16[64,32], index: 8, kind: input, shape index: {}]
  %s9 = inlined_call_operand.vmem [shape: f32[1,32], index: 9, kind: input, shape index: {}, may-alias: {5,9,11,13}]
  %s10 = inlined_call_operand.vmem [shape: f32[1,32], index: 10, kind: input, shape index: {}, may-alias: {10,12}]
  %s11 = inlined_call_operand.vmem [shape: f32[1,32], index: 11, kind: input, shape index: {}, may-alias: {5,9,11,13}]
  %s12 = inlined_call_operand.vmem [shape: f32[1,32], index: 12, kind: input, shape index: {}, may-alias: {10,12}]
  %s13 = inlined_call_operand.vmem [shape: f32[1,32], index: 13, kind: input, shape index: {}, may-alias: {5,9,11,13}]
  %s14 = inlined_call_operand.vmem [shape: f32[2,8,32], index: 14, kind: output, shape index: {}]
  %s15 = sld [smem:[#allocation0]]
  $region89: #{transformer_encoder.7} parent=0
    _
  %s17 = ssub.s32 1, %s15
  %s18 = scalar_select 0, %s17, %s15
  loop: start=0, step=1, limit=4
  $region2: #{transformer_encoder.7} parent=0 // loop_pre_header
    _
  $region3: #{transformer_encoder.7} parent=0 // loop_header
    %s20 = sphi 0, %s24
    %p21 = scmp.ge.s32.totalorder %s20, 4
    %s27 = sphi 0, %s39
    %s28 = sphi 0, %s35
    %s29 = sphi 0, %s27
    %s30 = sphi 0, %s28
    %s31 = sphi 0, %s29
    %s32 = sphi 0, %s30
    %s44 = sphi 0, %s46
    %s47 = sphi 0, %s44
    %s48 = sphi 0, %s47
    %s64 = sphi 0, %s48
    %s72 = sphi 0, %s74
    %s75 = sphi 0, %s72
    %s76 = sphi 0, %s75
    %s92 = sphi 0, %s76
    %s98 = sphi 0, %s100
    %s101 = sphi 0, %s98
    %s102 = sphi 0, %s101
    %s118 = sphi 0, %s102
    %s124 = sphi 0, %s126
    %s127 = sphi 0, %s124
    %s128 = sphi 0, %s127
    %s144 = sphi 0, %s128
    %s148 = sphi 0, %s148
    %s150 = sphi 0, %s148
    %s151 = sphi 0, %s150
    %s165 = sphi 0, %s151
    %s169 = sphi 0, %s169
    %s171 = sphi 0, %s169
    %s172 = sphi 0, %s171
    %s186 = sphi 0, %s172
    %s190 = sphi 0, %s190
    %s192 = sphi 0, %s190
    %s193 = sphi 0, %s192
    %s207 = sphi 0, %s193
    %s211 = sphi 0, %s211
    %s213 = sphi 0, %s211
    %s214 = sphi 0, %s213
    %s228 = sphi 0, %s214
    %s232 = sphi 0, %s232
    %s234 = sphi 0, %s232
    %s235 = sphi 0, %s234
    %s249 = sphi 0, %s235
    %s253 = sphi 0, %s253
    %s255 = sphi 0, %s253
    %s256 = sphi 0, %s255
    %s270 = sphi 0, %s256
    %s274 = sphi 0, %s274
    %s276 = sphi 0, %s274
    %s277 = sphi 0, %s276
    %s291 = sphi 0, %s277
    %s295 = sphi 0, %s295
    %s297 = sphi 0, %s295
    %s298 = sphi 0, %s297
    %s312 = sphi 0, %s298
    %s316 = sphi 0, %s316
    %s318 = sphi 0, %s316
    %s319 = sphi 0, %s318
    %s333 = sphi 0, %s319
    %s337 = sphi 0, %s337
    %s339 = sphi 0, %s337
    %s340 = sphi 0, %s339
    %s354 = sphi 0, %s340
    %s362 = sphi 0, %s364
    %s365 = sphi 0, %s362
    %s366 = sphi 0, %s365
    %s382 = sphi 0, %s366
  $region4: #{transformer_encoder.7} parent=0 // loop_header_branch
    %23 = sbr.rel (%p21) target = $region8
  $region5: #{transformer_encoder.7} parent=0 // loop_body
    %s25 = ssub.s32 %s20, 1
    %s26 = ssub.s32 %s20, 2
    %s33 = sadd.s32 1, %s28
    %p34 = scmp.ge.s32.totalorder %s33, 1
    %s35 = scalar_select %p34, 0, %s33
    %s36 = sadd.s32 1, %s27
    %s37 = scalar_select %p34, %s36, %s27
    %p38 = scmp.ge.s32.totalorder %s37, 2
    %s39 = scalar_select %p38, 0, %s37
    %s40 = ssub.s32 %s27, %s39
    %s41 = ssub.s32 %s28, %s35
    %s42 = sor.u32 %s40, %s41
    %p43 = scmp.eq.s32.totalorder %s42, 0
    %s45 = sadd.s32 %s44, 1
    %s46 = scalar_select %p43, %s44, %s45
    %p49 = pneg %p43
    %p50 = scmp.eq.s32.totalorder %s20, 1
    %p51 = por %p49, %p50
    %p52 = scmp.ne.s32.totalorder %s44, %s47
    %p53 = scmp.eq.s32.totalorder %s20, 0
    %p54 = por %p52, %p53
    %p55 = scmp.ne.s32.totalorder %s44, %s47
    %p56 = scmp.eq.s32.totalorder %s25, 1
    %p57 = por %p55, %p56
    %p58 = scmp.ne.s32.totalorder %s47, %s48
    %p59 = scmp.eq.s32.totalorder %s25, 0
    %p60 = por %p58, %p59
    %p61 = scmp.ne.s32.totalorder %s47, %s48
    %p62 = scmp.eq.s32.totalorder %s26, 1
    %p63 = por %p61, %p62
    %p65 = scmp.ne.s32.totalorder %s48, %s64
    %p66 = scmp.eq.s32.totalorder %s26, 0
    %p67 = por %p65, %p66
    %s68 = ssub.s32 %s27, %s39
    %s69 = ssub.s32 %s28, %s35
    %s70 = sor.u32 %s68, %s69
    %p71 = scmp.eq.s32.totalorder %s70, 0
    %s73 = sadd.s32 %s72, 1
    %s74 = scalar_select %p71, %s72, %s73
    %p77 = pneg %p71
    %p78 = scmp.eq.s32.totalorder %s20, 1
    %p79 = por %p77, %p78
    %p80 = scmp.ne.s32.totalorder %s72, %s75
    %p81 = scmp.eq.s32.totalorder %s20, 0
    %p82 = por %p80, %p81
    %p83 = scmp.ne.s32.totalorder %s72, %s75
    %p84 = scmp.eq.s32.totalorder %s25, 1
    %p85 = por %p83, %p84
    %p86 = scmp.ne.s32.totalorder %s75, %s76
    %p87 = scmp.eq.s32.totalorder %s25, 0
    %p88 = por %p86, %p87
    %p89 = scmp.ne.s32.totalorder %s75, %s76
    %p90 = scmp.eq.s32.totalorder %s26, 1
    %p91 = por %p89, %p90
    %p93 = scmp.ne.s32.totalorder %s76, %s92
    %p94 = scmp.eq.s32.totalorder %s26, 0
    %p95 = por %p93, %p94
    %s96 = ssub.s32 %s27, %s39
    %p97 = scmp.eq.s32.totalorder %s96, 0
    %s99 = sadd.s32 %s98, 1
    %s100 = scalar_select %p97, %s98, %s99
    %p103 = pneg %p97
    %p104 = scmp.eq.s32.totalorder %s20, 1
    %p105 = por %p103, %p104
    %p106 = scmp.ne.s32.totalorder %s98, %s101
    %p107 = scmp.eq.s32.totalorder %s20, 0
    %p108 = por %p106, %p107
    %p109 = scmp.ne.s32.totalorder %s98, %s101
    %p110 = scmp.eq.s32.totalorder %s25, 1
    %p111 = por %p109, %p110
    %p112 = scmp.ne.s32.totalorder %s101, %s102
    %p113 = scmp.eq.s32.totalorder %s25, 0
    %p114 = por %p112, %p113
    %p115 = scmp.ne.s32.totalorder %s101, %s102
    %p116 = scmp.eq.s32.totalorder %s26, 1
    %p117 = por %p115, %p116
    %p119 = scmp.ne.s32.totalorder %s102, %s118
    %p120 = scmp.eq.s32.totalorder %s26, 0
    %p121 = por %p119, %p120
    %s122 = ssub.s32 %s27, %s39
    %p123 = scmp.eq.s32.totalorder %s122, 0
    %s125 = sadd.s32 %s124, 1
    %s126 = scalar_select %p123, %s124, %s125
    %p129 = pneg %p123
    %p130 = scmp.eq.s32.totalorder %s20, 1
    %p131 = por %p129, %p130
    %p132 = scmp.ne.s32.totalorder %s124, %s127
    %p133 = scmp.eq.s32.totalorder %s20, 0
    %p134 = por %p132, %p133
    %p135 = scmp.ne.s32.totalorder %s124, %s127
    %p136 = scmp.eq.s32.totalorder %s25, 1
    %p137 = por %p135, %p136
    %p138 = scmp.ne.s32.totalorder %s127, %s128
    %p139 = scmp.eq.s32.totalorder %s25, 0
    %p140 = por %p138, %p139
    %p141 = scmp.ne.s32.totalorder %s127, %s128
    %p142 = scmp.eq.s32.totalorder %s26, 1
    %p143 = por %p141, %p142
    %p145 = scmp.ne.s32.totalorder %s128, %s144
    %p146 = scmp.eq.s32.totalorder %s26, 0
    %p147 = por %p145, %p146
    %s149 = sadd.s32 %s148, 1
    %p152 = scmp.eq.s32.totalorder %s20, 1
    %p153 = scmp.ne.s32.totalorder %s148, %s150
    %p154 = scmp.eq.s32.totalorder %s20, 0
    %p155 = por %p153, %p154
    %p156 = scmp.ne.s32.totalorder %s148, %s150
    %p157 = scmp.eq.s32.totalorder %s25, 1
    %p158 = por %p156, %p157
    %p159 = scmp.ne.s32.totalorder %s150, %s151
    %p160 = scmp.eq.s32.totalorder %s25, 0
    %p161 = por %p159, %p160
    %p162 = scmp.ne.s32.totalorder %s150, %s151
    %p163 = scmp.eq.s32.totalorder %s26, 1
    %p164 = por %p162, %p163
    %p166 = scmp.ne.s32.totalorder %s151, %s165
    %p167 = scmp.eq.s32.totalorder %s26, 0
    %p168 = por %p166, %p167
    %s170 = sadd.s32 %s169, 1
    %p173 = scmp.eq.s32.totalorder %s20, 1
    %p174 = scmp.ne.s32.totalorder %s169, %s171
    %p175 = scmp.eq.s32.totalorder %s20, 0
    %p176 = por %p174, %p175
    %p177 = scmp.ne.s32.totalorder %s169, %s171
    %p178 = scmp.eq.s32.totalorder %s25, 1
    %p179 = por %p177, %p178
    %p180 = scmp.ne.s32.totalorder %s171, %s172
    %p181 = scmp.eq.s32.totalorder %s25, 0
    %p182 = por %p180, %p181
    %p183 = scmp.ne.s32.totalorder %s171, %s172
    %p184 = scmp.eq.s32.totalorder %s26, 1
    %p185 = por %p183, %p184
    %p187 = scmp.ne.s32.totalorder %s172, %s186
    %p188 = scmp.eq.s32.totalorder %s26, 0
    %p189 = por %p187, %p188
    %s191 = sadd.s32 %s190, 1
    %p194 = scmp.eq.s32.totalorder %s20, 1
    %p195 = scmp.ne.s32.totalorder %s190, %s192
    %p196 = scmp.eq.s32.totalorder %s20, 0
    %p197 = por %p195, %p196
    %p198 = scmp.ne.s32.totalorder %s190, %s192
    %p199 = scmp.eq.s32.totalorder %s25, 1
    %p200 = por %p198, %p199
    %p201 = scmp.ne.s32.totalorder %s192, %s193
    %p202 = scmp.eq.s32.totalorder %s25, 0
    %p203 = por %p201, %p202
    %p204 = scmp.ne.s32.totalorder %s192, %s193
    %p205 = scmp.eq.s32.totalorder %s26, 1
    %p206 = por %p204, %p205
    %p208 = scmp.ne.s32.totalorder %s193, %s207
    %p209 = scmp.eq.s32.totalorder %s26, 0
    %p210 = por %p208, %p209
    %s212 = sadd.s32 %s211, 1
    %p215 = scmp.eq.s32.totalorder %s20, 1
    %p216 = scmp.ne.s32.totalorder %s211, %s213
    %p217 = scmp.eq.s32.totalorder %s20, 0
    %p218 = por %p216, %p217
    %p219 = scmp.ne.s32.totalorder %s211, %s213
    %p220 = scmp.eq.s32.totalorder %s25, 1
    %p221 = por %p219, %p220
    %p222 = scmp.ne.s32.totalorder %s213, %s214
    %p223 = scmp.eq.s32.totalorder %s25, 0
    %p224 = por %p222, %p223
    %p225 = scmp.ne.s32.totalorder %s213, %s214
    %p226 = scmp.eq.s32.totalorder %s26, 1
    %p227 = por %p225, %p226
    %p229 = scmp.ne.s32.totalorder %s214, %s228
    %p230 = scmp.eq.s32.totalorder %s26, 0
    %p231 = por %p229, %p230
    %s233 = sadd.s32 %s232, 1
    %p236 = scmp.eq.s32.totalorder %s20, 1
    %p237 = scmp.ne.s32.totalorder %s232, %s234
    %p238 = scmp.eq.s32.totalorder %s20, 0
    %p239 = por %p237, %p238
    %p240 = scmp.ne.s32.totalorder %s232, %s234
    %p241 = scmp.eq.s32.totalorder %s25, 1
    %p242 = por %p240, %p241
    %p243 = scmp.ne.s32.totalorder %s234, %s235
    %p244 = scmp.eq.s32.totalorder %s25, 0
    %p245 = por %p243, %p244
    %p246 = scmp.ne.s32.totalorder %s234, %s235
    %p247 = scmp.eq.s32.totalorder %s26, 1
    %p248 = por %p246, %p247
    %p250 = scmp.ne.s32.totalorder %s235, %s249
    %p251 = scmp.eq.s32.totalorder %s26, 0
    %p252 = por %p250, %p251
    %s254 = sadd.s32 %s253, 1
    %p257 = scmp.eq.s32.totalorder %s20, 1
    %p258 = scmp.ne.s32.totalorder %s253, %s255
    %p259 = scmp.eq.s32.totalorder %s20, 0
    %p260 = por %p258, %p259
    %p261 = scmp.ne.s32.totalorder %s253, %s255
    %p262 = scmp.eq.s32.totalorder %s25, 1
    %p263 = por %p261, %p262
    %p264 = scmp.ne.s32.totalorder %s255, %s256
    %p265 = scmp.eq.s32.totalorder %s25, 0
    %p266 = por %p264, %p265
    %p267 = scmp.ne.s32.totalorder %s255, %s256
    %p268 = scmp.eq.s32.totalorder %s26, 1
    %p269 = por %p267, %p268
    %p271 = scmp.ne.s32.totalorder %s256, %s270
    %p272 = scmp.eq.s32.totalorder %s26, 0
    %p273 = por %p271, %p272
    %s275 = sadd.s32 %s274, 1
    %p278 = scmp.eq.s32.totalorder %s20, 1
    %p279 = scmp.ne.s32.totalorder %s274, %s276
    %p280 = scmp.eq.s32.totalorder %s20, 0
    %p281 = por %p279, %p280
    %p282 = scmp.ne.s32.totalorder %s274, %s276
    %p283 = scmp.eq.s32.totalorder %s25, 1
    %p284 = por %p282, %p283
    %p285 = scmp.ne.s32.totalorder %s276, %s277
    %p286 = scmp.eq.s32.totalorder %s25, 0
    %p287 = por %p285, %p286
    %p288 = scmp.ne.s32.totalorder %s276, %s277
    %p289 = scmp.eq.s32.totalorder %s26, 1
    %p290 = por %p288, %p289
    %p292 = scmp.ne.s32.totalorder %s277, %s291
    %p293 = scmp.eq.s32.totalorder %s26, 0
    %p294 = por %p292, %p293
    %s296 = sadd.s32 %s295, 1
    %p299 = scmp.eq.s32.totalorder %s20, 1
    %p300 = scmp.ne.s32.totalorder %s295, %s297
    %p301 = scmp.eq.s32.totalorder %s20, 0
    %p302 = por %p300, %p301
    %p303 = scmp.ne.s32.totalorder %s295, %s297
    %p304 = scmp.eq.s32.totalorder %s25, 1
    %p305 = por %p303, %p304
    %p306 = scmp.ne.s32.totalorder %s297, %s298
    %p307 = scmp.eq.s32.totalorder %s25, 0
    %p308 = por %p306, %p307
    %p309 = scmp.ne.s32.totalorder %s297, %s298
    %p310 = scmp.eq.s32.totalorder %s26, 1
    %p311 = por %p309, %p310
    %p313 = scmp.ne.s32.totalorder %s298, %s312
    %p314 = scmp.eq.s32.totalorder %s26, 0
    %p315 = por %p313, %p314
    %s317 = sadd.s32 %s316, 1
    %p320 = scmp.eq.s32.totalorder %s20, 1
    %p321 = scmp.ne.s32.totalorder %s316, %s318
    %p322 = scmp.eq.s32.totalorder %s20, 0
    %p323 = por %p321, %p322
    %p324 = scmp.ne.s32.totalorder %s316, %s318
    %p325 = scmp.eq.s32.totalorder %s25, 1
    %p326 = por %p324, %p325
    %p327 = scmp.ne.s32.totalorder %s318, %s319
    %p328 = scmp.eq.s32.totalorder %s25, 0
    %p329 = por %p327, %p328
    %p330 = scmp.ne.s32.totalorder %s318, %s319
    %p331 = scmp.eq.s32.totalorder %s26, 1
    %p332 = por %p330, %p331
    %p334 = scmp.ne.s32.totalorder %s319, %s333
    %p335 = scmp.eq.s32.totalorder %s26, 0
    %p336 = por %p334, %p335
    %s338 = sadd.s32 %s337, 1
    %p341 = scmp.eq.s32.totalorder %s20, 1
    %p342 = scmp.ne.s32.totalorder %s337, %s339
    %p343 = scmp.eq.s32.totalorder %s20, 0
    %p344 = por %p342, %p343
    %p345 = scmp.ne.s32.totalorder %s337, %s339
    %p346 = scmp.eq.s32.totalorder %s25, 1
    %p347 = por %p345, %p346
    %p348 = scmp.ne.s32.totalorder %s339, %s340
    %p349 = scmp.eq.s32.totalorder %s25, 0
    %p350 = por %p348, %p349
    %p351 = scmp.ne.s32.totalorder %s339, %s340
    %p352 = scmp.eq.s32.totalorder %s26, 1
    %p353 = por %p351, %p352
    %p355 = scmp.ne.s32.totalorder %s340, %s354
    %p356 = scmp.eq.s32.totalorder %s26, 0
    %p357 = por %p355, %p356
    %s358 = ssub.s32 %s27, %s39
    %s359 = ssub.s32 %s28, %s35
    %s360 = sor.u32 %s358, %s359
    %p361 = scmp.eq.s32.totalorder %s360, 0
    %s363 = sadd.s32 %s362, 1
    %s364 = scalar_select %p361, %s362, %s363
    %p367 = pneg %p361
    %p368 = scmp.eq.s32.totalorder %s20, 1
    %p369 = por %p367, %p368
    %p370 = scmp.ne.s32.totalorder %s362, %s365
    %p371 = scmp.eq.s32.totalorder %s20, 0
    %p372 = por %p370, %p371
    %p373 = scmp.ne.s32.totalorder %s362, %s365
    %p374 = scmp.eq.s32.totalorder %s25, 1
    %p375 = por %p373, %p374
    %p376 = scmp.ne.s32.totalorder %s365, %s366
    %p377 = scmp.eq.s32.totalorder %s25, 0
    %p378 = por %p376, %p377
    %p379 = scmp.ne.s32.totalorder %s365, %s366
    %p380 = scmp.eq.s32.totalorder %s26, 1
    %p381 = por %p379, %p380
    %p383 = scmp.ne.s32.totalorder %s366, %s382
    %p384 = scmp.eq.s32.totalorder %s26, 0
    %p385 = por %p383, %p384
    %p386 = scmp.le.s32.totalorder 1, %s20
    %p387 = scmp.lt.s32.totalorder %s20, 3
    %p388 = pnand %p386, %p387
    %p389 = pneg %p388
    // Predicated region
    $region9: #{transformer_encoder.7} parent=5 // pred_check
      _
    $region10: #{transformer_encoder.7} parent=5 // pred_check_branch
      %391 = sbr.rel (%p388) target = $region12
    $region11: #{transformer_encoder.7} parent=5 // pred_region
      %s392 = ssub.s32 %s20, 1
      // Predicated region
      $region13: #{transformer_encoder.7} parent=11 // pred_check
        %p393 = pneg %p161
      $region14: #{transformer_encoder.7} parent=11 // pred_check_branch
        %395 = sbr.rel (%p393) target = $region16
      $region15: #{transformer_encoder.7} parent=11 // pred_region
        _
      $region16: #{transformer_encoder.7} parent=11 // pred_fallthru
        _
      // Predicated region
      $region17: #{transformer_encoder.7} parent=11 // pred_check
        %p396 = pneg %p182
      $region18: #{transformer_encoder.7} parent=11 // pred_check_branch
        %398 = sbr.rel (%p396) target = $region20
      $region19: #{transformer_encoder.7} parent=11 // pred_region
        _
      $region20: #{transformer_encoder.7} parent=11 // pred_fallthru
        _
      // Predicated region
      $region21: #{transformer_encoder.7} parent=11 // pred_check
        %p399 = pneg %p203
      $region22: #{transformer_encoder.7} parent=11 // pred_check_branch
        %401 = sbr.rel (%p399) target = $region24
      $region23: #{transformer_encoder.7} parent=11 // pred_region
        _
      $region24: #{transformer_encoder.7} parent=11 // pred_fallthru
        _
      // Predicated region
      $region25: #{transformer_encoder.7} parent=11 // pred_check
        %p402 = pneg %p224
      $region26: #{transformer_encoder.7} parent=11 // pred_check_branch
        %404 = sbr.rel (%p402) target = $region28
      $region27: #{transformer_encoder.7} parent=11 // pred_region
        _
      $region28: #{transformer_encoder.7} parent=11 // pred_fallthru
        _
      // Predicated region
      $region29: #{transformer_encoder.7} parent=11 // pred_check
        %p405 = pneg %p245
      $region30: #{transformer_encoder.7} parent=11 // pred_check_branch
        %407 = sbr.rel (%p405) target = $region32
      $region31: #{transformer_encoder.7} parent=11 // pred_region
        _
      $region32: #{transformer_encoder.7} parent=11 // pred_fallthru
        _
      // Predicated region
      $region33: #{transformer_encoder.7} parent=11 // pred_check
        %p408 = pneg %p266
      $region34: #{transformer_encoder.7} parent=11 // pred_check_branch
        %410 = sbr.rel (%p408) target = $region36
      $region35: #{transformer_encoder.7} parent=11 // pred_region
        _
      $region36: #{transformer_encoder.7} parent=11 // pred_fallthru
        _
      // Predicated region
      $region37: #{transformer_encoder.7} parent=11 // pred_check
        %p411 = pneg %p287
      $region38: #{transformer_encoder.7} parent=11 // pred_check_branch
        %413 = sbr.rel (%p411) target = $region40
      $region39: #{transformer_encoder.7} parent=11 // pred_region
        _
      $region40: #{transformer_encoder.7} parent=11 // pred_fallthru
        _
      // Predicated region
      $region41: #{transformer_encoder.7} parent=11 // pred_check
        %p414 = pneg %p308
      $region42: #{transformer_encoder.7} parent=11 // pred_check_branch
        %416 = sbr.rel (%p414) target = $region44
      $region43: #{transformer_encoder.7} parent=11 // pred_region
        _
      $region44: #{transformer_encoder.7} parent=11 // pred_fallthru
        _
      // Predicated region
      $region45: #{transformer_encoder.7} parent=11 // pred_check
        %p417 = pneg %p329
      $region46: #{transformer_encoder.7} parent=11 // pred_check_branch
        %419 = sbr.rel (%p417) target = $region48
      $region47: #{transformer_encoder.7} parent=11 // pred_region
        _
      $region48: #{transformer_encoder.7} parent=11 // pred_fallthru
        _
      // Predicated region
      $region49: #{transformer_encoder.7} parent=11 // pred_check
        %p420 = pneg %p350
      $region50: #{transformer_encoder.7} parent=11 // pred_check_branch
        %422 = sbr.rel (%p420) target = $region52
      $region51: #{transformer_encoder.7} parent=11 // pred_region
        _
      $region52: #{transformer_encoder.7} parent=11 // pred_fallthru
        _
    $region12: #{transformer_encoder.7} parent=5 // pred_fallthru
      _
    %p423 = scmp.lt.s32.totalorder %s20, 2
    // Predicated region
    $region53: #{transformer_encoder.7} parent=5 // pred_check
      %p424 = pneg %p423
    $region54: #{transformer_encoder.7} parent=5 // pred_check_branch
      %426 = sbr.rel (%p424) target = $region56
    $region55: #{transformer_encoder.7} parent=5 // pred_region
      // Predicated region
      $region57: #{transformer_encoder.7} parent=55 // pred_check
        %p427 = pneg %p54
      $region58: #{transformer_encoder.7} parent=55 // pred_check_branch
        %429 = sbr.rel (%p427) target = $region60
      $region59: #{transformer_encoder.7} parent=55 // pred_region
        %p430 = scmp.lt.s32.totalorder %s27, 1
        %s431 = scalar_select %p430, %s27, 1
        %p432 = scmp.lt.s32.totalorder %s28, 0
        %s433 = scalar_select %p432, %s28, 0
        %s434 = sadd.s32 %s433, %s431
        %s435 = smul.addr %s434, 8
        %s436 = scalar_lea.vmem %s0, %s435
      $region60: #{transformer_encoder.7} parent=55 // pred_fallthru
        _
      // Predicated region
      $region61: #{transformer_encoder.7} parent=55 // pred_check
        %p437 = pneg %p82
      $region62: #{transformer_encoder.7} parent=55 // pred_check_branch
        %439 = sbr.rel (%p437) target = $region64
      $region63: #{transformer_encoder.7} parent=55 // pred_region
        %p440 = scmp.lt.s32.totalorder %s27, 1
        %s441 = scalar_select %p440, %s27, 1
        %p442 = scmp.lt.s32.totalorder %s28, 0
        %s443 = scalar_select %p442, %s28, 0
        %s444 = sadd.s32 %s443, %s441
        %s445 = smul.addr %s444, 4
        %s446 = scalar_lea.vmem %s1, %s445
      $region64: #{transformer_encoder.7} parent=55 // pred_fallthru
        _
      // Predicated region
      $region65: #{transformer_encoder.7} parent=55 // pred_check
        %p447 = pneg %p108
      $region66: #{transformer_encoder.7} parent=55 // pred_check_branch
        %449 = sbr.rel (%p447) target = $region68
      $region67: #{transformer_encoder.7} parent=55 // pred_region
        %p450 = scmp.lt.s32.totalorder %s27, 1
        %s451 = scalar_select %p450, %s27, 1
        %s452 = smul.addr %s451, 4
        %s453 = scalar_lea.vmem %s2, %s452
      $region68: #{transformer_encoder.7} parent=55 // pred_fallthru
        _
      // Predicated region
      $region69: #{transformer_encoder.7} parent=55 // pred_check
        %p454 = pneg %p134
      $region70: #{transformer_encoder.7} parent=55 // pred_check_branch
        %456 = sbr.rel (%p454) target = $region72
      $region71: #{transformer_encoder.7} parent=55 // pred_region
        %p457 = scmp.lt.s32.totalorder %s27, 1
        %s458 = scalar_select %p457, %s27, 1
        %s459 = smul.addr %s458, 4
        %s460 = scalar_lea.vmem %s3, %s459
      $region72: #{transformer_encoder.7} parent=55 // pred_fallthru
        _
    $region56: #{transformer_encoder.7} parent=5 // pred_fallthru
      _
    %p461 = scmp.le.s32.totalorder 1, %s20
    %p462 = scmp.lt.s32.totalorder %s20, 3
    %p463 = pnand %p461, %p462
    %p464 = pneg %p463
    // Predicated region
    $region73: #{transformer_encoder.7} parent=5 // pred_check
      _
    $region74: #{transformer_encoder.7} parent=5 // pred_check_branch
      %466 = sbr.rel (%p463) target = $region76
    $region75: #{transformer_encoder.7} parent=5 // pred_region
      %s467 = ssub.s32 %s20, 1
      %p468 = scmp.lt.s32.totalorder %s29, 1
      %s469 = scalar_select %p468, %s29, 1
      %p470 = scmp.lt.s32.totalorder %s30, 0
      %s471 = scalar_select %p470, %s30, 0
      %s472 = sadd.s32 %s471, %s469
      %s473 = smul.addr %s472, 8
      %s474 = scalar_lea.vmem %s0, %s473
      %p475 = pneg %p60
      %p476 = pneg %p57
      %p477 = scmp.lt.s32.totalorder %s29, 1
      %s478 = scalar_select %p477, %s29, 1
      %p479 = scmp.lt.s32.totalorder %s30, 0
      %s480 = scalar_select %p479, %s30, 0
      %s481 = sadd.s32 %s480, %s478
      %s482 = smul.addr %s481, 4
      %s483 = scalar_lea.vmem %s1, %s482
      %p484 = pneg %p88
      %p485 = pneg %p85
      %p486 = scmp.lt.s32.totalorder %s29, 1
      %s487 = scalar_select %p486, %s29, 1
      %s488 = smul.addr %s487, 4
      %s489 = scalar_lea.vmem %s2, %s488
      %p490 = pneg %p114
      %p491 = pneg %p111
      %p492 = scmp.lt.s32.totalorder %s29, 1
      %s493 = scalar_select %p492, %s29, 1
      %s494 = smul.addr %s493, 4
      %s495 = scalar_lea.vmem %s3, %s494
      %p496 = pneg %p140
      %p497 = pneg %p137
      %p498 = pneg %p161
      %p499 = pneg %p158
      %p500 = pneg %p182
      %p501 = pneg %p179
      %p502 = pneg %p203
      %p503 = pneg %p200
      %p504 = pneg %p224
      %p505 = pneg %p221
      %p506 = pneg %p245
      %p507 = pneg %p242
      %p508 = pneg %p266
      %p509 = pneg %p263
      %p510 = pneg %p287
      %p511 = pneg %p284
      %p512 = pneg %p308
      %p513 = pneg %p305
      %p514 = pneg %p329
      %p515 = pneg %p326
      %p516 = pneg %p350
      %p517 = pneg %p347
      %p518 = pneg %p378
      %p519 = pneg %p375
      %p520 = scmp.lt.s32.totalorder %s29, 1
      %s521 = scalar_select %p520, %s29, 1
      %p522 = scmp.lt.s32.totalorder %s30, 0
      %s523 = scalar_select %p522, %s30, 0
      %s524 = sadd.s32 %s523, %s521
      %s525 = smul.addr %s524, 8
      %s526 = scalar_lea.vmem %s14, %s525
      %p527 = scmp.lt.s32.totalorder %s29, 1
      %s528 = scalar_select %p527, %s29, 1
      %p529 = scmp.lt.s32.totalorder %s30, 0
      %s530 = scalar_select %p529, %s30, 0
      %s531 = sadd.s32 %s530, %s528
      %s532 = smul.addr %s531, 8
      %s533 = scalar_lea.vmem %s0, %s532
      %p534 = scmp.lt.s32.totalorder %s29, 1
      %s535 = scalar_select %p534, %s29, 1
      %p536 = scmp.lt.s32.totalorder %s30, 0
      %s537 = scalar_select %p536, %s30, 0
      %s538 = sadd.s32 %s537, %s535
      %s539 = smul.addr %s538, 4
      %s540 = scalar_lea.vmem %s1, %s539
      %p541 = scmp.lt.s32.totalorder %s29, 1
      %s542 = scalar_select %p541, %s29, 1
      %s543 = smul.addr %s542, 4
      %s544 = scalar_lea.vmem %s2, %s543
      %p545 = scmp.lt.s32.totalorder %s29, 1
      %s546 = scalar_select %p545, %s29, 1
      %s547 = smul.addr %s546, 4
      %s548 = scalar_lea.vmem %s3, %s547
      %p549 = scmp.lt.s32.totalorder %s29, 1
      %s550 = scalar_select %p549, %s29, 1
      %p551 = scmp.lt.s32.totalorder %s30, 0
      %s552 = scalar_select %p551, %s30, 0
      %s553 = sadd.s32 %s552, %s550
      %s554 = smul.addr %s553, 8
      %s555 = scalar_lea.vmem %s14, %s554
      %v557 = vld [vmem:[%s540] sm:$0xf]
      %v558 = vld [vmem:[%s544] sm:$0xf]
      %v559 = vld [vmem:[%s548] sm:$0xf]
      %vm560 = vcmask 64512
      %v562 = vsel %vm560, %v557, 0
      %v565 = vsel %vm560, %v558, 0
      %567 = vmatprep.subr.bf16.mxu0 0
      %568 = vmatpush1.bf16.xpose.msra.mxu0 %v565
      %569 = vmatprep.subr.bf16.mxu0 0
      %570 = vmatpush1.bf16.xpose.msra.mxu0 0
      %571 = vmatprep.subr.bf16.mxu0 0
      %572 = vmatpush1.bf16.xpose.msra.mxu0 0
      %573 = vmatprep.subr.bf16.mxu0 0
      %574 = vmatpush1.bf16.xpose.msra.mxu0 0
      %575 = vmatprep.subr.bf16.mxu0 0
      %576 = vmatpush1.bf16.xpose.msra.mxu0 0
      %577 = vmatprep.subr.bf16.mxu0 0
      %578 = vmatpush1.bf16.xpose.msra.mxu0 0
      %579 = vmatprep.subr.bf16.mxu0 0
      %580 = vmatpush1.bf16.xpose.msra.mxu0 0
      %581 = vmatprep.subr.bf16.mxu0 0
      %582 = vmatpush1.bf16.xpose.msra.mxu0 0
      %583 = vmatprep.subr.bf16.mxu0 0
      %584 = vmatpush1.bf16.xpose.msra.mxu0 0
      %585 = vmatprep.subr.bf16.mxu0 0
      %586 = vmatpush1.bf16.xpose.msra.mxu0 0
      %587 = vmatprep.subr.bf16.mxu0 0
      %588 = vmatpush1.bf16.xpose.msra.mxu0 0
      %589 = vmatprep.subr.bf16.mxu0 0
      %590 = vmatpush1.bf16.xpose.msra.mxu0 0
      %591 = vmatprep.subr.bf16.mxu0 0
      %592 = vmatpush1.bf16.xpose.msra.mxu0 0
      %593 = vmatprep.subr.bf16.mxu0 0
      %594 = vmatpush1.bf16.xpose.msra.mxu0 0
      %595 = vmatprep.subr.bf16.mxu0 0
      %596 = vmatpush1.bf16.xpose.msra.mxu0 0
      %597 = vmatprep.subr.bf16.mxu0 0
      %598 = vmatpush1.bf16.xpose.msra.mxu0 0
      %599 = vmatprep.mubr.bf16.mxu0 0
      %600 = vmatmul.mubr.bf16.gmra.mrb[0].mxu0 %v562
      %v601 = vpop.f32.mrb[0].mxu0
      %v602 = vadd.f32 0.0, %v601
      %v603 = vpop.f32.mrb[0].mxu0
      %v604 = vpop.f32.mrb[0].mxu0
      %v605 = vpop.f32.mrb[0].mxu0
      %606 = vdwg.mxu0
      %v607 = vsel %vm560, %v602, -inf
      %608 = vmax.xlane.f32.xlu0 %v607
      %v609 = vpop.xlane.xlu0 %608
      %v610 = vsub.f32 %v602, %v609
      %v611 = vmul.f32 %v610, 1.442695
      %v612 = vpow.pop %v611
      %v613 = vsel %vm560, %v612, 0.0
      %614 = vadd.xlane.f32.xlu0 %v613
      %v615 = vpop.xlane.xlu0 %614
      %v616 = vrcp.pop %v615
      %v617 = vmul.f32 %v612, %v616
      %v618 = vpack.c.bf16 %v617, %v617
      %v620 = vsel %vm560, %v618, 0
      %vm622 = vcmask 1043456
      %v624 = vsel %vm622, %v559, 0
      %626 = vmatprep.subr.bf16.mxu0 0
      %627 = vmatpush1.bf16.msra.mxu0 %v624
      %628 = vmatprep.subr.bf16.mxu0 0
      %629 = vmatpush1.bf16.msra.mxu0 0
      %630 = vmatprep.subr.bf16.mxu0 0
      %631 = vmatpush1.bf16.msra.mxu0 0
      %632 = vmatprep.subr.bf16.mxu0 0
      %633 = vmatpush1.bf16.msra.mxu0 0
      %634 = vmatprep.subr.bf16.mxu0 0
      %635 = vmatpush1.bf16.msra.mxu0 0
      %636 = vmatprep.subr.bf16.mxu0 0
      %637 = vmatpush1.bf16.msra.mxu0 0
      %638 = vmatprep.subr.bf16.mxu0 0
      %639 = vmatpush1.bf16.msra.mxu0 0
      %640 = vmatprep.subr.bf16.mxu0 0
      %641 = vmatpush1.bf16.msra.mxu0 0
      %642 = vmatprep.subr.bf16.mxu0 0
      %643 = vmatpush1.bf16.msra.mxu0 0
      %644 = vmatprep.subr.bf16.mxu0 0
      %645 = vmatpush1.bf16.msra.mxu0 0
      %646 = vmatprep.subr.bf16.mxu0 0
      %647 = vmatpush1.bf16.msra.mxu0 0
      %648 = vmatprep.subr.bf16.mxu0 0
      %649 = vmatpush1.bf16.msra.mxu0 0
      %650 = vmatprep.subr.bf16.mxu0 0
      %651 = vmatpush1.bf16.msra.mxu0 0
      %652 = vmatprep.subr.bf16.mxu0 0
      %653 = vmatpush1.bf16.msra.mxu0 0
      %654 = vmatprep.subr.bf16.mxu0 0
      %655 = vmatpush1.bf16.msra.mxu0 0
      %656 = vmatprep.subr.bf16.mxu0 0
      %657 = vmatpush1.bf16.msra.mxu0 0
      %658 = vmatprep.mubr.bf16.mxu0 0
      %659 = vmatmul.mubr.bf16.gmra.mrb[0].mxu0 %v620
      %v660 = vpop.f32.mrb[0].mxu0
      %v661 = vadd.f32 0.0, %v660
      %v662 = vpop.f32.mrb[0].mxu0
      %v663 = vpop.f32.mrb[0].mxu0
      %v664 = vpop.f32.mrb[0].mxu0
      %665 = vdwg.mxu0
      %v666 = vpack.c.bf16 %v661, %v661
      %v667 = vld [vmem:[%s4] sm:$0xf]
      %v669 = vunpack.c.l.b16 %v557
      %v670 = vpack.c.b16 %v669, %v669
      %671 = vrot.lane.b32.xlu0 %v670, 120
      %v672 = vpop.permute.xlu0 %671
      %v674 = vunpack.c.l.b16 %v558
      %v675 = vpack.c.b16 %v674, %v674
      %676 = vrot.lane.b32.xlu0 %v675, 120
      %v677 = vpop.permute.xlu0 %676
      %v679 = vsel %vm560, %v672, 0
      %v682 = vsel %vm560, %v677, 0
      %684 = vmatprep.subr.bf16.mxu0 0
      %685 = vmatpush1.bf16.xpose.msra.mxu0 %v682
      %686 = vmatprep.subr.bf16.mxu0 0
      %687 = vmatpush1.bf16.xpose.msra.mxu0 0
      %688 = vmatprep.subr.bf16.mxu0 0
      %689 = vmatpush1.bf16.xpose.msra.mxu0 0
      %690 = vmatprep.subr.bf16.mxu0 0
      %691 = vmatpush1.bf16.xpose.msra.mxu0 0
      %692 = vmatprep.subr.bf16.mxu0 0
      %693 = vmatpush1.bf16.xpose.msra.mxu0 0
      %694 = vmatprep.subr.bf16.mxu0 0
      %695 = vmatpush1.bf16.xpose.msra.mxu0 0
      %696 = vmatprep.subr.bf16.mxu0 0
      %697 = vmatpush1.bf16.xpose.msra.mxu0 0
      %698 = vmatprep.subr.bf16.mxu0 0
      %699 = vmatpush1.bf16.xpose.msra.mxu0 0
      %700 = vmatprep.subr.bf16.mxu0 0
      %701 = vmatpush1.bf16.xpose.msra.mxu0 0
      %702 = vmatprep.subr.bf16.mxu0 0
      %703 = vmatpush1.bf16.xpose.msra.mxu0 0
      %704 = vmatprep.subr.bf16.mxu0 0
      %705 = vmatpush1.bf16.xpose.msra.mxu0 0
      %706 = vmatprep.subr.bf16.mxu0 0
      %707 = vmatpush1.bf16.xpose.msra.mxu0 0
      %708 = vmatprep.subr.bf16.mxu0 0
      %709 = vmatpush1.bf16.xpose.msra.mxu0 0
      %710 = vmatprep.subr.bf16.mxu0 0
      %711 = vmatpush1.bf16.xpose.msra.mxu0 0
      %712 = vmatprep.subr.bf16.mxu0 0
      %713 = vmatpush1.bf16.xpose.msra.mxu0 0
      %714 = vmatprep.subr.bf16.mxu0 0
      %715 = vmatpush1.bf16.xpose.msra.mxu0 0
      %716 = vmatprep.mubr.bf16.mxu0 0
      %717 = vmatmul.mubr.bf16.gmra.mrb[0].mxu0 %v679
      %v718 = vpop.f32.mrb[0].mxu0
      %v719 = vadd.f32 0.0, %v718
      %v720 = vpop.f32.mrb[0].mxu0
      %v721 = vpop.f32.mrb[0].mxu0
      %v722 = vpop.f32.mrb[0].mxu0
      %723 = vdwg.mxu0
      %v724 = vsel %vm560, %v719, -inf
      %725 = vmax.xlane.f32.xlu0 %v724
      %v726 = vpop.xlane.xlu0 %725
      %v727 = vsub.f32 %v719, %v726
      %v728 = vmul.f32 %v727, 1.442695
      %v729 = vpow.pop %v728
      %v730 = vsel %vm560, %v729, 0.0
      %731 = vadd.xlane.f32.xlu0 %v730
      %v732 = vpop.xlane.xlu0 %731
      %v733 = vrcp.pop %v732
      %v734 = vmul.f32 %v729, %v733
      %v735 = vpack.c.bf16 %v734, %v734
      %v737 = vunpack.c.l.b16 %v559
      %v738 = vpack.c.b16 %v737, %v737
      %739 = vrot.lane.b32.xlu0 %v738, 120
      %v740 = vpop.permute.xlu0 %739
      %v742 = vsel %vm560, %v735, 0
      %v745 = vsel %vm622, %v740, 0
      %747 = vmatprep.subr.bf16.mxu0 0
      %748 = vmatpush1.bf16.msra.mxu0 %v745
      %749 = vmatprep.subr.bf16.mxu0 0
      %750 = vmatpush1.bf16.msra.mxu0 0
      %751 = vmatprep.subr.bf16.mxu0 0
      %752 = vmatpush1.bf16.msra.mxu0 0
      %753 = vmatprep.subr.bf16.mxu0 0
      %754 = vmatpush1.bf16.msra.mxu0 0
      %755 = vmatprep.subr.bf16.mxu0 0
      %756 = vmatpush1.bf16.msra.mxu0 0
      %757 = vmatprep.subr.bf16.mxu0 0
      %758 = vmatpush1.bf16.msra.mxu0 0
      %759 = vmatprep.subr.bf16.mxu0 0
      %760 = vmatpush1.bf16.msra.mxu0 0
      %761 = vmatprep.subr.bf16.mxu0 0
      %762 = vmatpush1.bf16.msra.mxu0 0
      %763 = vmatprep.subr.bf16.mxu0 0
      %764 = vmatpush1.bf16.msra.mxu0 0
      %765 = vmatprep.subr.bf16.mxu0 0
      %766 = vmatpush1.bf16.msra.mxu0 0
      %767 = vmatprep.subr.bf16.mxu0 0
      %768 = vmatpush1.bf16.msra.mxu0 0
      %769 = vmatprep.subr.bf16.mxu0 0
      %770 = vmatpush1.bf16.msra.mxu0 0
      %771 = vmatprep.subr.bf16.mxu0 0
      %772 = vmatpush1.bf16.msra.mxu0 0
      %773 = vmatprep.subr.bf16.mxu0 0
      %774 = vmatpush1.bf16.msra.mxu0 0
      %775 = vmatprep.subr.bf16.mxu0 0
      %776 = vmatpush1.bf16.msra.mxu0 0
      %777 = vmatprep.subr.bf16.mxu0 0
      %778 = vmatpush1.bf16.msra.mxu0 0
      %779 = vmatprep.mubr.bf16.mxu0 0
      %780 = vmatmul.mubr.bf16.gmra.mrb[0].mxu0 %v742
      %v781 = vpop.f32.mrb[0].mxu0
      %v782 = vadd.f32 0.0, %v781
      %v783 = vpop.f32.mrb[0].mxu0
      %v784 = vpop.f32.mrb[0].mxu0
      %v785 = vpop.f32.mrb[0].mxu0
      %786 = vdwg.mxu0
      %v787 = vpack.c.bf16 %v782, %v782
      %v788 = vld [vmem:[%s4 + $0x4] sm:$0xf]
      %v790 = vsel %vm560, %v787, 0
      %v793 = vsel %vm622, %v788, 0
      %795 = vmatprep.subr.bf16.mxu0 0
      %796 = vmatpush1.bf16.msra.mxu0 %v793
      %797 = vmatprep.subr.bf16.mxu0 0
      %798 = vmatpush1.bf16.msra.mxu0 0
      %799 = vmatprep.subr.bf16.mxu0 0
      %800 = vmatpush1.bf16.msra.mxu0 0
      %801 = vmatprep.subr.bf16.mxu0 0
      %802 = vmatpush1.bf16.msra.mxu0 0
      %803 = vmatprep.subr.bf16.mxu0 0
      %804 = vmatpush1.bf16.msra.mxu0 0
      %805 = vmatprep.subr.bf16.mxu0 0
      %806 = vmatpush1.bf16.msra.mxu0 0
      %807 = vmatprep.subr.bf16.mxu0 0
      %808 = vmatpush1.bf16.msra.mxu0 0
      %809 = vmatprep.subr.bf16.mxu0 0
      %810 = vmatpush1.bf16.msra.mxu0 0
      %811 = vmatprep.subr.bf16.mxu0 0
      %812 = vmatpush1.bf16.msra.mxu0 0
      %813 = vmatprep.subr.bf16.mxu0 0
      %814 = vmatpush1.bf16.msra.mxu0 0
      %815 = vmatprep.subr.bf16.mxu0 0
      %816 = vmatpush1.bf16.msra.mxu0 0
      %817 = vmatprep.subr.bf16.mxu0 0
      %818 = vmatpush1.bf16.msra.mxu0 0
      %819 = vmatprep.subr.bf16.mxu0 0
      %820 = vmatpush1.bf16.msra.mxu0 0
      %821 = vmatprep.subr.bf16.mxu0 0
      %822 = vmatpush1.bf16.msra.mxu0 0
      %823 = vmatprep.subr.bf16.mxu0 0
      %824 = vmatpush1.bf16.msra.mxu0 0
      %825 = vmatprep.subr.bf16.mxu0 0
      %826 = vmatpush1.bf16.msra.mxu0 0
      %827 = vmatprep.mubr.bf16.mxu0 0
      %828 = vmatmul.mubr.bf16.gmra.mrb[0].mxu0 %v790
      %v829 = vpop.f32.mrb[0].mxu0
      %v830 = vadd.f32 0.0, %v829
      %v831 = vpop.f32.mrb[0].mxu0
      %v832 = vpop.f32.mrb[0].mxu0
      %v833 = vpop.f32.mrb[0].mxu0
      %834 = vdwg.mxu0
      %v836 = vsel %vm560, %v666, 0
      %v839 = vsel %vm622, %v667, 0
      %841 = vmatprep.subr.bf16.mxu0 0
      %842 = vmatpush1.bf16.msra.mxu0 %v839
      %843 = vmatprep.subr.bf16.mxu0 0
      %844 = vmatpush1.bf16.msra.mxu0 0
      %845 = vmatprep.subr.bf16.mxu0 0
      %846 = vmatpush1.bf16.msra.mxu0 0
      %847 = vmatprep.subr.bf16.mxu0 0
      %848 = vmatpush1.bf16.msra.mxu0 0
      %849 = vmatprep.subr.bf16.mxu0 0
      %850 = vmatpush1.bf16.msra.mxu0 0
      %851 = vmatprep.subr.bf16.mxu0 0
      %852 = vmatpush1.bf16.msra.mxu0 0
      %853 = vmatprep.subr.bf16.mxu0 0
      %854 = vmatpush1.bf16.msra.mxu0 0
      %855 = vmatprep.subr.bf16.mxu0 0
      %856 = vmatpush1.bf16.msra.mxu0 0
      %857 = vmatprep.subr.bf16.mxu0 0
      %858 = vmatpush1.bf16.msra.mxu0 0
      %859 = vmatprep.subr.bf16.mxu0 0
      %860 = vmatpush1.bf16.msra.mxu0 0
      %861 = vmatprep.subr.bf16.mxu0 0
      %862 = vmatpush1.bf16.msra.mxu0 0
      %863 = vmatprep.subr.bf16.mxu0 0
      %864 = vmatpush1.bf16.msra.mxu0 0
      %865 = vmatprep.subr.bf16.mxu0 0
      %866 = vmatpush1.bf16.msra.mxu0 0
      %867 = vmatprep.subr.bf16.mxu0 0
      %868 = vmatpush1.bf16.msra.mxu0 0
      %869 = vmatprep.subr.bf16.mxu0 0
      %870 = vmatpush1.bf16.msra.mxu0 0
      %871 = vmatprep.subr.bf16.mxu0 0
      %872 = vmatpush1.bf16.msra.mxu0 0
      %873 = vmatprep.mubr.bf16.mxu0 0
      %874 = vmatmul.mubr.bf16.gmra.mrb[0].mxu0 %v836
      %v875 = vpop.f32.mrb[0].mxu0
      %v876 = vadd.f32 %v830, %v875
      %v877 = vpop.f32.mrb[0].mxu0
      %v878 = vpop.f32.mrb[0].mxu0
      %v879 = vpop.f32.mrb[0].mxu0
      %880 = vdwg.mxu0
      %881 = vrot.lane.b32.xlu0 %v670, 112
      %v882 = vpop.permute.xlu0 %881
      %883 = vrot.lane.b32.xlu0 %v675, 112
      %v884 = vpop.permute.xlu0 %883
      %v886 = vsel %vm560, %v882, 0
      %v889 = vsel %vm560, %v884, 0
      %891 = vmatprep.subr.bf16.mxu0 0
      %892 = vmatpush1.bf16.xpose.msra.mxu0 %v889
      %893 = vmatprep.subr.bf16.mxu0 0
      %894 = vmatpush1.bf16.xpose.msra.mxu0 0
      %895 = vmatprep.subr.bf16.mxu0 0
      %896 = vmatpush1.bf16.xpose.msra.mxu0 0
      %897 = vmatprep.subr.bf16.mxu0 0
      %898 = vmatpush1.bf16.xpose.msra.mxu0 0
      %899 = vmatprep.subr.bf16.mxu0 0
      %900 = vmatpush1.bf16.xpose.msra.mxu0 0
      %901 = vmatprep.subr.bf16.mxu0 0
      %902 = vmatpush1.bf16.xpose.msra.mxu0 0
      %903 = vmatprep.subr.bf16.mxu0 0
      %904 = vmatpush1.bf16.xpose.msra.mxu0 0
      %905 = vmatprep.subr.bf16.mxu0 0
      %906 = vmatpush1.bf16.xpose.msra.mxu0 0
      %907 = vmatprep.subr.bf16.mxu0 0
      %908 = vmatpush1.bf16.xpose.msra.mxu0 0
      %909 = vmatprep.subr.bf16.mxu0 0
      %910 = vmatpush1.bf16.xpose.msra.mxu0 0
      %911 = vmatprep.subr.bf16.mxu0 0
      %912 = vmatpush1.bf16.xpose.msra.mxu0 0
      %913 = vmatprep.subr.bf16.mxu0 0
      %914 = vmatpush1.bf16.xpose.msra.mxu0 0
      %915 = vmatprep.subr.bf16.mxu0 0
      %916 = vmatpush1.bf16.xpose.msra.mxu0 0
      %917 = vmatprep.subr.bf16.mxu0 0
      %918 = vmatpush1.bf16.xpose.msra.mxu0 0
      %919 = vmatprep.subr.bf16.mxu0 0
      %920 = vmatpush1.bf16.xpose.msra.mxu0 0
      %921 = vmatprep.subr.bf16.mxu0 0
      %922 = vmatpush1.bf16.xpose.msra.mxu0 0
      %923 = vmatprep.mubr.bf16.mxu0 0
      %924 = vmatmul.mubr.bf16.gmra.mrb[0].mxu0 %v886
      %v925 = vpop.f32.mrb[0].mxu0
      %v926 = vadd.f32 0.0, %v925
      %v927 = vpop.f32.mrb[0].mxu0
      %v928 = vpop.f32.mrb[0].mxu0
      %v929 = vpop.f32.mrb[0].mxu0
      %930 = vdwg.mxu0
      %v931 = vsel %vm560, %v926, -inf
      %932 = vmax.xlane.f32.xlu0 %v931
      %v933 = vpop.xlane.xlu0 %932
      %v934 = vsub.f32 %v926, %v933
      %v935 = vmul.f32 %v934, 1.442695
      %v936 = vpow.pop %v935
      %v937 = vsel %vm560, %v936, 0.0
      %938 = vadd.xlane.f32.xlu0 %v937
      %v939 = vpop.xlane.xlu0 %938
      %v940 = vrcp.pop %v939
      %v941 = vmul.f32 %v936, %v940
      %v942 = vpack.c.bf16 %v941, %v941
      %943 = vrot.lane.b32.xlu0 %v738, 112
      %v944 = vpop.permute.xlu0 %943
      %v946 = vsel %vm560, %v942, 0
      %v949 = vsel %vm622, %v944, 0
      %951 = vmatprep.subr.bf16.mxu0 0
      %952 = vmatpush1.bf16.msra.mxu0 %v949
      %953 = vmatprep.subr.bf16.mxu0 0
      %954 = vmatpush1.bf16.msra.mxu0 0
      %955 = vmatprep.subr.bf16.mxu0 0
      %956 = vmatpush1.bf16.msra.mxu0 0
      %957 = vmatprep.subr.bf16.mxu0 0
      %958 = vmatpush1.bf16.msra.mxu0 0
      %959 = vmatprep.subr.bf16.mxu0 0
      %960 = vmatpush1.bf16.msra.mxu0 0
      %961 = vmatprep.subr.bf16.mxu0 0
      %962 = vmatpush1.bf16.msra.mxu0 0
      %963 = vmatprep.subr.bf16.mxu0 0
      %964 = vmatpush1.bf16.msra.mxu0 0
      %965 = vmatprep.subr.bf16.mxu0 0
      %966 = vmatpush1.bf16.msra.mxu0 0
      %967 = vmatprep.subr.bf16.mxu0 0
      %968 = vmatpush1.bf16.msra.mxu0 0
      %969 = vmatprep.subr.bf16.mxu0 0
      %970 = vmatpush1.bf16.msra.mxu0 0
      %971 = vmatprep.subr.bf16.mxu0 0
      %972 = vmatpush1.bf16.msra.mxu0 0
      %973 = vmatprep.subr.bf16.mxu0 0
      %974 = vmatpush1.bf16.msra.mxu0 0
      %975 = vmatprep.subr.bf16.mxu0 0
      %976 = vmatpush1.bf16.msra.mxu0 0
      %977 = vmatprep.subr.bf16.mxu0 0
      %978 = vmatpush1.bf16.msra.mxu0 0
      %979 = vmatprep.subr.bf16.mxu0 0
      %980 = vmatpush1.bf16.msra.mxu0 0
      %981 = vmatprep.subr.bf16.mxu0 0
      %982 = vmatpush1.bf16.msra.mxu0 0
      %983 = vmatprep.mubr.bf16.mxu0 0
      %984 = vmatmul.mubr.bf16.gmra.mrb[0].mxu0 %v946
      %v985 = vpop.f32.mrb[0].mxu0
      %v986 = vadd.f32 0.0, %v985
      %v987 = vpop.f32.mrb[0].mxu0
      %v988 = vpop.f32.mrb[0].mxu0
      %v989 = vpop.f32.mrb[0].mxu0
      %990 = vdwg.mxu0
      %v991 = vpack.c.bf16 %v986, %v986
      %v992 = vld [vmem:[%s4 + $0x8] sm:$0xf]
      %v994 = vsel %vm560, %v991, 0
      %v997 = vsel %vm622, %v992, 0
      %999 = vmatprep.subr.bf16.mxu0 0
      %1000 = vmatpush1.bf16.msra.mxu0 %v997
      %1001 = vmatprep.subr.bf16.mxu0 0
      %1002 = vmatpush1.bf16.msra.mxu0 0
      %1003 = vmatprep.subr.bf16.mxu0 0
      %1004 = vmatpush1.bf16.msra.mxu0 0
      %1005 = vmatprep.subr.bf16.mxu0 0
      %1006 = vmatpush1.bf16.msra.mxu0 0
      %1007 = vmatprep.subr.bf16.mxu0 0
      %1008 = vmatpush1.bf16.msra.mxu0 0
      %1009 = vmatprep.subr.bf16.mxu0 0
      %1010 = vmatpush1.bf16.msra.mxu0 0
      %1011 = vmatprep.subr.bf16.mxu0 0
      %1012 = vmatpush1.bf16.msra.mxu0 0
      %1013 = vmatprep.subr.bf16.mxu0 0
      %1014 = vmatpush1.bf16.msra.mxu0 0
      %1015 = vmatprep.subr.bf16.mxu0 0
      %1016 = vmatpush1.bf16.msra.mxu0 0
      %1017 = vmatprep.subr.bf16.mxu0 0
      %1018 = vmatpush1.bf16.msra.mxu0 0
      %1019 = vmatprep.subr.bf16.mxu0 0
      %1020 = vmatpush1.bf16.msra.mxu0 0
      %1021 = vmatprep.subr.bf16.mxu0 0
      %1022 = vmatpush1.bf16.msra.mxu0 0
      %1023 = vmatprep.subr.bf16.mxu0 0
      %1024 = vmatpush1.bf16.msra.mxu0 0
      %1025 = vmatprep.subr.bf16.mxu0 0
      %1026 = vmatpush1.bf16.msra.mxu0 0
      %1027 = vmatprep.subr.bf16.mxu0 0
      %1028 = vmatpush1.bf16.msra.mxu0 0
      %1029 = vmatprep.subr.bf16.mxu0 0
      %1030 = vmatpush1.bf16.msra.mxu0 0
      %1031 = vmatprep.mubr.bf16.mxu0 0
      %1032 = vmatmul.mubr.bf16.gmra.mrb[0].mxu0 %v994
      %v1033 = vpop.f32.mrb[0].mxu0
      %v1034 = vadd.f32 0.0, %v1033
      %v1035 = vpop.f32.mrb[0].mxu0
      %v1036 = vpop.f32.mrb[0].mxu0
      %v1037 = vpop.f32.mrb[0].mxu0
      %1038 = vdwg.mxu0
      %v1039 = vadd.f32 %v876, %v1034
      %1040 = vrot.lane.b32.xlu0 %v670, 104
      %v1041 = vpop.permute.xlu0 %1040
      %1042 = vrot.lane.b32.xlu0 %v675, 104
      %v1043 = vpop.permute.xlu0 %1042
      %v1045 = vsel %vm560, %v1041, 0
      %v1048 = vsel %vm560, %v1043, 0
      %1050 = vmatprep.subr.bf16.mxu0 0
      %1051 = vmatpush1.bf16.xpose.msra.mxu0 %v1048
      %1052 = vmatprep.subr.bf16.mxu0 0
      %1053 = vmatpush1.bf16.xpose.msra.mxu0 0
      %1054 = vmatprep.subr.bf16.mxu0 0
      %1055 = vmatpush1.bf16.xpose.msra.mxu0 0
      %1056 = vmatprep.subr.bf16.mxu0 0
      %1057 = vmatpush1.bf16.xpose.msra.mxu0 0
      %1058 = vmatprep.subr.bf16.mxu0 0
      %1059 = vmatpush1.bf16.xpose.msra.mxu0 0
      %1060 = vmatprep.subr.bf16.mxu0 0
      %1061 = vmatpush1.bf16.xpose.msra.mxu0 0
      %1062 = vmatprep.subr.bf16.mxu0 0
      %1063 = vmatpush1.bf16.xpose.msra.mxu0 0
      %1064 = vmatprep.subr.bf16.mxu0 0
      %1065 = vmatpush1.bf16.xpose.msra.mxu0 0
      %1066 = vmatprep.subr.bf16.mxu0 0
      %1067 = vmatpush1.bf16.xpose.msra.mxu0 0
      %1068 = vmatprep.subr.bf16.mxu0 0
      %1069 = vmatpush1.bf16.xpose.msra.mxu0 0
      %1070 = vmatprep.subr.bf16.mxu0 0
      %1071 = vmatpush1.bf16.xpose.msra.mxu0 0
      %1072 = vmatprep.subr.bf16.mxu0 0
      %1073 = vmatpush1.bf16.xpose.msra.mxu0 0
      %1074 = vmatprep.subr.bf16.mxu0 0
      %1075 = vmatpush1.bf16.xpose.msra.mxu0 0
      %1076 = vmatprep.subr.bf16.mxu0 0
      %1077 = vmatpush1.bf16.xpose.msra.mxu0 0
      %1078 = vmatprep.subr.bf16.mxu0 0
      %1079 = vmatpush1.bf16.xpose.msra.mxu0 0
      %1080 = vmatprep.subr.bf16.mxu0 0
      %1081 = vmatpush1.bf16.xpose.msra.mxu0 0
      %1082 = vmatprep.mubr.bf16.mxu0 0
      %1083 = vmatmul.mubr.bf16.gmra.mrb[0].mxu0 %v1045
      %v1084 = vpop.f32.mrb[0].mxu0
      %v1085 = vadd.f32 0.0, %v1084
      %v1086 = vpop.f32.mrb[0].mxu0
      %v1087 = vpop.f32.mrb[0].mxu0
      %v1088 = vpop.f32.mrb[0].mxu0
      %1089 = vdwg.mxu0
      %v1090 = vsel %vm560, %v1085, -inf
      %1091 = vmax.xlane.f32.xlu0 %v1090
      %v1092 = vpop.xlane.xlu0 %1091
      %v1093 = vsub.f32 %v1085, %v1092
      %v1094 = vmul.f32 %v1093, 1.442695
      %v1095 = vpow.pop %v1094
      %v1096 = vsel %vm560, %v1095, 0.0
      %1097 = vadd.xlane.f32.xlu0 %v1096
      %v1098 = vpop.xlane.xlu0 %1097
      %v1099 = vrcp.pop %v1098
      %v1100 = vmul.f32 %v1095, %v1099
      %v1101 = vpack.c.bf16 %v1100, %v1100
      %1102 = vrot.lane.b32.xlu0 %v738, 104
      %v1103 = vpop.permute.xlu0 %1102
      %v1105 = vsel %vm560, %v1101, 0
      %v1108 = vsel %vm622, %v1103, 0
      %1110 = vmatprep.subr.bf16.mxu0 0
      %1111 = vmatpush1.bf16.msra.mxu0 %v1108
      %1112 = vmatprep.subr.bf16.mxu0 0
      %1113 = vmatpush1.bf16.msra.mxu0 0
      %1114 = vmatprep.subr.bf16.mxu0 0
      %1115 = vmatpush1.bf16.msra.mxu0 0
      %1116 = vmatprep.subr.bf16.mxu0 0
      %1117 = vmatpush1.bf16.msra.mxu0 0
      %1118 = vmatprep.subr.bf16.mxu0 0
      %1119 = vmatpush1.bf16.msra.mxu0 0
      %1120 = vmatprep.subr.bf16.mxu0 0
      %1121 = vmatpush1.bf16.msra.mxu0 0
      %1122 = vmatprep.subr.bf16.mxu0 0
      %1123 = vmatpush1.bf16.msra.mxu0 0
      %1124 = vmatprep.subr.bf16.mxu0 0
      %1125 = vmatpush1.bf16.msra.mxu0 0
      %1126 = vmatprep.subr.bf16.mxu0 0
      %1127 = vmatpush1.bf16.msra.mxu0 0
      %1128 = vmatprep.subr.bf16.mxu0 0
      %1129 = vmatpush1.bf16.msra.mxu0 0
      %1130 = vmatprep.subr.bf16.mxu0 0
      %1131 = vmatpush1.bf16.msra.mxu0 0
      %1132 = vmatprep.subr.bf16.mxu0 0
      %1133 = vmatpush1.bf16.msra.mxu0 0
      %1134 = vmatprep.subr.bf16.mxu0 0
      %1135 = vmatpush1.bf16.msra.mxu0 0
      %1136 = vmatprep.subr.bf16.mxu0 0
      %1137 = vmatpush1.bf16.msra.mxu0 0
      %1138 = vmatprep.subr.bf16.mxu0 0
      %1139 = vmatpush1.bf16.msra.mxu0 0
      %1140 = vmatprep.subr.bf16.mxu0 0
      %1141 = vmatpush1.bf16.msra.mxu0 0
      %1142 = vmatprep.mubr.bf16.mxu0 0
      %1143 = vmatmul.mubr.bf16.gmra.mrb[0].mxu0 %v1105
      %v1144 = vpop.f32.mrb[0].mxu0
      %v1145 = vadd.f32 0.0, %v1144
      %v1146 = vpop.f32.mrb[0].mxu0
      %v1147 = vpop.f32.mrb[0].mxu0
      %v1148 = vpop.f32.mrb[0].mxu0
      %1149 = vdwg.mxu0
      %v1150 = vpack.c.bf16 %v1145, %v1145
      %v1151 = vld [vmem:[%s4 + $0xc] sm:$0xf]
      %v1153 = vsel %vm560, %v1150, 0
      %v1156 = vsel %vm622, %v1151, 0
      %1158 = vmatprep.subr.bf16.mxu0 0
      %1159 = vmatpush1.bf16.msra.mxu0 %v1156
      %1160 = vmatprep.subr.bf16.mxu0 0
      %1161 = vmatpush1.bf16.msra.mxu0 0
      %1162 = vmatprep.subr.bf16.mxu0 0
      %1163 = vmatpush1.bf16.msra.mxu0 0
      %1164 = vmatprep.subr.bf16.mxu0 0
      %1165 = vmatpush1.bf16.msra.mxu0 0
      %1166 = vmatprep.subr.bf16.mxu0 0
      %1167 = vmatpush1.bf16.msra.mxu0 0
      %1168 = vmatprep.subr.bf16.mxu0 0
      %1169 = vmatpush1.bf16.msra.mxu0 0
      %1170 = vmatprep.subr.bf16.mxu0 0
      %1171 = vmatpush1.bf16.msra.mxu0 0
      %1172 = vmatprep.subr.bf16.mxu0 0
      %1173 = vmatpush1.bf16.msra.mxu0 0
      %1174 = vmatprep.subr.bf16.mxu0 0
      %1175 = vmatpush1.bf16.msra.mxu0 0
      %1176 = vmatprep.subr.bf16.mxu0 0
      %1177 = vmatpush1.bf16.msra.mxu0 0
      %1178 = vmatprep.subr.bf16.mxu0 0
      %1179 = vmatpush1.bf16.msra.mxu0 0
      %1180 = vmatprep.subr.bf16.mxu0 0
      %1181 = vmatpush1.bf16.msra.mxu0 0
      %1182 = vmatprep.subr.bf16.mxu0 0
      %1183 = vmatpush1.bf16.msra.mxu0 0
      %1184 = vmatprep.subr.bf16.mxu0 0
      %1185 = vmatpush1.bf16.msra.mxu0 0
      %1186 = vmatprep.subr.bf16.mxu0 0
      %1187 = vmatpush1.bf16.msra.mxu0 0
      %1188 = vmatprep.subr.bf16.mxu0 0
      %1189 = vmatpush1.bf16.msra.mxu0 0
      %1190 = vmatprep.mubr.bf16.mxu0 0
      %1191 = vmatmul.mubr.bf16.gmra.mrb[0].mxu0 %v1153
      %v1192 = vpop.f32.mrb[0].mxu0
      %v1193 = vadd.f32 0.0, %v1192
      %v1194 = vpop.f32.mrb[0].mxu0
      %v1195 = vpop.f32.mrb[0].mxu0
      %v1196 = vpop.f32.mrb[0].mxu0
      %1197 = vdwg.mxu0
      %v1198 = vadd.f32 %v1039, %v1193
      %v1199 = vld [vmem:[%s5] sm:$0x1]
      %v1201 = vlaneseq
      %v1202 = vshrl.u32 %v1201, 7
      %v1203 = vsub.s32 0, %v1202
      %v1204 = vrot.slane %v1199, %v1203
      %v1206 = vadd.f32 %v1198, %v1204
      %v1207 = vld [vmem:[%s533] sm:$0xff]
      %v1208 = vadd.f32 %v1207, %v1206
      %v1209 = vld [vmem:[%s10] sm:$0x1]
      %v1210 = vld [vmem:[%s11] sm:$0x1]
      %vm1211 = vcmask 261120
      %v1212 = vsel %vm1211, %v1208, 0.0
      %1213 = vadd.xlane.f32.xlu0 %v1212
      %v1214 = vpop.xlane.xlu0 %1213
      %v1215 = vrcp.pop 32.0
      %v1216 = vmul.f32 %v1214, %v1215
      %v1217 = vsub.f32 %v1208, %v1216
      %v1218 = vmul.f32 %v1217, %v1217
      %v1219 = vsel %vm1211, %v1218, 0.0
      %1220 = vadd.xlane.f32.xlu0 %v1219
      %v1221 = vpop.xlane.xlu0 %1220
      %v1222 = vmul.f32 %v1221, %v1215
      %v1223 = vadd.f32 %v1222, 1e-05
      %v1224 = vrsqrt.pop %v1223
      %v1225 = vmul.f32 %v1217, %v1224
      %v1227 = vlaneseq
      %v1228 = vshrl.u32 %v1227, 7
      %v1229 = vsub.s32 0, %v1228
      %v1230 = vrot.slane %v1209, %v1229
      %v1232 = vmul.f32 %v1225, %v1230
      %v1234 = vlaneseq
      %v1235 = vshrl.u32 %v1234, 7
      %v1236 = vsub.s32 0, %v1235
      %v1237 = vrot.slane %v1210, %v1236
      %v1239 = vadd.f32 %v1232, %v1237
      %v1240 = vpack.c.bf16 %v1239, %v1239
      %v1241 = vld [vmem:[%s6] sm:$0xf]
      %v1242 = vld [vmem:[%s6 + $0x4] sm:$0xf]
      %v1243 = vld [vmem:[%s6 + $0x8] sm:$0xf]
      %v1244 = vld [vmem:[%s6 + $0xc] sm:$0xf]
      %v1245 = vld [vmem:[%s7] sm:$0x1]
      %v1247 = vlaneseq
      %v1248 = vshrl.u32 %v1247, 7
      %v1249 = vsub.s32 0, %v1248
      %v1250 = vrot.slane %v1245, %v1249
      %v1256 = vunpack.c.l.b16 %v1241
      %v1257 = vunpack.c.l.b16 %v1242
      %v1258 = vunpack.c.l.b16 %v1243
      %v1259 = vunpack.c.l.b16 %v1244
      %v1260 = vpack.c.b16 %v1257, %v1256
      %v1261 = vpack.c.b16 %v1259, %v1258
      %v1265 = vsel %vm1211, %v1240, 0
      %1267 = vmatprep.subr.bf16.mxu0 0
      %1268 = vmatpush1.bf16.msra.mxu0 %v1260
      %1269 = vmatprep.subr.bf16.mxu0 0
      %1270 = vmatpush1.bf16.msra.mxu0 %v1261
      %1271 = vmatprep.subr.bf16.mxu0 0
      %1272 = vmatpush1.bf16.msra.mxu0 0
      %1273 = vmatprep.subr.bf16.mxu0 0
      %1274 = vmatpush1.bf16.msra.mxu0 0
      %1275 = vmatprep.subr.bf16.mxu0 0
      %1276 = vmatpush1.bf16.msra.mxu0 0
      %1277 = vmatprep.subr.bf16.mxu0 0
      %1278 = vmatpush1.bf16.msra.mxu0 0
      %1279 = vmatprep.subr.bf16.mxu0 0
      %1280 = vmatpush1.bf16.msra.mxu0 0
      %1281 = vmatprep.subr.bf16.mxu0 0
      %1282 = vmatpush1.bf16.msra.mxu0 0
      %1283 = vmatprep.subr.bf16.mxu0 0
      %1284 = vmatpush1.bf16.msra.mxu0 0
      %1285 = vmatprep.subr.bf16.mxu0 0
      %1286 = vmatpush1.bf16.msra.mxu0 0
      %1287 = vmatprep.subr.bf16.mxu0 0
      %1288 = vmatpush1.bf16.msra.mxu0 0
      %1289 = vmatprep.subr.bf16.mxu0 0
      %1290 = vmatpush1.bf16.msra.mxu0 0
      %1291 = vmatprep.subr.bf16.mxu0 0
      %1292 = vmatpush1.bf16.msra.mxu0 0
      %1293 = vmatprep.subr.bf16.mxu0 0
      %1294 = vmatpush1.bf16.msra.mxu0 0
      %1295 = vmatprep.subr.bf16.mxu0 0
      %1296 = vmatpush1.bf16.msra.mxu0 0
      %1297 = vmatprep.subr.bf16.mxu0 0
      %1298 = vmatpush1.bf16.msra.mxu0 0
      %1299 = vmatprep.mubr.bf16.mxu0 0
      %1300 = vmatmul.mubr.bf16.gmra.mrb[0].mxu0 %v1265
      %v1301 = vpop.f32.mrb[0].mxu0
      %v1302 = vadd.f32 %v1250, %v1301
      %v1303 = vpop.f32.mrb[0].mxu0
      %v1304 = vpop.f32.mrb[0].mxu0
      %v1305 = vpop.f32.mrb[0].mxu0
      %1306 = vdwg.mxu0
      %v1307 = vmax.f32 %v1302, 0.0
      %v1308 = vpack.c.bf16 %v1307, %v1307
      %v1309 = vld [vmem:[%s8] sm:$0xf]
      %v1310 = vld [vmem:[%s8 + $0x4] sm:$0xf]
      %v1311 = vld [vmem:[%s8 + $0x8] sm:$0xf]
      %v1312 = vld [vmem:[%s8 + $0xc] sm:$0xf]
      %v1313 = vld [vmem:[%s8 + $0x10] sm:$0xf]
      %v1314 = vld [vmem:[%s8 + $0x14] sm:$0xf]
      %v1315 = vld [vmem:[%s8 + $0x18] sm:$0xf]
      %v1316 = vld [vmem:[%s8 + $0x1c] sm:$0xf]
      %v1317 = vld [vmem:[%s9] sm:$0x1]
      %v1319 = vlaneseq
      %v1320 = vshrl.u32 %v1319, 7
      %v1321 = vsub.s32 0, %v1320
      %v1322 = vrot.slane %v1317, %v1321
      %v1332 = vunpack.c.l.b16 %v1309
      %v1333 = vunpack.c.l.b16 %v1310
      %v1334 = vunpack.c.l.b16 %v1311
      %v1335 = vunpack.c.l.b16 %v1312
      %v1336 = vunpack.c.l.b16 %v1313
      %v1337 = vunpack.c.l.b16 %v1314
      %v1338 = vunpack.c.l.b16 %v1315
      %v1339 = vunpack.c.l.b16 %v1316
      %v1340 = vpack.c.b16 %v1333, %v1332
      %v1341 = vpack.c.b16 %v1335, %v1334
      %v1342 = vpack.c.b16 %v1337, %v1336
      %v1343 = vpack.c.b16 %v1339, %v1338
      %vm1348 = vcmask 523264
      %v1350 = vsel %vm1348, %v1308, 0
      %1352 = vmatprep.subr.bf16.mxu0 0
      %1353 = vmatpush1.bf16.msra.mxu0 %v1340
      %1354 = vmatprep.subr.bf16.mxu0 0
      %1355 = vmatpush1.bf16.msra.mxu0 %v1341
      %1356 = vmatprep.subr.bf16.mxu0 0
      %1357 = vmatpush1.bf16.msra.mxu0 %v1342
      %1358 = vmatprep.subr.bf16.mxu0 0
      %1359 = vmatpush1.bf16.msra.mxu0 %v1343
      %1360 = vmatprep.subr.bf16.mxu0 0
      %1361 = vmatpush1.bf16.msra.mxu0 0
      %1362 = vmatprep.subr.bf16.mxu0 0
      %1363 = vmatpush1.bf16.msra.mxu0 0
      %1364 = vmatprep.subr.bf16.mxu0 0
      %1365 = vmatpush1.bf16.msra.mxu0 0
      %1366 = vmatprep.subr.bf16.mxu0 0
      %1367 = vmatpush1.bf16.msra.mxu0 0
      %1368 = vmatprep.subr.bf16.mxu0 0
      %1369 = vmatpush1.bf16.msra.mxu0 0
      %1370 = vmatprep.subr.bf16.mxu0 0
      %1371 = vmatpush1.bf16.msra.mxu0 0
      %1372 = vmatprep.subr.bf16.mxu0 0
      %1373 = vmatpush1.bf16.msra.mxu0 0
      %1374 = vmatprep.subr.bf16.mxu0 0
      %1375 = vmatpush1.bf16.msra.mxu0 0
      %1376 = vmatprep.subr.bf16.mxu0 0
      %1377 = vmatpush1.bf16.msra.mxu0 0
      %1378 = vmatprep.subr.bf16.mxu0 0
      %1379 = vmatpush1.bf16.msra.mxu0 0
      %1380 = vmatprep.subr.bf16.mxu0 0
      %1381 = vmatpush1.bf16.msra.mxu0 0
      %1382 = vmatprep.subr.bf16.mxu0 0
      %1383 = vmatpush1.bf16.msra.mxu0 0
      %1384 = vmatprep.mubr.bf16.mxu0 0
      %1385 = vmatmul.mubr.bf16.gmra.mrb[0].mxu0 %v1350
      %v1386 = vpop.f32.mrb[0].mxu0
      %v1387 = vadd.f32 %v1322, %v1386
      %v1388 = vpop.f32.mrb[0].mxu0
      %v1389 = vpop.f32.mrb[0].mxu0
      %v1390 = vpop.f32.mrb[0].mxu0
      %1391 = vdwg.mxu0
      %v1392 = vadd.f32 %v1239, %v1387
      %v1393 = vld [vmem:[%s12] sm:$0x1]
      %v1394 = vld [vmem:[%s13] sm:$0x1]
      %v1395 = vsel %vm1211, %v1392, 0.0
      %1396 = vadd.xlane.f32.xlu0 %v1395
      %v1397 = vpop.xlane.xlu0 %1396
      %v1398 = vmul.f32 %v1397, %v1215
      %v1399 = vsub.f32 %v1392, %v1398
      %v1400 = vmul.f32 %v1399, %v1399
      %v1401 = vsel %vm1211, %v1400, 0.0
      %1402 = vadd.xlane.f32.xlu0 %v1401
      %v1403 = vpop.xlane.xlu0 %1402
      %v1404 = vmul.f32 %v1403, %v1215
      %v1405 = vadd.f32 %v1404, 1e-05
      %v1406 = vrsqrt.pop %v1405
      %v1407 = vmul.f32 %v1399, %v1406
      %v1409 = vlaneseq
      %v1410 = vshrl.u32 %v1409, 7
      %v1411 = vsub.s32 0, %v1410
      %v1412 = vrot.slane %v1393, %v1411
      %v1414 = vmul.f32 %v1407, %v1412
      %v1416 = vlaneseq
      %v1417 = vshrl.u32 %v1416, 7
      %v1418 = vsub.s32 0, %v1417
      %v1419 = vrot.slane %v1394, %v1418
      %v1421 = vadd.f32 %v1414, %v1419
      %1422 = vst.msk [vmem:[%s555] sm:$0xff] %vm1211, %v1421
      %p1423 = scmp.lt.s32.totalorder %s29, 1
      %s1424 = scalar_select %p1423, %s29, 1
      %p1425 = scmp.lt.s32.totalorder %s30, 0
      %s1426 = scalar_select %p1425, %s30, 0
      %s1427 = sadd.s32 %s1426, %s1424
      %s1428 = smul.addr %s1427, 8
      %s1429 = scalar_lea.vmem %s14, %s1428
      // Predicated region
      $region77: #{transformer_encoder.7} parent=75 // pred_check
        %p1430 = pneg %p375
      $region78: #{transformer_encoder.7} parent=75 // pred_check_branch
        %1432 = sbr.rel (%p1430) target = $region80
      $region79: #{transformer_encoder.7} parent=75 // pred_region
        _
      $region80: #{transformer_encoder.7} parent=75 // pred_fallthru
        _
    $region76: #{transformer_encoder.7} parent=5 // pred_fallthru
      _
    %p1433 = scmp.le.s32.totalorder 2, %s20
    // Predicated region
    $region81: #{transformer_encoder.7} parent=5 // pred_check
      %p1434 = pneg %p1433
    $region82: #{transformer_encoder.7} parent=5 // pred_check_branch
      %1436 = sbr.rel (%p1434) target = $region84
    $region83: #{transformer_encoder.7} parent=5 // pred_region
      %s1437 = ssub.s32 %s20, 2
      // Predicated region
      $region85: #{transformer_encoder.7} parent=83 // pred_check
        %p1438 = pneg %p381
      $region86: #{transformer_encoder.7} parent=83 // pred_check_branch
        %1440 = sbr.rel (%p1438) target = $region88
      $region87: #{transformer_encoder.7} parent=83 // pred_region
        %p1441 = scmp.lt.s32.totalorder %s31, 1
        %s1442 = scalar_select %p1441, %s31, 1
        %p1443 = scmp.lt.s32.totalorder %s32, 0
        %s1444 = scalar_select %p1443, %s32, 0
        %s1445 = sadd.s32 %s1444, %s1442
        %s1446 = smul.addr %s1445, 8
        %s1447 = scalar_lea.vmem %s14, %s1446
      $region88: #{transformer_encoder.7} parent=83 // pred_fallthru
        _
    $region84: #{transformer_encoder.7} parent=5 // pred_fallthru
      _
  $region6: #{transformer_encoder.7} parent=0 // loop_footer
    %s24 = sadd.s32 1, %s20
  $region7: #{transformer_encoder.7} parent=0 // loop_footer_branch
    %19 = sbr.rel target = $region3
  $region8: #{transformer_encoder.7} parent=0 // loop_exit
    _

</llo_original>
